<compile_context>
chip_gen: v7x
topology: tpu7x:2x2x1
jax: 0.10.0
libtpu: 0.0.40
codegen_flags: <defaults>
</compile_context>

<pallas_src>
import math
import functools

import jax
import jax.numpy as jnp
from jax import lax
from jax.experimental import pallas as pl
from jax.experimental.pallas import tpu as pltpu


def mha_kernel(x_ref, wqkv_ref, bqkv_ref, wo_ref, bo_ref, o_ref,
               q_scr, kT_scr, v_scr,
               *, num_heads, d_k, scale, tile, num_kv_tiles):
    # x_ref block: (1, T, D) bf16; wqkv_ref: (D, 3D) bf16; bqkv_ref: (1, 3D) f32
    # wo_ref: (D, D) bf16; bo_ref: (1, D) f32; o_ref block: (1, TILE, D) f32
    # scratch: q_scr (H, T, dk) bf16, kT_scr (num_kv_tiles, H, dk, TILE) bf16,
    #          v_scr (num_kv_tiles, H, TILE, dk) bf16.
    qi = pl.program_id(1)
    d_model = num_heads * d_k

    # --- Projection phase: once per batch element (first query tile), chunked over T. ---
    @pl.when(qi == 0)
    def _project():
        @pl.loop(0, num_kv_tiles)
        def _chunk(c):
            start = pl.multiple_of(c * tile, tile)
            xb = x_ref[0, pl.ds(start, tile), :]                        # (TILE, D) bf16
            qkv = jnp.dot(xb, wqkv_ref[...],
                          preferred_element_type=jnp.float32)          # (TILE, 3D) f32
            qkv = qkv + bqkv_ref[0]
            qkv = qkv.reshape(tile, 3 * num_heads, d_k)                 # (TILE, 3H, dk)
            qkvh = pltpu.einshape("tjd->jtd", qkv)                      # (3H, TILE, dk)
            # Fold the 1/sqrt(d_model) logit scale into Q before caching.
            q_scr[:, pl.ds(start, tile), :] = (
                qkvh[:num_heads] * scale).astype(q_scr.dtype)
            # Cache K already transposed per KV tile: (H, dk, TILE).
            kT_scr[c] = pltpu.einshape(
                "htd->hdt", qkvh[num_heads:2 * num_heads]).astype(kT_scr.dtype)
            v_scr[c] = qkvh[2 * num_heads:].astype(v_scr.dtype)

    # --- Flash-style attention for the current query tile (heads batched on lead axis). ---
    q_start = pl.multiple_of(qi * tile, tile)
    q = q_scr[:, pl.ds(q_start, tile), :]                               # (H, TQ, dk) bf16

    def kv_step(kv, carry):
        m, lsum, acc = carry
        kT = kT_scr[kv]                                                 # (H, dk, TK) bf16
        v = v_scr[kv]                                                   # (H, TK, dk) bf16
        s = jnp.einsum("hqd,hdk->hqk", q, kT,
                       preferred_element_type=jnp.float32)              # (H, TQ, TK) f32
        m_new = jnp.maximum(m, jnp.max(s, axis=-1, keepdims=True))
        alpha = jnp.exp(m - m_new)
        p = jnp.exp(s - m_new)
        lsum_new = alpha * lsum + jnp.sum(p, axis=-1, keepdims=True)
        acc_new = alpha * acc + jnp.einsum(
            "hqk,hkd->hqd", p.astype(v.dtype), v,
            preferred_element_type=jnp.float32)                         # (H, TQ, dk) f32
        return m_new, lsum_new, acc_new

    m0 = jnp.full((num_heads, tile, 1), -jnp.inf, dtype=jnp.float32)
    l0 = jnp.zeros((num_heads, tile, 1), dtype=jnp.float32)
    acc0 = jnp.zeros((num_heads, tile, d_k), dtype=jnp.float32)
    m, lsum, acc = lax.fori_loop(0, num_kv_tiles, kv_step, (m0, l0, acc0),
                                 unroll=num_kv_tiles <= 4)

    ctx = acc * pl.reciprocal(lsum, approx=True)                        # softmax(dim=-1) @ V
    attn = pltpu.einshape("hqd->qhd", ctx).reshape(tile, d_model)       # (TQ, D) f32

    # --- Output projection. ---
    out = jnp.dot(attn.astype(jnp.bfloat16), wo_ref[...],
                  preferred_element_type=jnp.float32) + bo_ref[0]       # (TQ, D) f32
    o_ref[0] = out.astype(o_ref.dtype)


def _tile_cap():
    """256 normally; 128 on v5e (its MXU is 128-wide, bigger TQ only adds VMEM pressure)."""
    try:
        kind = jax.devices()[0].device_kind.lower()
    except Exception:
        return 256
    if "v5e" in kind or "v5 lite" in kind or "v5litepod" in kind:
        return 128
    return 256


def _pick_tile(t, cap):
    """Largest tile <= cap dividing T (power-of-two steps); falls back to T."""
    cand = min(cap, 256)
    while cand >= 8:
        if t % cand == 0:
            return cand
        cand //= 2
    return t


def _vmem_limit_bytes():
    """~75% of physical VMEM (≈96 MiB on v5e/v6e, ≈48 MiB on v7x), capped at 100 MiB."""
    try:
        cap = pltpu.get_tpu_info().vmem_capacity_bytes
    except Exception:
        cap = 64 * 1024 * 1024
    return int(min(cap * 3 // 4, 100 * 1024 * 1024))


def multi_head_attention(x, params, *, num_heads):
    """x: (B, T, d_model) float32. params: dict of transposed f32 weights / biases."""
    B, T, D = x.shape
    assert D % num_heads == 0, "d_model must be divisible by num_heads"
    d_k = D // num_heads
    scale = 1.0 / math.sqrt(D)            # matches reference: / math.sqrt(self.d_model)

    tile = _pick_tile(T, _tile_cap())     # shared query-tile / KV-tile / projection-chunk size
    num_tiles = T // tile

    # Fused QKV weight (D, 3D) and bias (1, 3D); weights pre-cast to bf16 for the MXU.
    wqkv = jnp.concatenate(
        [params["wq_t"], params["wk_t"], params["wv_t"]], axis=1).astype(jnp.bfloat16)
    bqkv = jnp.concatenate([params["bq"], params["bk"], params["bv"]], axis=1)
    wo = params["wo_t"].astype(jnp.bfloat16)
    bo = params["bo"]
    # Kernel computes in bf16 anyway: ship x as bf16 (halves x DMA + resident block).
    x_bf16 = x.astype(jnp.bfloat16)

    kernel = functools.partial(mha_kernel, num_heads=num_heads, d_k=d_k, scale=scale,
                               tile=tile, num_kv_tiles=num_tiles)

    flops = (2 * B * T * D * 3 * D                 # fused QKV projection
             + 4 * B * num_heads * T * T * d_k     # QK^T and PV
             + 2 * B * T * D * D)                  # output projection
    cost = pl.CostEstimate(
        flops=flops,
        transcendentals=B * num_heads * T * T,
        bytes_accessed=(2 * B * T * D              # x (bf16)
                        + 2 * 4 * D * D            # weights (bf16)
                        + 4 * 4 * D                # biases (f32)
                        + 4 * B * T * D))          # output (f32)

    x_spec = pl.BlockSpec((1, T, D), lambda b, q: (b, 0, 0))     # full sequence per batch
    out_spec = pl.BlockSpec((1, tile, D), lambda b, q: (b, q, 0))
    scratch = [
        pltpu.VMEM((num_heads, T, d_k), jnp.bfloat16),                # Q * scale (per batch)
        pltpu.VMEM((num_tiles, num_heads, d_k, tile), jnp.bfloat16),  # K^T per KV tile
        pltpu.VMEM((num_tiles, num_heads, tile, d_k), jnp.bfloat16),  # V per KV tile
    ]

    def call(single_buffer_weights):
        const = lambda b, q: (0, 0)   # weights/biases: constant block index -> DMA'd once
        wkw = dict(pipeline_mode=pl.Buffered(1)) if single_buffer_weights else {}
        in_specs = [
            x_spec,
            pl.BlockSpec((D, 3 * D), const, **wkw),   # fused Wqkv (bf16)
            pl.BlockSpec((1, 3 * D), const, **wkw),   # fused bias (f32)
            pl.BlockSpec((D, D), const, **wkw),       # Wo (bf16)
            pl.BlockSpec((1, D), const, **wkw),       # bo (f32)
        ]
        return pl.pallas_call(
            kernel,
            out_shape=jax.ShapeDtypeStruct((B, T, D), x.dtype),
            grid_spec=pltpu.PrefetchScalarGridSpec(
                num_scalar_prefetch=0,
                grid=(B, num_tiles),
                in_specs=in_specs,
                out_specs=out_spec,
                scratch_shapes=scratch,
            ),
            compiler_params=pltpu.CompilerParams(
                # Batch axis is independent (megacore-shardable).  The q-tile axis MUST stay
                # sequential ('arbitrary'): the projection runs at q-tile 0 and its Q/K/V
                # scratch is reused by the remaining q-tiles of that batch element.
                dimension_semantics=("parallel", "arbitrary"),
                vmem_limit_bytes=_vmem_limit_bytes(),
            ),
            cost_estimate=cost,
        )(x_bf16, wqkv, bqkv, wo, bo)

    try:
        return call(True)
    except Exception:
        # pipeline_mode=pl.Buffered(1) not supported by this lowering -> default buffering.
        return call(False)


def init_params(key, d_model):
    """Deterministic init mimicking nn.Linear (uniform +/- 1/sqrt(in_features)).
    Weights are stored pre-transposed: (in, out)."""
    bound = 1.0 / math.sqrt(d_model)
    keys = jax.random.split(key, 8)

    def lin(kw, kb):
        w = jax.random.uniform(kw, (d_model, d_model), jnp.float32, -bound, bound)
        b = jax.random.uniform(kb, (1, d_model), jnp.float32, -bound, bound)
        return w, b

    wq, bq = lin(keys[0], keys[1])
    wk, bk = lin(keys[2], keys[3])
    wv, bv = lin(keys[4], keys[5])
    wo, bo = lin(keys[6], keys[7])
    return dict(wq_t=wq, wk_t=wk, wv_t=wv, wo_t=wo, bq=bq, bk=bk, bv=bv, bo=bo)


def reference_mha(x, params, *, num_heads):
    """Pure-JAX f32 replica of the PyTorch forward, for correctness checking."""
    B, T, D = x.shape
    d_k = D // num_heads

    def proj(w, b):
        y = x @ w + b[0]
        return y.reshape(B, T, num_heads, d_k).transpose(0, 2, 1, 3)  # (B,H,T,dk)

    Q = proj(params["wq_t"], params["bq"])
    K = proj(params["wk_t"], params["bk"])
    V = proj(params["wv_t"], params["bv"])
    logits = jnp.einsum("bhqd,bhkd->bhqk", Q, K) / math.sqrt(D)
    attn = jax.nn.softmax(logits, axis=-1)
    out = jnp.einsum("bhqk,bhkd->bhqd", attn, V)
    out = out.transpose(0, 2, 1, 3).reshape(B, T, D)
    return out @ params["wo_t"] + params["bo"][0]


if __name__ == "__main__":
    key = jax.random.PRNGKey(0)
    k1, k2, k3, k4 = jax.random.split(key, 4)

    # --- Small config (module-scale toy shapes): B=2, T=8, d_model=32, heads=4. ---
    B, T, d_model, num_heads = 2, 8, 32, 4
    x = jax.random.normal(k1, (B, T, d_model), dtype=jnp.float32)
    params = init_params(k2, d_model)
    out = jax.block_until_ready(multi_head_attention(x, params, num_heads=num_heads))
    ref = reference_mha(x, params, num_heads=num_heads)
    assert out.shape == (B, T, d_model)
    # bf16 matmuls + approx reciprocal => looser tolerance than the f32 reference.
    assert jnp.allclose(out, ref, atol=3e-2, rtol=3e-2), "small-config mismatch vs reference"

    # --- Medium config exercising multiple q/kv tiles and chunked projection. ---
    B2, T2, D2, H2 = 1, 512, 128, 4
    x2 = jax.random.normal(k3, (B2, T2, D2), dtype=jnp.float32)
    params2 = init_params(k4, D2)
    out2 = jax.block_until_ready(multi_head_attention(x2, params2, num_heads=H2))
    ref2 = reference_mha(x2, params2, num_heads=H2)
    assert out2.shape == (B2, T2, D2)
    assert jnp.allclose(out2, ref2, atol=5e-2, rtol=5e-2), "medium-config mismatch vs reference"

    print("KERNEL_OK")
</pallas_src>

<mosaic_0001>
module attributes {stable_mosaic.version = 11 : i64} {
  func.func @mha_kernel(%arg0: i32, %arg1: i32, %arg2: memref<1x8x32xbf16, #tpu.memory_space<vmem>>, %arg3: memref<32x96xbf16, #tpu.memory_space<vmem>>, %arg4: memref<1x96xf32, #tpu.memory_space<vmem>>, %arg5: memref<32x32xbf16, #tpu.memory_space<vmem>>, %arg6: memref<1x32xf32, #tpu.memory_space<vmem>>, %arg7: memref<1x8x32xf32, #tpu.memory_space<vmem>>, %arg8: memref<4x8x8xbf16, #tpu.memory_space<vmem>>, %arg9: memref<1x4x8x8xbf16, #tpu.memory_space<vmem>>, %arg10: memref<1x4x8x8xbf16, #tpu.memory_space<vmem>>) attributes {dimension_semantics = [#tpu.dimension_semantics<parallel>, #tpu.dimension_semantics<arbitrary>], iteration_bounds = array<i64: 2, 1>, scalar_prefetch = 0 : i64, scratch_operands = 3 : i64, tpu.core_type = #tpu.core_type<tc>, window_params = [{transform_indices = @transform_0, window_bounds = array<i64: 1, 8, 32>}, {pipeline_mode = #tpu.pipeline_mode<synchronous>, transform_indices = @transform_1, window_bounds = array<i64: 32, 96>}, {pipeline_mode = #tpu.pipeline_mode<synchronous>, transform_indices = @transform_2, window_bounds = array<i64: 1, 96>}, {pipeline_mode = #tpu.pipeline_mode<synchronous>, transform_indices = @transform_3, window_bounds = array<i64: 32, 32>}, {pipeline_mode = #tpu.pipeline_mode<synchronous>, transform_indices = @transform_4, window_bounds = array<i64: 1, 32>}, {transform_indices = @transform_5, window_bounds = array<i64: 1, 8, 32>}]} {
    %c0_i32 = arith.constant 0 : i32
    %0 = arith.cmpi eq, %arg1, %c0_i32 : i32
    %1 = arith.extui %0 : i1 to i32
    %c0_i32_0 = arith.constant 0 : i32
    %2 = arith.cmpi ne, %1, %c0_i32_0 : i32
    scf.if %2 {
      %c0_i32_23 = arith.constant 0 : i32
      %c1_i32_24 = arith.constant 1 : i32
      %50 = arith.muli %c0_i32_23, %c1_i32_24 : i32
      %c0_i32_25 = arith.constant 0 : i32
      %51 = arith.addi %c0_i32_25, %50 : i32
      %c8_i32_26 = arith.constant 8 : i32
      %52 = arith.muli %51, %c8_i32_26 : i32
      %53 = tpu.assume_multiple %52, 8 : i32
      %c0_27 = arith.constant 0 : index
      %54 = arith.index_cast %53 : i32 to index
      %c0_28 = arith.constant 0 : index
      %55 = vector.load %arg2[%c0_27, %54, %c0_28] : memref<1x8x32xbf16, #tpu.memory_space<vmem>>, vector<1x8x32xbf16>
      %56 = vector.shape_cast %55 : vector<1x8x32xbf16> to vector<8x32xbf16>
      %c0_29 = arith.constant 0 : index
      %c0_30 = arith.constant 0 : index
      %57 = vector.load %arg3[%c0_29, %c0_30] : memref<32x96xbf16, #tpu.memory_space<vmem>>, vector<32x96xbf16>
      %cst_31 = arith.constant dense<0.000000e+00> : vector<8x96xf32>
      %58 = tpu.matmul %56, %57, %cst_31 {dimension_numbers = #tpu.dot_dimension_numbers<[1], [0], [0], [1], [0, 0, 1, 1], [], []>} : vector<8x32xbf16>, vector<32x96xbf16>, vector<8x96xf32> -> vector<8x96xf32>
      %c0_32 = arith.constant 0 : index
      %c0_33 = arith.constant 0 : index
      %59 = vector.load %arg4[%c0_32, %c0_33] : memref<1x96xf32, #tpu.memory_space<vmem>>, vector<1x96xf32>
      %60 = vector.shape_cast %59 : vector<1x96xf32> to vector<96xf32>
      %61 = vector.shape_cast %60 : vector<96xf32> to vector<1x96xf32>
      %62 = vector.broadcast %61 : vector<1x96xf32> to vector<8x96xf32>
      %63 = arith.addf %58, %62 : vector<8x96xf32>
      %64 = vector.shape_cast %63 : vector<8x96xf32> to vector<8x12x8xf32>
      %65 = tpu.transpose %64, [1, 0, 2] : vector<8x12x8xf32> -> vector<12x8x8xf32>
      %66 = vector.extract_strided_slice %65 {offsets = [0, 0, 0], sizes = [4, 8, 8], strides = [1, 1, 1]} : vector<12x8x8xf32> to vector<4x8x8xf32>
      %cst_34 = arith.constant 0.176776692 : f32
      %67 = vector.broadcast %cst_34 : f32 to vector<4x8x8xf32>
      %68 = arith.mulf %66, %67 : vector<4x8x8xf32>
      %69 = arith.truncf %68 : vector<4x8x8xf32> to vector<4x8x8xbf16>
      %c0_35 = arith.constant 0 : index
      %70 = arith.index_cast %53 : i32 to index
      %c0_36 = arith.constant 0 : index
      %71 = vector.load %arg8[%c0_35, %70, %c0_36] : memref<4x8x8xbf16, #tpu.memory_space<vmem>>, vector<4x8x8xbf16>
      tpu.vector_store %arg8[%c0_35, %70, %c0_36], %69 {strides = array<i32>} : memref<4x8x8xbf16, #tpu.memory_space<vmem>>, vector<4x8x8xbf16>,
      %72 = vector.extract_strided_slice %65 {offsets = [4, 0, 0], sizes = [4, 8, 8], strides = [1, 1, 1]} : vector<12x8x8xf32> to vector<4x8x8xf32>
      %73 = tpu.transpose %72, [0, 2, 1] : vector<4x8x8xf32> -> vector<4x8x8xf32>
      %74 = arith.truncf %73 : vector<4x8x8xf32> to vector<4x8x8xbf16>
      %75 = arith.index_cast %51 : i32 to index
      %c0_37 = arith.constant 0 : index
      %c0_38 = arith.constant 0 : index
      %c0_39 = arith.constant 0 : index
      %76 = vector.load %arg9[%75, %c0_37, %c0_38, %c0_39] : memref<1x4x8x8xbf16, #tpu.memory_space<vmem>>, vector<1x4x8x8xbf16>
      %77 = vector.shape_cast %76 : vector<1x4x8x8xbf16> to vector<4x8x8xbf16>
      %78 = vector.shape_cast %74 : vector<4x8x8xbf16> to vector<1x4x8x8xbf16>
      tpu.vector_store %arg9[%75, %c0_37, %c0_38, %c0_39], %78 {strides = array<i32>} : memref<1x4x8x8xbf16, #tpu.memory_space<vmem>>, vector<1x4x8x8xbf16>,
      %79 = vector.extract_strided_slice %65 {offsets = [8, 0, 0], sizes = [4, 8, 8], strides = [1, 1, 1]} : vector<12x8x8xf32> to vector<4x8x8xf32>
      %80 = arith.truncf %79 : vector<4x8x8xf32> to vector<4x8x8xbf16>
      %81 = arith.index_cast %51 : i32 to index
      %c0_40 = arith.constant 0 : index
      %c0_41 = arith.constant 0 : index
      %c0_42 = arith.constant 0 : index
      %82 = vector.load %arg10[%81, %c0_40, %c0_41, %c0_42] : memref<1x4x8x8xbf16, #tpu.memory_space<vmem>>, vector<1x4x8x8xbf16>
      %83 = vector.shape_cast %82 : vector<1x4x8x8xbf16> to vector<4x8x8xbf16>
      %84 = vector.shape_cast %80 : vector<4x8x8xbf16> to vector<1x4x8x8xbf16>
      tpu.vector_store %arg10[%81, %c0_40, %c0_41, %c0_42], %84 {strides = array<i32>} : memref<1x4x8x8xbf16, #tpu.memory_space<vmem>>, vector<1x4x8x8xbf16>,
      %c1_i32_43 = arith.constant 1 : i32
    } else {
    }
    %c8_i32 = arith.constant 8 : i32
    %3 = arith.muli %arg1, %c8_i32 : i32
    %4 = tpu.assume_multiple %3, 8 : i32
    %c0 = arith.constant 0 : index
    %5 = arith.index_cast %4 : i32 to index
    %c0_1 = arith.constant 0 : index
    %6 = vector.load %arg8[%c0, %5, %c0_1] : memref<4x8x8xbf16, #tpu.memory_space<vmem>>, vector<4x8x8xbf16>
    %cst = arith.constant 0xFF800000 : f32
    %7 = vector.broadcast %cst : f32 to vector<4x8x1xf32>
    %cst_2 = arith.constant 0.000000e+00 : f32
    %8 = vector.broadcast %cst_2 : f32 to vector<4x8x1xf32>
    %cst_3 = arith.constant 0.000000e+00 : f32
    %9 = vector.broadcast %cst_3 : f32 to vector<4x8x8xf32>
    %c0_i32_4 = arith.constant 0 : i32
    %10 = arith.index_cast %c0_i32_4 : i32 to index
    %c0_5 = arith.constant 0 : index
    %c0_6 = arith.constant 0 : index
    %c0_7 = arith.constant 0 : index
    %11 = vector.load %arg9[%10, %c0_5, %c0_6, %c0_7] : memref<1x4x8x8xbf16, #tpu.memory_space<vmem>>, vector<1x4x8x8xbf16>
    %12 = vector.shape_cast %11 : vector<1x4x8x8xbf16> to vector<4x8x8xbf16>
    %13 = arith.index_cast %c0_i32_4 : i32 to index
    %c0_8 = arith.constant 0 : index
    %c0_9 = arith.constant 0 : index
    %c0_10 = arith.constant 0 : index
    %14 = vector.load %arg10[%13, %c0_8, %c0_9, %c0_10] : memref<1x4x8x8xbf16, #tpu.memory_space<vmem>>, vector<1x4x8x8xbf16>
    %15 = vector.shape_cast %14 : vector<1x4x8x8xbf16> to vector<4x8x8xbf16>
    "tpu.trace_start"() <{level = 10 : i32, message = "hqd,hdk->hqk"}> : () -> ()
    %cst_11 = arith.constant dense<0.000000e+00> : vector<4x8x8xf32>
    %16 = tpu.matmul %6, %12, %cst_11 {dimension_numbers = #tpu.dot_dimension_numbers<[2], [1], [1], [2], [0, 0, 0, 1, 1, 2], [0], [0]>} : vector<4x8x8xbf16>, vector<4x8x8xbf16>, vector<4x8x8xf32> -> vector<4x8x8xf32>
    "tpu.trace_stop"() : () -> ()
    %cst_12 = arith.constant dense<0xFF800000> : vector<4x8xf32>
    %17 = vector.multi_reduction <maximumf>, %16, %cst_12 [2] : vector<4x8x8xf32> to vector<4x8xf32>
    %18 = vector.shape_cast %17 : vector<4x8xf32> to vector<4x8x1xf32>
    %19 = arith.maximumf %7, %18 : vector<4x8x1xf32>
    %20 = arith.subf %7, %19 : vector<4x8x1xf32>
    %21 = math.exp %20 : vector<4x8x1xf32>
    %22 = vector.broadcast %19 : vector<4x8x1xf32> to vector<4x8x8xf32>
    %23 = arith.subf %16, %22 : vector<4x8x8xf32>
    %24 = math.exp %23 : vector<4x8x8xf32>
    %25 = arith.mulf %21, %8 : vector<4x8x1xf32>
    %cst_13 = arith.constant dense<0.000000e+00> : vector<4x8xf32>
    %26 = vector.multi_reduction <add>, %24, %cst_13 [2] : vector<4x8x8xf32> to vector<4x8xf32>
    %27 = vector.shape_cast %26 : vector<4x8xf32> to vector<4x8x1xf32>
    %28 = arith.addf %25, %27 : vector<4x8x1xf32>
    %29 = vector.broadcast %21 : vector<4x8x1xf32> to vector<4x8x8xf32>
    %30 = arith.mulf %29, %9 : vector<4x8x8xf32>
    %31 = arith.truncf %24 : vector<4x8x8xf32> to vector<4x8x8xbf16>
    "tpu.trace_start"() <{level = 10 : i32, message = "hqk,hkd->hqd"}> : () -> ()
    %cst_14 = arith.constant dense<0.000000e+00> : vector<4x8x8xf32>
    %32 = tpu.matmul %31, %15, %cst_14 {dimension_numbers = #tpu.dot_dimension_numbers<[2], [1], [1], [2], [0, 0, 0, 1, 1, 2], [0], [0]>} : vector<4x8x8xbf16>, vector<4x8x8xbf16>, vector<4x8x8xf32> -> vector<4x8x8xf32>
    "tpu.trace_stop"() : () -> ()
    %33 = arith.addf %30, %32 : vector<4x8x8xf32>
    %c1_i32 = arith.constant 1 : i32
    %34 = tpu.reciprocal %28 {approx = true} : vector<4x8x1xf32> -> vector<4x8x1xf32>
    %35 = vector.broadcast %34 : vector<4x8x1xf32> to vector<4x8x8xf32>
    %36 = arith.mulf %33, %35 : vector<4x8x8xf32>
    %37 = tpu.transpose %36, [1, 0, 2] : vector<4x8x8xf32> -> vector<8x4x8xf32>
    %38 = vector.shape_cast %37 : vector<8x4x8xf32> to vector<8x32xf32>
    %39 = arith.truncf %38 : vector<8x32xf32> to vector<8x32xbf16>
    %c0_15 = arith.constant 0 : index
    %c0_16 = arith.constant 0 : index
    %40 = vector.load %arg5[%c0_15, %c0_16] : memref<32x32xbf16, #tpu.memory_space<vmem>>, vector<32x32xbf16>
    %cst_17 = arith.constant dense<0.000000e+00> : vector<8x32xf32>
    %41 = tpu.matmul %39, %40, %cst_17 {dimension_numbers = #tpu.dot_dimension_numbers<[1], [0], [0], [1], [0, 0, 1, 1], [], []>} : vector<8x32xbf16>, vector<32x32xbf16>, vector<8x32xf32> -> vector<8x32xf32>
    %c0_18 = arith.constant 0 : index
    %c0_19 = arith.constant 0 : index
    %42 = vector.load %arg6[%c0_18, %c0_19] : memref<1x32xf32, #tpu.memory_space<vmem>>, vector<1x32xf32>
    %43 = vector.shape_cast %42 : vector<1x32xf32> to vector<32xf32>
    %44 = vector.shape_cast %43 : vector<32xf32> to vector<1x32xf32>
    %45 = vector.broadcast %44 : vector<1x32xf32> to vector<8x32xf32>
    %46 = arith.addf %41, %45 : vector<8x32xf32>
    %c0_20 = arith.constant 0 : index
    %c0_21 = arith.constant 0 : index
    %c0_22 = arith.constant 0 : index
    %47 = vector.load %arg7[%c0_20, %c0_21, %c0_22] : memref<1x8x32xf32, #tpu.memory_space<vmem>>, vector<1x8x32xf32>
    %48 = vector.shape_cast %47 : vector<1x8x32xf32> to vector<8x32xf32>
    %49 = vector.shape_cast %46 : vector<8x32xf32> to vector<1x8x32xf32>
    tpu.vector_store %arg7[%c0_20, %c0_21, %c0_22], %49 {strides = array<i32>} : memref<1x8x32xf32, #tpu.memory_space<vmem>>, vector<1x8x32xf32>,
    return
  }
  func.func @transform_0(%arg0: i32, %arg1: i32) -> (i32, i32, i32) {
    %c0_i32 = arith.constant 0 : i32
    %c0_i32_0 = arith.constant 0 : i32
    %c0_i32_1 = arith.constant 0 : i32
    return %arg0, %c0_i32, %c0_i32_0 : i32, i32, i32
  }
  func.func @transform_1(%arg0: i32, %arg1: i32) -> (i32, i32) {
    %c0_i32 = arith.constant 0 : i32
    %c0_i32_0 = arith.constant 0 : i32
    %c0_i32_1 = arith.constant 0 : i32
    return %c0_i32, %c0_i32_0 : i32, i32
  }
  func.func @transform_2(%arg0: i32, %arg1: i32) -> (i32, i32) {
    %c0_i32 = arith.constant 0 : i32
    %c0_i32_0 = arith.constant 0 : i32
    %c0_i32_1 = arith.constant 0 : i32
    return %c0_i32, %c0_i32_0 : i32, i32
  }
  func.func @transform_3(%arg0: i32, %arg1: i32) -> (i32, i32) {
    %c0_i32 = arith.constant 0 : i32
    %c0_i32_0 = arith.constant 0 : i32
    %c0_i32_1 = arith.constant 0 : i32
    return %c0_i32, %c0_i32_0 : i32, i32
  }
  func.func @transform_4(%arg0: i32, %arg1: i32) -> (i32, i32) {
    %c0_i32 = arith.constant 0 : i32
    %c0_i32_0 = arith.constant 0 : i32
    %c0_i32_1 = arith.constant 0 : i32
    return %c0_i32, %c0_i32_0 : i32, i32
  }
  func.func @transform_5(%arg0: i32, %arg1: i32) -> (i32, i32, i32) {
    %c0_i32 = arith.constant 0 : i32
    %c0_i32_0 = arith.constant 0 : i32
    return %arg0, %arg1, %c0_i32 : i32, i32, i32
  }
}

module attributes {stable_mosaic.version = 11 : i64} {
  func.func @mha_kernel(%arg0: i32, %arg1: i32, %arg2: memref<1x8x32xbf16, #tpu.memory_space<vmem>>, %arg3: memref<32x96xbf16, #tpu.memory_space<vmem>>, %arg4: memref<1x96xf32, #tpu.memory_space<vmem>>, %arg5: memref<32x32xbf16, #tpu.memory_space<vmem>>, %arg6: memref<1x32xf32, #tpu.memory_space<vmem>>, %arg7: memref<1x8x32xf32, #tpu.memory_space<vmem>>, %arg8: memref<4x8x8xbf16, #tpu.memory_space<vmem>>, %arg9: memref<1x4x8x8xbf16, #tpu.memory_space<vmem>>, %arg10: memref<1x4x8x8xbf16, #tpu.memory_space<vmem>>) attributes {dimension_semantics = [#tpu.dimension_semantics<parallel>, #tpu.dimension_semantics<arbitrary>], iteration_bounds = array<i64: 2, 1>, scalar_prefetch = 0 : i64, scratch_operands = 3 : i64, tpu.core_type = #tpu.core_type<tc>, window_params = [{transform_indices = @transform_0, window_bounds = array<i64: 1, 8, 32>}, {pipeline_mode = #tpu.pipeline_mode<synchronous>, transform_indices = @transform_1, window_bounds = array<i64: 32, 96>}, {pipeline_mode = #tpu.pipeline_mode<synchronous>, transform_indices = @transform_2, window_bounds = array<i64: 1, 96>}, {pipeline_mode = #tpu.pipeline_mode<synchronous>, transform_indices = @transform_3, window_bounds = array<i64: 32, 32>}, {pipeline_mode = #tpu.pipeline_mode<synchronous>, transform_indices = @transform_4, window_bounds = array<i64: 1, 32>}, {transform_indices = @transform_5, window_bounds = array<i64: 1, 8, 32>}]} {
    %c0_i32 = arith.constant 0 : i32
    %0 = arith.cmpi eq, %arg1, %c0_i32 : i32
    %1 = arith.extui %0 : i1 to i32
    %c0_i32_0 = arith.constant 0 : i32
    %2 = arith.cmpi ne, %1, %c0_i32_0 : i32
    scf.if %2 {
      %c0_i32_23 = arith.constant 0 : i32
      %c1_i32_24 = arith.constant 1 : i32
      %50 = arith.muli %c0_i32_23, %c1_i32_24 : i32
      %c0_i32_25 = arith.constant 0 : i32
      %51 = arith.addi %c0_i32_25, %50 : i32
      %c8_i32_26 = arith.constant 8 : i32
      %52 = arith.muli %51, %c8_i32_26 : i32
      %53 = tpu.assume_multiple %52, 8 : i32
      %c0_27 = arith.constant 0 : index
      %54 = arith.index_cast %53 : i32 to index
      %c0_28 = arith.constant 0 : index
      %55 = vector.load %arg2[%c0_27, %54, %c0_28] : memref<1x8x32xbf16, #tpu.memory_space<vmem>>, vector<1x8x32xbf16>
      %56 = vector.shape_cast %55 : vector<1x8x32xbf16> to vector<8x32xbf16>
      %c0_29 = arith.constant 0 : index
      %c0_30 = arith.constant 0 : index
      %57 = vector.load %arg3[%c0_29, %c0_30] : memref<32x96xbf16, #tpu.memory_space<vmem>>, vector<32x96xbf16>
      %cst_31 = arith.constant dense<0.000000e+00> : vector<8x96xf32>
      %58 = tpu.matmul %56, %57, %cst_31 {dimension_numbers = #tpu.dot_dimension_numbers<[1], [0], [0], [1], [0, 0, 1, 1], [], []>} : vector<8x32xbf16>, vector<32x96xbf16>, vector<8x96xf32> -> vector<8x96xf32>
      %c0_32 = arith.constant 0 : index
      %c0_33 = arith.constant 0 : index
      %59 = vector.load %arg4[%c0_32, %c0_33] : memref<1x96xf32, #tpu.memory_space<vmem>>, vector<1x96xf32>
      %60 = vector.shape_cast %59 : vector<1x96xf32> to vector<96xf32>
      %61 = vector.shape_cast %60 : vector<96xf32> to vector<1x96xf32>
      %62 = vector.broadcast %61 : vector<1x96xf32> to vector<8x96xf32>
      %63 = arith.addf %58, %62 : vector<8x96xf32>
      %64 = vector.shape_cast %63 : vector<8x96xf32> to vector<8x12x8xf32>
      %65 = tpu.transpose %64, [1, 0, 2] : vector<8x12x8xf32> -> vector<12x8x8xf32>
      %66 = vector.extract_strided_slice %65 {offsets = [0, 0, 0], sizes = [4, 8, 8], strides = [1, 1, 1]} : vector<12x8x8xf32> to vector<4x8x8xf32>
      %cst_34 = arith.constant 0.176776692 : f32
      %67 = vector.broadcast %cst_34 : f32 to vector<4x8x8xf32>
      %68 = arith.mulf %66, %67 : vector<4x8x8xf32>
      %69 = arith.truncf %68 : vector<4x8x8xf32> to vector<4x8x8xbf16>
      %c0_35 = arith.constant 0 : index
      %70 = arith.index_cast %53 : i32 to index
      %c0_36 = arith.constant 0 : index
      %71 = vector.load %arg8[%c0_35, %70, %c0_36] : memref<4x8x8xbf16, #tpu.memory_space<vmem>>, vector<4x8x8xbf16>
      tpu.vector_store %arg8[%c0_35, %70, %c0_36], %69 {strides = array<i32>} : memref<4x8x8xbf16, #tpu.memory_space<vmem>>, vector<4x8x8xbf16>,
      %72 = vector.extract_strided_slice %65 {offsets = [4, 0, 0], sizes = [4, 8, 8], strides = [1, 1, 1]} : vector<12x8x8xf32> to vector<4x8x8xf32>
      %73 = tpu.transpose %72, [0, 2, 1] : vector<4x8x8xf32> -> vector<4x8x8xf32>
      %74 = arith.truncf %73 : vector<4x8x8xf32> to vector<4x8x8xbf16>
      %75 = arith.index_cast %51 : i32 to index
      %c0_37 = arith.constant 0 : index
      %c0_38 = arith.constant 0 : index
      %c0_39 = arith.constant 0 : index
      %76 = vector.load %arg9[%75, %c0_37, %c0_38, %c0_39] : memref<1x4x8x8xbf16, #tpu.memory_space<vmem>>, vector<1x4x8x8xbf16>
      %77 = vector.shape_cast %76 : vector<1x4x8x8xbf16> to vector<4x8x8xbf16>
      %78 = vector.shape_cast %74 : vector<4x8x8xbf16> to vector<1x4x8x8xbf16>
      tpu.vector_store %arg9[%75, %c0_37, %c0_38, %c0_39], %78 {strides = array<i32>} : memref<1x4x8x8xbf16, #tpu.memory_space<vmem>>, vector<1x4x8x8xbf16>,
      %79 = vector.extract_strided_slice %65 {offsets = [8, 0, 0], sizes = [4, 8, 8], strides = [1, 1, 1]} : vector<12x8x8xf32> to vector<4x8x8xf32>
      %80 = arith.truncf %79 : vector<4x8x8xf32> to vector<4x8x8xbf16>
      %81 = arith.index_cast %51 : i32 to index
      %c0_40 = arith.constant 0 : index
      %c0_41 = arith.constant 0 : index
      %c0_42 = arith.constant 0 : index
      %82 = vector.load %arg10[%81, %c0_40, %c0_41, %c0_42] : memref<1x4x8x8xbf16, #tpu.memory_space<vmem>>, vector<1x4x8x8xbf16>
      %83 = vector.shape_cast %82 : vector<1x4x8x8xbf16> to vector<4x8x8xbf16>
      %84 = vector.shape_cast %80 : vector<4x8x8xbf16> to vector<1x4x8x8xbf16>
      tpu.vector_store %arg10[%81, %c0_40, %c0_41, %c0_42], %84 {strides = array<i32>} : memref<1x4x8x8xbf16, #tpu.memory_space<vmem>>, vector<1x4x8x8xbf16>,
      %c1_i32_43 = arith.constant 1 : i32
    } else {
    }
    %c8_i32 = arith.constant 8 : i32
    %3 = arith.muli %arg1, %c8_i32 : i32
    %4 = tpu.assume_multiple %3, 8 : i32
    %c0 = arith.constant 0 : index
    %5 = arith.index_cast %4 : i32 to index
    %c0_1 = arith.constant 0 : index
    %6 = vector.load %arg8[%c0, %5, %c0_1] : memref<4x8x8xbf16, #tpu.memory_space<vmem>>, vector<4x8x8xbf16>
    %cst = arith.constant 0xFF800000 : f32
    %7 = vector.broadcast %cst : f32 to vector<4x8x1xf32>
    %cst_2 = arith.constant 0.000000e+00 : f32
    %8 = vector.broadcast %cst_2 : f32 to vector<4x8x1xf32>
    %cst_3 = arith.constant 0.000000e+00 : f32
    %9 = vector.broadcast %cst_3 : f32 to vector<4x8x8xf32>
    %c0_i32_4 = arith.constant 0 : i32
    %10 = arith.index_cast %c0_i32_4 : i32 to index
    %c0_5 = arith.constant 0 : index
    %c0_6 = arith.constant 0 : index
    %c0_7 = arith.constant 0 : index
    %11 = vector.load %arg9[%10, %c0_5, %c0_6, %c0_7] : memref<1x4x8x8xbf16, #tpu.memory_space<vmem>>, vector<1x4x8x8xbf16>
    %12 = vector.shape_cast %11 : vector<1x4x8x8xbf16> to vector<4x8x8xbf16>
    %13 = arith.index_cast %c0_i32_4 : i32 to index
    %c0_8 = arith.constant 0 : index
    %c0_9 = arith.constant 0 : index
    %c0_10 = arith.constant 0 : index
    %14 = vector.load %arg10[%13, %c0_8, %c0_9, %c0_10] : memref<1x4x8x8xbf16, #tpu.memory_space<vmem>>, vector<1x4x8x8xbf16>
    %15 = vector.shape_cast %14 : vector<1x4x8x8xbf16> to vector<4x8x8xbf16>
    "tpu.trace_start"() <{level = 10 : i32, message = "hqd,hdk->hqk"}> : () -> ()
    %cst_11 = arith.constant dense<0.000000e+00> : vector<4x8x8xf32>
    %16 = tpu.matmul %6, %12, %cst_11 {dimension_numbers = #tpu.dot_dimension_numbers<[2], [1], [1], [2], [0, 0, 0, 1, 1, 2], [0], [0]>} : vector<4x8x8xbf16>, vector<4x8x8xbf16>, vector<4x8x8xf32> -> vector<4x8x8xf32>
    "tpu.trace_stop"() : () -> ()
    %cst_12 = arith.constant dense<0xFF800000> : vector<4x8xf32>
    %17 = vector.multi_reduction <maximumf>, %16, %cst_12 [2] : vector<4x8x8xf32> to vector<4x8xf32>
    %18 = vector.shape_cast %17 : vector<4x8xf32> to vector<4x8x1xf32>
    %19 = arith.maximumf %7, %18 : vector<4x8x1xf32>
    %20 = arith.subf %7, %19 : vector<4x8x1xf32>
    %21 = math.exp %20 : vector<4x8x1xf32>
    %22 = vector.broadcast %19 : vector<4x8x1xf32> to vector<4x8x8xf32>
    %23 = arith.subf %16, %22 : vector<4x8x8xf32>
    %24 = math.exp %23 : vector<4x8x8xf32>
    %25 = arith.mulf %21, %8 : vector<4x8x1xf32>
    %cst_13 = arith.constant dense<0.000000e+00> : vector<4x8xf32>
    %26 = vector.multi_reduction <add>, %24, %cst_13 [2] : vector<4x8x8xf32> to vector<4x8xf32>
    %27 = vector.shape_cast %26 : vector<4x8xf32> to vector<4x8x1xf32>
    %28 = arith.addf %25, %27 : vector<4x8x1xf32>
    %29 = vector.broadcast %21 : vector<4x8x1xf32> to vector<4x8x8xf32>
    %30 = arith.mulf %29, %9 : vector<4x8x8xf32>
    %31 = arith.truncf %24 : vector<4x8x8xf32> to vector<4x8x8xbf16>
    "tpu.trace_start"() <{level = 10 : i32, message = "hqk,hkd->hqd"}> : () -> ()
    %cst_14 = arith.constant dense<0.000000e+00> : vector<4x8x8xf32>
    %32 = tpu.matmul %31, %15, %cst_14 {dimension_numbers = #tpu.dot_dimension_numbers<[2], [1], [1], [2], [0, 0, 0, 1, 1, 2], [0], [0]>} : vector<4x8x8xbf16>, vector<4x8x8xbf16>, vector<4x8x8xf32> -> vector<4x8x8xf32>
    "tpu.trace_stop"() : () -> ()
    %33 = arith.addf %30, %32 : vector<4x8x8xf32>
    %c1_i32 = arith.constant 1 : i32
    %34 = tpu.reciprocal %28 {approx = true} : vector<4x8x1xf32> -> vector<4x8x1xf32>
    %35 = vector.broadcast %34 : vector<4x8x1xf32> to vector<4x8x8xf32>
    %36 = arith.mulf %33, %35 : vector<4x8x8xf32>
    %37 = tpu.transpose %36, [1, 0, 2] : vector<4x8x8xf32> -> vector<8x4x8xf32>
    %38 = vector.shape_cast %37 : vector<8x4x8xf32> to vector<8x32xf32>
    %39 = arith.truncf %38 : vector<8x32xf32> to vector<8x32xbf16>
    %c0_15 = arith.constant 0 : index
    %c0_16 = arith.constant 0 : index
    %40 = vector.load %arg5[%c0_15, %c0_16] : memref<32x32xbf16, #tpu.memory_space<vmem>>, vector<32x32xbf16>
    %cst_17 = arith.constant dense<0.000000e+00> : vector<8x32xf32>
    %41 = tpu.matmul %39, %40, %cst_17 {dimension_numbers = #tpu.dot_dimension_numbers<[1], [0], [0], [1], [0, 0, 1, 1], [], []>} : vector<8x32xbf16>, vector<32x32xbf16>, vector<8x32xf32> -> vector<8x32xf32>
    %c0_18 = arith.constant 0 : index
    %c0_19 = arith.constant 0 : index
    %42 = vector.load %arg6[%c0_18, %c0_19] : memref<1x32xf32, #tpu.memory_space<vmem>>, vector<1x32xf32>
    %43 = vector.shape_cast %42 : vector<1x32xf32> to vector<32xf32>
    %44 = vector.shape_cast %43 : vector<32xf32> to vector<1x32xf32>
    %45 = vector.broadcast %44 : vector<1x32xf32> to vector<8x32xf32>
    %46 = arith.addf %41, %45 : vector<8x32xf32>
    %c0_20 = arith.constant 0 : index
    %c0_21 = arith.constant 0 : index
    %c0_22 = arith.constant 0 : index
    %47 = vector.load %arg7[%c0_20, %c0_21, %c0_22] : memref<1x8x32xf32, #tpu.memory_space<vmem>>, vector<1x8x32xf32>
    %48 = vector.shape_cast %47 : vector<1x8x32xf32> to vector<8x32xf32>
    %49 = vector.shape_cast %46 : vector<8x32xf32> to vector<1x8x32xf32>
    tpu.vector_store %arg7[%c0_20, %c0_21, %c0_22], %49 {strides = array<i32>} : memref<1x8x32xf32, #tpu.memory_space<vmem>>, vector<1x8x32xf32>,
    return
  }
  func.func @transform_0(%arg0: i32, %arg1: i32) -> (i32, i32, i32) {
    %c0_i32 = arith.constant 0 : i32
    %c0_i32_0 = arith.constant 0 : i32
    %c0_i32_1 = arith.constant 0 : i32
    return %arg0, %c0_i32, %c0_i32_0 : i32, i32, i32
  }
  func.func @transform_1(%arg0: i32, %arg1: i32) -> (i32, i32) {
    %c0_i32 = arith.constant 0 : i32
    %c0_i32_0 = arith.constant 0 : i32
    %c0_i32_1 = arith.constant 0 : i32
    return %c0_i32, %c0_i32_0 : i32, i32
  }
  func.func @transform_2(%arg0: i32, %arg1: i32) -> (i32, i32) {
    %c0_i32 = arith.constant 0 : i32
    %c0_i32_0 = arith.constant 0 : i32
    %c0_i32_1 = arith.constant 0 : i32
    return %c0_i32, %c0_i32_0 : i32, i32
  }
  func.func @transform_3(%arg0: i32, %arg1: i32) -> (i32, i32) {
    %c0_i32 = arith.constant 0 : i32
    %c0_i32_0 = arith.constant 0 : i32
    %c0_i32_1 = arith.constant 0 : i32
    return %c0_i32, %c0_i32_0 : i32, i32
  }
  func.func @transform_4(%arg0: i32, %arg1: i32) -> (i32, i32) {
    %c0_i32 = arith.constant 0 : i32
    %c0_i32_0 = arith.constant 0 : i32
    %c0_i32_1 = arith.constant 0 : i32
    return %c0_i32, %c0_i32_0 : i32, i32
  }
  func.func @transform_5(%arg0: i32, %arg1: i32) -> (i32, i32, i32) {
    %c0_i32 = arith.constant 0 : i32
    %c0_i32_0 = arith.constant 0 : i32
    return %arg0, %arg1, %c0_i32 : i32, i32, i32
  }
}

</mosaic_0001>

<llo_original>
// kernel: tpu_custom_call.1
$region0: #{tpu_custom_call.1}
  #allocation0 [shape = 'u32[]', space=smem, size = 0x4, offset = 0x4, fixed_abs, tag = 'smem constant byte address 0x4 - core index']
  #allocation1 [shape = 'u32[144,128]{1,0:T(1,128)}', space=vmem, size = 0x12000, scoped, tag = 'internal scratch']
  #allocation2 [shape = 'bf16[4,8,8]{2,1,0:T(8,128)(2,1)}', space=vmem, size = 0x2000, scoped, tag = 'scratch operand']
  #allocation3 [shape = 'bf16[1,4,8,8]{3,2,1,0:T(8,128)(2,1)}', space=vmem, size = 0x2000, scoped, tag = 'scratch operand']
  #allocation4 [shape = 'bf16[1,4,8,8]{3,2,1,0:T(8,128)(2,1)}', space=vmem, size = 0x2000, scoped, tag = 'scratch operand']
  %s0 = inlined_call_operand.hbm [shape: bf16[2,8,32], index: 0, kind: input, shape index: {}]
  %s1 = inlined_call_operand.hbm [shape: bf16[32,96], index: 1, kind: input, shape index: {}]
  %s2 = inlined_call_operand.vmem [shape: f32[1,96], index: 2, kind: input, shape index: {}]
  %s3 = inlined_call_operand.hbm [shape: bf16[32,32], index: 3, kind: input, shape index: {}]
  %s4 = inlined_call_operand.vmem [shape: f32[1,32], index: 4, kind: input, shape index: {}]
  %s5 = inlined_call_operand.hbm [shape: f32[2,8,32], index: 5, kind: output, shape index: {}]
  %s6 = sld [smem:[#allocation0]]
  $region69: #{tpu_custom_call.1} parent=0
    _
  %s8 = ssub.s32 1, %s6
  %s9 = scalar_select 0, %s8, %s6
  $region1: #{tpu_custom_call.1} parent=0
    #allocation5 [shape = 'u8[4096]{0}', space=vmem, size = 0x1000, scoped, tag = 'input window, operand 0']
    #allocation6 [shape = 's32[2]{0}', space=sflag, size = 0x8, scoped, tag = 'scoped memory for tpu_custom_call.1']
    #allocation7 [shape = 's32[2]{0}', space=sflag, size = 0x8, scoped, tag = 'scoped memory for tpu_custom_call.1']
    #allocation8 [shape = 'u8[8192]{0}', space=vmem, size = 0x2000, scoped, tag = 'input window, operand 1, single buffered']
    #allocation9 [shape = 's32[1]{0}', space=sflag, size = 0x4, scoped, tag = 'scoped memory for tpu_custom_call.1']
    #allocation10 [shape = 'u8[8192]{0}', space=vmem, size = 0x2000, scoped, tag = 'input window, operand 3, single buffered']
    #allocation11 [shape = 'u8[8192]{0}', space=vmem, size = 0x2000, scoped, tag = 'output window, operand 0']
    %10 = vsyncpa [#allocation6], 0
    %s11 = scalar_lea.sflag [#allocation6], 1
    %12 = vsyncpa %s11, 0
    %13 = vsyncpa [#allocation9], 0
    %14 = vsyncpa [#allocation7], 0
    %s15 = scalar_lea.sflag [#allocation7], 1
    %16 = vsyncpa %s15, 0
    loop: start=0, step=1, limit=4
    $region2: #{tpu_custom_call.1} parent=1 // loop_pre_header
      _
    $region3: #{tpu_custom_call.1} parent=1 // loop_header
      %s18 = sphi 0, %s22
      %p19 = scmp.ge.s32.totalorder %s18, 4
      %s25 = sphi 0, %s37
      %s26 = sphi 0, %s33
      %s27 = sphi 0, %s25
      %s28 = sphi 0, %s26
      %s29 = sphi 0, %s27
      %s30 = sphi 0, %s28
      %s40 = sphi 0, %s42
      %s43 = sphi 0, %s40
      %s44 = sphi 0, %s43
      %s60 = sphi 0, %s44
      %s64 = sphi 0, %s64
      %s66 = sphi 0, %s64
      %s67 = sphi 0, %s66
      %s81 = sphi 0, %s67
      %s85 = sphi 0, %s85
      %s87 = sphi 0, %s85
      %s88 = sphi 0, %s87
      %s102 = sphi 0, %s88
      %s106 = sphi 0, %s106
      %s108 = sphi 0, %s106
      %s109 = sphi 0, %s108
      %s123 = sphi 0, %s109
      %s127 = sphi 0, %s127
      %s129 = sphi 0, %s127
      %s130 = sphi 0, %s129
      %s144 = sphi 0, %s130
      %s152 = sphi 0, %s154
      %s155 = sphi 0, %s152
      %s156 = sphi 0, %s155
      %s172 = sphi 0, %s156
    $region4: #{tpu_custom_call.1} parent=1 // loop_header_branch
      %21 = sbr.rel (%p19) target = $region8
    $region5: #{tpu_custom_call.1} parent=1 // loop_body
      %s23 = ssub.s32 %s18, 1
      %s24 = ssub.s32 %s18, 2
      %s31 = sadd.s32 1, %s26
      %p32 = scmp.ge.s32.totalorder %s31, 1
      %s33 = scalar_select %p32, 0, %s31
      %s34 = sadd.s32 1, %s25
      %s35 = scalar_select %p32, %s34, %s25
      %p36 = scmp.ge.s32.totalorder %s35, 2
      %s37 = scalar_select %p36, 0, %s35
      %s38 = ssub.s32 %s25, %s37
      %p39 = scmp.eq.s32.totalorder %s38, 0
      %s41 = sadd.s32 %s40, 1
      %s42 = scalar_select %p39, %s40, %s41
      %p45 = pneg %p39
      %p46 = scmp.eq.s32.totalorder %s18, 1
      %p47 = por %p45, %p46
      %p48 = scmp.ne.s32.totalorder %s40, %s43
      %p49 = scmp.eq.s32.totalorder %s18, 0
      %p50 = por %p48, %p49
      %p51 = scmp.ne.s32.totalorder %s40, %s43
      %p52 = scmp.eq.s32.totalorder %s23, 1
      %p53 = por %p51, %p52
      %p54 = scmp.ne.s32.totalorder %s43, %s44
      %p55 = scmp.eq.s32.totalorder %s23, 0
      %p56 = por %p54, %p55
      %p57 = scmp.ne.s32.totalorder %s43, %s44
      %p58 = scmp.eq.s32.totalorder %s24, 1
      %p59 = por %p57, %p58
      %p61 = scmp.ne.s32.totalorder %s44, %s60
      %p62 = scmp.eq.s32.totalorder %s24, 0
      %p63 = por %p61, %p62
      %s65 = sadd.s32 %s64, 1
      %p68 = scmp.eq.s32.totalorder %s18, 1
      %p69 = scmp.ne.s32.totalorder %s64, %s66
      %p70 = scmp.eq.s32.totalorder %s18, 0
      %p71 = por %p69, %p70
      %p72 = scmp.ne.s32.totalorder %s64, %s66
      %p73 = scmp.eq.s32.totalorder %s23, 1
      %p74 = por %p72, %p73
      %p75 = scmp.ne.s32.totalorder %s66, %s67
      %p76 = scmp.eq.s32.totalorder %s23, 0
      %p77 = por %p75, %p76
      %p78 = scmp.ne.s32.totalorder %s66, %s67
      %p79 = scmp.eq.s32.totalorder %s24, 1
      %p80 = por %p78, %p79
      %p82 = scmp.ne.s32.totalorder %s67, %s81
      %p83 = scmp.eq.s32.totalorder %s24, 0
      %p84 = por %p82, %p83
      %s86 = sadd.s32 %s85, 1
      %p89 = scmp.eq.s32.totalorder %s18, 1
      %p90 = scmp.ne.s32.totalorder %s85, %s87
      %p91 = scmp.eq.s32.totalorder %s18, 0
      %p92 = por %p90, %p91
      %p93 = scmp.ne.s32.totalorder %s85, %s87
      %p94 = scmp.eq.s32.totalorder %s23, 1
      %p95 = por %p93, %p94
      %p96 = scmp.ne.s32.totalorder %s87, %s88
      %p97 = scmp.eq.s32.totalorder %s23, 0
      %p98 = por %p96, %p97
      %p99 = scmp.ne.s32.totalorder %s87, %s88
      %p100 = scmp.eq.s32.totalorder %s24, 1
      %p101 = por %p99, %p100
      %p103 = scmp.ne.s32.totalorder %s88, %s102
      %p104 = scmp.eq.s32.totalorder %s24, 0
      %p105 = por %p103, %p104
      %s107 = sadd.s32 %s106, 1
      %p110 = scmp.eq.s32.totalorder %s18, 1
      %p111 = scmp.ne.s32.totalorder %s106, %s108
      %p112 = scmp.eq.s32.totalorder %s18, 0
      %p113 = por %p111, %p112
      %p114 = scmp.ne.s32.totalorder %s106, %s108
      %p115 = scmp.eq.s32.totalorder %s23, 1
      %p116 = por %p114, %p115
      %p117 = scmp.ne.s32.totalorder %s108, %s109
      %p118 = scmp.eq.s32.totalorder %s23, 0
      %p119 = por %p117, %p118
      %p120 = scmp.ne.s32.totalorder %s108, %s109
      %p121 = scmp.eq.s32.totalorder %s24, 1
      %p122 = por %p120, %p121
      %p124 = scmp.ne.s32.totalorder %s109, %s123
      %p125 = scmp.eq.s32.totalorder %s24, 0
      %p126 = por %p124, %p125
      %s128 = sadd.s32 %s127, 1
      %p131 = scmp.eq.s32.totalorder %s18, 1
      %p132 = scmp.ne.s32.totalorder %s127, %s129
      %p133 = scmp.eq.s32.totalorder %s18, 0
      %p134 = por %p132, %p133
      %p135 = scmp.ne.s32.totalorder %s127, %s129
      %p136 = scmp.eq.s32.totalorder %s23, 1
      %p137 = por %p135, %p136
      %p138 = scmp.ne.s32.totalorder %s129, %s130
      %p139 = scmp.eq.s32.totalorder %s23, 0
      %p140 = por %p138, %p139
      %p141 = scmp.ne.s32.totalorder %s129, %s130
      %p142 = scmp.eq.s32.totalorder %s24, 1
      %p143 = por %p141, %p142
      %p145 = scmp.ne.s32.totalorder %s130, %s144
      %p146 = scmp.eq.s32.totalorder %s24, 0
      %p147 = por %p145, %p146
      %s148 = ssub.s32 %s25, %s37
      %s149 = ssub.s32 %s26, %s33
      %s150 = sor.u32 %s148, %s149
      %p151 = scmp.eq.s32.totalorder %s150, 0
      %s153 = sadd.s32 %s152, 1
      %s154 = scalar_select %p151, %s152, %s153
      %p157 = pneg %p151
      %p158 = scmp.eq.s32.totalorder %s18, 1
      %p159 = por %p157, %p158
      %p160 = scmp.ne.s32.totalorder %s152, %s155
      %p161 = scmp.eq.s32.totalorder %s18, 0
      %p162 = por %p160, %p161
      %p163 = scmp.ne.s32.totalorder %s152, %s155
      %p164 = scmp.eq.s32.totalorder %s23, 1
      %p165 = por %p163, %p164
      %p166 = scmp.ne.s32.totalorder %s155, %s156
      %p167 = scmp.eq.s32.totalorder %s23, 0
      %p168 = por %p166, %p167
      %p169 = scmp.ne.s32.totalorder %s155, %s156
      %p170 = scmp.eq.s32.totalorder %s24, 1
      %p171 = por %p169, %p170
      %p173 = scmp.ne.s32.totalorder %s156, %s172
      %p174 = scmp.eq.s32.totalorder %s24, 0
      %p175 = por %p173, %p174
      %p176 = scmp.le.s32.totalorder 1, %s18
      %p177 = scmp.lt.s32.totalorder %s18, 3
      %p178 = pnand %p176, %p177
      %p179 = pneg %p178
      // Predicated region
      $region9: #{tpu_custom_call.1} parent=5 // pred_check
        _
      $region10: #{tpu_custom_call.1} parent=5 // pred_check_branch
        %181 = sbr.rel (%p178) target = $region12
      $region11: #{tpu_custom_call.1} parent=5 // pred_region
        %s182 = ssub.s32 %s18, 1
        // Predicated region
        $region13: #{tpu_custom_call.1} parent=11 // pred_check
          %p183 = pneg %p77
        $region14: #{tpu_custom_call.1} parent=11 // pred_check_branch
          %185 = sbr.rel (%p183) target = $region16
        $region15: #{tpu_custom_call.1} parent=11 // pred_region
          %s187 = ssub.s32 256, 256
          %188 = vsyncadd [#allocation9], %s187
          %s189 = sshll.u32 [#allocation8], 4
          %s190 = int_to_ptr.vmem [resolvable:$true] %s189
          %195 = dma.hbm_to_vmem [thread:$0]  %s1, 256, %s190, [#allocation9], 64, 64, 4
        $region16: #{tpu_custom_call.1} parent=11 // pred_fallthru
          _
        // Predicated region
        $region17: #{tpu_custom_call.1} parent=11 // pred_check
          %p196 = pneg %p98
        $region18: #{tpu_custom_call.1} parent=11 // pred_check_branch
          %198 = sbr.rel (%p196) target = $region20
        $region19: #{tpu_custom_call.1} parent=11 // pred_region
          _
        $region20: #{tpu_custom_call.1} parent=11 // pred_fallthru
          _
        // Predicated region
        $region21: #{tpu_custom_call.1} parent=11 // pred_check
          %p199 = pneg %p119
        $region22: #{tpu_custom_call.1} parent=11 // pred_check_branch
          %201 = sbr.rel (%p199) target = $region24
        $region23: #{tpu_custom_call.1} parent=11 // pred_region
          %s203 = ssub.s32 256, 256
          %204 = vsyncadd [#allocation9], %s203
          %s205 = sshll.u32 [#allocation10], 4
          %s206 = int_to_ptr.vmem [resolvable:$true] %s205
          %211 = dma.hbm_to_vmem [thread:$0]  %s3, 256, %s206, [#allocation9], 64, 64, 4
        $region24: #{tpu_custom_call.1} parent=11 // pred_fallthru
          _
        // Predicated region
        $region25: #{tpu_custom_call.1} parent=11 // pred_check
          %p212 = pneg %p140
        $region26: #{tpu_custom_call.1} parent=11 // pred_check_branch
          %214 = sbr.rel (%p212) target = $region28
        $region27: #{tpu_custom_call.1} parent=11 // pred_region
          _
        $region28: #{tpu_custom_call.1} parent=11 // pred_fallthru
          _
      $region12: #{tpu_custom_call.1} parent=5 // pred_fallthru
        _
      %p215 = scmp.lt.s32.totalorder %s18, 2
      // Predicated region
      $region29: #{tpu_custom_call.1} parent=5 // pred_check
        %p216 = pneg %p215
      $region30: #{tpu_custom_call.1} parent=5 // pred_check_branch
        %218 = sbr.rel (%p216) target = $region32
      $region31: #{tpu_custom_call.1} parent=5 // pred_region
        // Predicated region
        $region33: #{tpu_custom_call.1} parent=31 // pred_check
          %p219 = pneg %p50
        $region34: #{tpu_custom_call.1} parent=31 // pred_check_branch
          %221 = sbr.rel (%p219) target = $region36
        $region35: #{tpu_custom_call.1} parent=31 // pred_region
          %s222 = sand.u32 %s40, 1
          %s223 = scalar_lea.sflag [#allocation6], %s222
          %s224 = sand.u32 %s40, 1
          %s225 = smul.addr %s224, 4
          %s226 = scalar_lea.vmem [#allocation5], %s225
          %s228 = ssub.s32 64, 64
          %229 = vsyncadd %s223, %s228
          %s230 = smul.addr %s25, 64
          %s231 = scalar_lea.hbm %s0, %s230
          %s233 = sshll.u32 %s226, 4
          %s234 = int_to_ptr.vmem [resolvable:$true] %s233
          %236 = dma.hbm_to_vmem [thread:$0]  %s231, 64, %s234, %s223
        $region36: #{tpu_custom_call.1} parent=31 // pred_fallthru
          _
      $region32: #{tpu_custom_call.1} parent=5 // pred_fallthru
        _
      %p237 = scmp.le.s32.totalorder 1, %s18
      %p238 = scmp.lt.s32.totalorder %s18, 3
      %p239 = pnand %p237, %p238
      %p240 = pneg %p239
      // Predicated region
      $region37: #{tpu_custom_call.1} parent=5 // pred_check
        _
      $region38: #{tpu_custom_call.1} parent=5 // pred_check_branch
        %242 = sbr.rel (%p239) target = $region40
      $region39: #{tpu_custom_call.1} parent=5 // pred_region
        %s243 = ssub.s32 %s18, 1
        %s244 = sand.u32 %s43, 1
        %s245 = scalar_lea.sflag [#allocation6], %s244
        %s246 = sand.u32 %s43, 1
        %s247 = smul.addr %s246, 4
        %s248 = scalar_lea.vmem [#allocation5], %s247
        // Predicated region
        $region41: #{tpu_custom_call.1} parent=39 // pred_check
          %p249 = pneg %p56
        $region42: #{tpu_custom_call.1} parent=39 // pred_check_branch
          %251 = sbr.rel (%p249) target = $region44
        $region43: #{tpu_custom_call.1} parent=39 // pred_region
          %252 = dma.done %s245, 64
        $region44: #{tpu_custom_call.1} parent=39 // pred_fallthru
          _
        // Predicated region
        $region45: #{tpu_custom_call.1} parent=39 // pred_check
          %p253 = pneg %p77
        $region46: #{tpu_custom_call.1} parent=39 // pred_check_branch
          %255 = sbr.rel (%p253) target = $region48
        $region47: #{tpu_custom_call.1} parent=39 // pred_region
          %256 = dma.done [#allocation9], 256
        $region48: #{tpu_custom_call.1} parent=39 // pred_fallthru
          _
        // Predicated region
        $region49: #{tpu_custom_call.1} parent=39 // pred_check
          %p257 = pneg %p119
        $region50: #{tpu_custom_call.1} parent=39 // pred_check_branch
          %259 = sbr.rel (%p257) target = $region52
        $region51: #{tpu_custom_call.1} parent=39 // pred_region
          %260 = dma.done [#allocation9], 256
        $region52: #{tpu_custom_call.1} parent=39 // pred_fallthru
          _
        %s261 = sand.u32 %s43, 1
        %s262 = scalar_lea.sflag [#allocation6], %s261
        %s263 = sand.u32 %s43, 1
        %s264 = smul.addr %s263, 4
        %s265 = scalar_lea.vmem [#allocation5], %s264
        %p266 = pneg %p56
        %p267 = pneg %p53
        %p268 = pneg %p77
        %p269 = pneg %p74
        %p270 = pneg %p98
        %p271 = pneg %p95
        %p272 = pneg %p119
        %p273 = pneg %p116
        %p274 = pneg %p140
        %p275 = pneg %p137
        %p276 = pneg %p168
        %p277 = pneg %p165
        %s278 = sand.u32 %s155, 1
        %s279 = scalar_lea.sflag [#allocation7], %s278
        %s280 = sand.u32 %s155, 1
        %s281 = smul.addr %s280, 8
        %s282 = scalar_lea.vmem [#allocation11], %s281
        %p284 = scmp.eq.s32.totalorder %s28, 0
        // Predicated region
        $region53: #{tpu_custom_call.1} parent=39 // pred_check
          %p285 = pneg %p284
        $region54: #{tpu_custom_call.1} parent=39 // pred_check_branch
          %287 = sbr.rel (%p285) target = $region56
        $region55: #{tpu_custom_call.1} parent=39 // pred_region
          %v288 = vld [vmem:[%s248] sm:$0xf]
          %v289 = vld [vmem:[#allocation8] sm:$0xf]
          %v290 = vld [vmem:[#allocation8 + $0x4] sm:$0xf]
          %v291 = vld [vmem:[#allocation8 + $0x8] sm:$0xf]
          %v292 = vld [vmem:[#allocation8 + $0xc] sm:$0xf]
          %v293 = vld [vmem:[%s2] sm:$0x1]
          %v295 = vlaneseq
          %v296 = vshrl.u32 %v295, 7
          %v297 = vsub.s32 0, %v296
          %v298 = vrot.slane %v293, %v297
          %v304 = vunpack.c.l.b16 %v289
          %v305 = vunpack.c.l.b16 %v290
          %v306 = vunpack.c.l.b16 %v291
          %v307 = vunpack.c.l.b16 %v292
          %v308 = vpack.c.b16 %v305, %v304
          %v309 = vpack.c.b16 %v307, %v306
          %vm312 = vcmask 261120
          %v314 = vsel %vm312, %v288, 0
          %316 = vmatprep.subr.bf16.mxu0 0
          %317 = vmatpush1.bf16.msra.mxu0 %v308
          %318 = vmatprep.subr.bf16.mxu0 0
          %319 = vmatpush1.bf16.msra.mxu0 %v309
          %320 = vmatprep.subr.bf16.mxu0 0
          %321 = vmatpush1.bf16.msra.mxu0 0
          %322 = vmatprep.subr.bf16.mxu0 0
          %323 = vmatpush1.bf16.msra.mxu0 0
          %324 = vmatprep.subr.bf16.mxu0 0
          %325 = vmatpush1.bf16.msra.mxu0 0
          %326 = vmatprep.subr.bf16.mxu0 0
          %327 = vmatpush1.bf16.msra.mxu0 0
          %328 = vmatprep.subr.bf16.mxu0 0
          %329 = vmatpush1.bf16.msra.mxu0 0
          %330 = vmatprep.subr.bf16.mxu0 0
          %331 = vmatpush1.bf16.msra.mxu0 0
          %332 = vmatprep.subr.bf16.mxu0 0
          %333 = vmatpush1.bf16.msra.mxu0 0
          %334 = vmatprep.subr.bf16.mxu0 0
          %335 = vmatpush1.bf16.msra.mxu0 0
          %336 = vmatprep.subr.bf16.mxu0 0
          %337 = vmatpush1.bf16.msra.mxu0 0
          %338 = vmatprep.subr.bf16.mxu0 0
          %339 = vmatpush1.bf16.msra.mxu0 0
          %340 = vmatprep.subr.bf16.mxu0 0
          %341 = vmatpush1.bf16.msra.mxu0 0
          %342 = vmatprep.subr.bf16.mxu0 0
          %343 = vmatpush1.bf16.msra.mxu0 0
          %344 = vmatprep.subr.bf16.mxu0 0
          %345 = vmatpush1.bf16.msra.mxu0 0
          %346 = vmatprep.subr.bf16.mxu0 0
          %347 = vmatpush1.bf16.msra.mxu0 0
          %348 = vmatprep.mubr.bf16.mxu0 0
          %349 = vmatmul.mubr.bf16.gmra.mrb[0].mxu0 %v314
          %v350 = vpop.f32.mrb[0].mxu0
          %v351 = vadd.f32 %v298, %v350
          %v352 = vpop.f32.mrb[0].mxu0
          %v353 = vpop.f32.mrb[0].mxu0
          %v354 = vpop.f32.mrb[0].mxu0
          %355 = vdwg.mxu0
          %357 = vrot.lane.b32.xlu0 %v351, 120
          %v358 = vpop.permute.xlu0 %357
          %360 = vrot.lane.b32.xlu0 %v351, 112
          %v361 = vpop.permute.xlu0 %360
          %363 = vrot.lane.b32.xlu0 %v351, 104
          %v364 = vpop.permute.xlu0 %363
          %366 = vrot.lane.b32.xlu0 %v351, 96
          %v367 = vpop.permute.xlu0 %366
          %369 = vrot.lane.b32.xlu0 %v351, 88
          %v370 = vpop.permute.xlu0 %369
          %372 = vrot.lane.b32.xlu0 %v351, 80
          %v373 = vpop.permute.xlu0 %372
          %375 = vrot.lane.b32.xlu0 %v351, 72
          %v376 = vpop.permute.xlu0 %375
          %378 = vrot.lane.b32.xlu0 %v351, 64
          %v379 = vpop.permute.xlu0 %378
          %381 = vrot.lane.b32.xlu0 %v351, 56
          %v382 = vpop.permute.xlu0 %381
          %384 = vrot.lane.b32.xlu0 %v351, 48
          %v385 = vpop.permute.xlu0 %384
          %387 = vrot.lane.b32.xlu0 %v351, 40
          %v388 = vpop.permute.xlu0 %387
          %v390 = vcombine.low %v351, %v361
          %v391 = vcombine.high %v351, %v361
          %v393 = vunpack.c.l.s4 1983009808
          %v394 = vunpack.c.0.s8 %v393
          %v395 = vlaneseq
          %v396 = vshrl.u32 %v395, 7
          %v397 = vsub.s32 %v394, %v396
          %v398 = vrot.slane %v390, %v397
          %v400 = vunpack.c.l.s4 1983009808
          %v401 = vunpack.c.0.s8 %v400
          %v402 = vlaneseq
          %v403 = vshrl.u32 %v402, 7
          %v404 = vsub.s32 %v401, %v403
          %v405 = vrot.slane %v391, %v404
          %v406 = vcombine.low %v358, %v364
          %v407 = vcombine.high %v358, %v364
          %v409 = vunpack.c.l.s4 1983009808
          %v410 = vunpack.c.0.s8 %v409
          %v411 = vlaneseq
          %v412 = vshrl.u32 %v411, 7
          %v413 = vsub.s32 %v410, %v412
          %v414 = vrot.slane %v406, %v413
          %v416 = vunpack.c.l.s4 1983009808
          %v417 = vunpack.c.0.s8 %v416
          %v418 = vlaneseq
          %v419 = vshrl.u32 %v418, 7
          %v420 = vsub.s32 %v417, %v419
          %v421 = vrot.slane %v407, %v420
          %v422 = vcombine.low %v367, %v373
          %v423 = vcombine.high %v367, %v373
          %v425 = vunpack.c.l.s4 1983009808
          %v426 = vunpack.c.0.s8 %v425
          %v427 = vlaneseq
          %v428 = vshrl.u32 %v427, 7
          %v429 = vsub.s32 %v426, %v428
          %v430 = vrot.slane %v422, %v429
          %v432 = vunpack.c.l.s4 1983009808
          %v433 = vunpack.c.0.s8 %v432
          %v434 = vlaneseq
          %v435 = vshrl.u32 %v434, 7
          %v436 = vsub.s32 %v433, %v435
          %v437 = vrot.slane %v423, %v436
          %v438 = vcombine.low %v370, %v376
          %v439 = vcombine.high %v370, %v376
          %v441 = vunpack.c.l.s4 1983009808
          %v442 = vunpack.c.0.s8 %v441
          %v443 = vlaneseq
          %v444 = vshrl.u32 %v443, 7
          %v445 = vsub.s32 %v442, %v444
          %v446 = vrot.slane %v438, %v445
          %v448 = vunpack.c.l.s4 1983009808
          %v449 = vunpack.c.0.s8 %v448
          %v450 = vlaneseq
          %v451 = vshrl.u32 %v450, 7
          %v452 = vsub.s32 %v449, %v451
          %v453 = vrot.slane %v439, %v452
          %v454 = vcombine.low %v398, %v414
          %v455 = vcombine.high %v398, %v414
          %v457 = vunpack.c.l.s4 1934713408
          %v458 = vunpack.c.0.s8 %v457
          %v459 = vlaneseq
          %v460 = vshrl.u32 %v459, 7
          %v461 = vsub.s32 %v458, %v460
          %v462 = vrot.slane %v454, %v461
          %v464 = vunpack.c.l.s4 1934713408
          %v465 = vunpack.c.0.s8 %v464
          %v466 = vlaneseq
          %v467 = vshrl.u32 %v466, 7
          %v468 = vsub.s32 %v465, %v467
          %v469 = vrot.slane %v455, %v468
          %v470 = vcombine.low %v405, %v421
          %v471 = vcombine.high %v405, %v421
          %v473 = vunpack.c.l.s4 1934713408
          %v474 = vunpack.c.0.s8 %v473
          %v475 = vlaneseq
          %v476 = vshrl.u32 %v475, 7
          %v477 = vsub.s32 %v474, %v476
          %v478 = vrot.slane %v470, %v477
          %v480 = vunpack.c.l.s4 1934713408
          %v481 = vunpack.c.0.s8 %v480
          %v482 = vlaneseq
          %v483 = vshrl.u32 %v482, 7
          %v484 = vsub.s32 %v481, %v483
          %v485 = vrot.slane %v471, %v484
          %v486 = vcombine.low %v430, %v446
          %v487 = vcombine.high %v430, %v446
          %v489 = vunpack.c.l.s4 1934713408
          %v490 = vunpack.c.0.s8 %v489
          %v491 = vlaneseq
          %v492 = vshrl.u32 %v491, 7
          %v493 = vsub.s32 %v490, %v492
          %v494 = vrot.slane %v486, %v493
          %v496 = vunpack.c.l.s4 1934713408
          %v497 = vunpack.c.0.s8 %v496
          %v498 = vlaneseq
          %v499 = vshrl.u32 %v498, 7
          %v500 = vsub.s32 %v497, %v499
          %v501 = vrot.slane %v487, %v500
          %v502 = vcombine.low %v437, %v453
          %v503 = vcombine.high %v437, %v453
          %v505 = vunpack.c.l.s4 1934713408
          %v506 = vunpack.c.0.s8 %v505
          %v507 = vlaneseq
          %v508 = vshrl.u32 %v507, 7
          %v509 = vsub.s32 %v506, %v508
          %v510 = vrot.slane %v502, %v509
          %v512 = vunpack.c.l.s4 1934713408
          %v513 = vunpack.c.0.s8 %v512
          %v514 = vlaneseq
          %v515 = vshrl.u32 %v514, 7
          %v516 = vsub.s32 %v513, %v515
          %v517 = vrot.slane %v503, %v516
          %v518 = vcombine.low %v462, %v494
          %v519 = vcombine.high %v462, %v494
          %v520 = vcombine.low %v469, %v501
          %v521 = vcombine.high %v469, %v501
          %v522 = vcombine.low %v478, %v510
          %v523 = vcombine.high %v478, %v510
          %v524 = vcombine.low %v485, %v517
          %v525 = vcombine.high %v485, %v517
          %v526 = vcombine.low %v379, %v385
          %v527 = vcombine.high %v379, %v385
          %v529 = vunpack.c.l.s4 1983009808
          %v530 = vunpack.c.0.s8 %v529
          %v531 = vlaneseq
          %v532 = vshrl.u32 %v531, 7
          %v533 = vsub.s32 %v530, %v532
          %v534 = vrot.slane %v526, %v533
          %v536 = vunpack.c.l.s4 1983009808
          %v537 = vunpack.c.0.s8 %v536
          %v538 = vlaneseq
          %v539 = vshrl.u32 %v538, 7
          %v540 = vsub.s32 %v537, %v539
          %v541 = vrot.slane %v527, %v540
          %v542 = vcombine.low %v382, %v388
          %v543 = vcombine.high %v382, %v388
          %v545 = vunpack.c.l.s4 1983009808
          %v546 = vunpack.c.0.s8 %v545
          %v547 = vlaneseq
          %v548 = vshrl.u32 %v547, 7
          %v549 = vsub.s32 %v546, %v548
          %v550 = vrot.slane %v542, %v549
          %v552 = vunpack.c.l.s4 1983009808
          %v553 = vunpack.c.0.s8 %v552
          %v554 = vlaneseq
          %v555 = vshrl.u32 %v554, 7
          %v556 = vsub.s32 %v553, %v555
          %v557 = vrot.slane %v543, %v556
          %v558 = vcombine.low %v534, %v550
          %v559 = vcombine.high %v534, %v550
          %v561 = vunpack.c.l.s4 1934713408
          %v562 = vunpack.c.0.s8 %v561
          %v563 = vlaneseq
          %v564 = vshrl.u32 %v563, 7
          %v565 = vsub.s32 %v562, %v564
          %v566 = vrot.slane %v558, %v565
          %v568 = vunpack.c.l.s4 1934713408
          %v569 = vunpack.c.0.s8 %v568
          %v570 = vlaneseq
          %v571 = vshrl.u32 %v570, 7
          %v572 = vsub.s32 %v569, %v571
          %v573 = vrot.slane %v559, %v572
          %v574 = vcombine.low %v541, %v557
          %v575 = vcombine.high %v541, %v557
          %v577 = vunpack.c.l.s4 1934713408
          %v578 = vunpack.c.0.s8 %v577
          %v579 = vlaneseq
          %v580 = vshrl.u32 %v579, 7
          %v581 = vsub.s32 %v578, %v580
          %v582 = vrot.slane %v574, %v581
          %v584 = vunpack.c.l.s4 1934713408
          %v585 = vunpack.c.0.s8 %v584
          %v586 = vlaneseq
          %v587 = vshrl.u32 %v586, 7
          %v588 = vsub.s32 %v585, %v587
          %v589 = vrot.slane %v575, %v588
          %v590 = vcombine.high %v566, 0.0
          %v591 = vcombine.high %v573, 0.0
          %v592 = vcombine.high %v582, 0.0
          %v593 = vcombine.high %v589, 0.0
          %v594 = vcombine.low %v518, %v520
          %v595 = vcombine.high %v518, %v520
          %v597 = vunpack.c.l.s4 1983009808
          %v598 = vunpack.c.0.s8 %v597
          %v599 = vlaneseq
          %v600 = vshrl.u32 %v599, 7
          %v601 = vsub.s32 %v598, %v600
          %v602 = vrot.slane %v594, %v601
          %v604 = vunpack.c.l.s4 1983009808
          %v605 = vunpack.c.0.s8 %v604
          %v606 = vlaneseq
          %v607 = vshrl.u32 %v606, 7
          %v608 = vsub.s32 %v605, %v607
          %v609 = vrot.slane %v595, %v608
          %v610 = vcombine.low %v519, %v521
          %v611 = vcombine.high %v519, %v521
          %v613 = vunpack.c.l.s4 1983009808
          %v614 = vunpack.c.0.s8 %v613
          %v615 = vlaneseq
          %v616 = vshrl.u32 %v615, 7
          %v617 = vsub.s32 %v614, %v616
          %v618 = vrot.slane %v610, %v617
          %v620 = vunpack.c.l.s4 1983009808
          %v621 = vunpack.c.0.s8 %v620
          %v622 = vlaneseq
          %v623 = vshrl.u32 %v622, 7
          %v624 = vsub.s32 %v621, %v623
          %v625 = vrot.slane %v611, %v624
          %v626 = vcombine.low %v522, %v524
          %v627 = vcombine.high %v522, %v524
          %v629 = vunpack.c.l.s4 1983009808
          %v630 = vunpack.c.0.s8 %v629
          %v631 = vlaneseq
          %v632 = vshrl.u32 %v631, 7
          %v633 = vsub.s32 %v630, %v632
          %v634 = vrot.slane %v626, %v633
          %v636 = vunpack.c.l.s4 1983009808
          %v637 = vunpack.c.0.s8 %v636
          %v638 = vlaneseq
          %v639 = vshrl.u32 %v638, 7
          %v640 = vsub.s32 %v637, %v639
          %v641 = vrot.slane %v627, %v640
          %v642 = vcombine.low %v523, %v525
          %v643 = vcombine.high %v523, %v525
          %v645 = vunpack.c.l.s4 1983009808
          %v646 = vunpack.c.0.s8 %v645
          %v647 = vlaneseq
          %v648 = vshrl.u32 %v647, 7
          %v649 = vsub.s32 %v646, %v648
          %v650 = vrot.slane %v642, %v649
          %v652 = vunpack.c.l.s4 1983009808
          %v653 = vunpack.c.0.s8 %v652
          %v654 = vlaneseq
          %v655 = vshrl.u32 %v654, 7
          %v656 = vsub.s32 %v653, %v655
          %v657 = vrot.slane %v643, %v656
          %v658 = vcombine.low %v602, %v618
          %v659 = vcombine.high %v602, %v618
          %v661 = vunpack.c.l.s4 1934713408
          %v662 = vunpack.c.0.s8 %v661
          %v663 = vlaneseq
          %v664 = vshrl.u32 %v663, 7
          %v665 = vsub.s32 %v662, %v664
          %v666 = vrot.slane %v658, %v665
          %v668 = vunpack.c.l.s4 1934713408
          %v669 = vunpack.c.0.s8 %v668
          %v670 = vlaneseq
          %v671 = vshrl.u32 %v670, 7
          %v672 = vsub.s32 %v669, %v671
          %v673 = vrot.slane %v659, %v672
          %v674 = vcombine.low %v609, %v625
          %v675 = vcombine.high %v609, %v625
          %v677 = vunpack.c.l.s4 1934713408
          %v678 = vunpack.c.0.s8 %v677
          %v679 = vlaneseq
          %v680 = vshrl.u32 %v679, 7
          %v681 = vsub.s32 %v678, %v680
          %v682 = vrot.slane %v674, %v681
          %v684 = vunpack.c.l.s4 1934713408
          %v685 = vunpack.c.0.s8 %v684
          %v686 = vlaneseq
          %v687 = vshrl.u32 %v686, 7
          %v688 = vsub.s32 %v685, %v687
          %v689 = vrot.slane %v675, %v688
          %v690 = vcombine.low %v634, %v650
          %v691 = vcombine.high %v634, %v650
          %v693 = vunpack.c.l.s4 1934713408
          %v694 = vunpack.c.0.s8 %v693
          %v695 = vlaneseq
          %v696 = vshrl.u32 %v695, 7
          %v697 = vsub.s32 %v694, %v696
          %v698 = vrot.slane %v690, %v697
          %v700 = vunpack.c.l.s4 1934713408
          %v701 = vunpack.c.0.s8 %v700
          %v702 = vlaneseq
          %v703 = vshrl.u32 %v702, 7
          %v704 = vsub.s32 %v701, %v703
          %v705 = vrot.slane %v691, %v704
          %v706 = vcombine.low %v641, %v657
          %v707 = vcombine.high %v641, %v657
          %v709 = vunpack.c.l.s4 1934713408
          %v710 = vunpack.c.0.s8 %v709
          %v711 = vlaneseq
          %v712 = vshrl.u32 %v711, 7
          %v713 = vsub.s32 %v710, %v712
          %v714 = vrot.slane %v706, %v713
          %v716 = vunpack.c.l.s4 1934713408
          %v717 = vunpack.c.0.s8 %v716
          %v718 = vlaneseq
          %v719 = vshrl.u32 %v718, 7
          %v720 = vsub.s32 %v717, %v719
          %v721 = vrot.slane %v707, %v720
          %v722 = vcombine.low %v666, %v698
          %v723 = vcombine.high %v666, %v698
          %v724 = vcombine.low %v673, %v705
          %v725 = vcombine.high %v673, %v705
          %v726 = vcombine.low %v682, %v714
          %v727 = vcombine.high %v682, %v714
          %v728 = vcombine.low %v689, %v721
          %v729 = vcombine.high %v689, %v721
          %v730 = vcombine.low %v566, %v573
          %v732 = vunpack.c.l.s4 1983009808
          %v733 = vunpack.c.0.s8 %v732
          %v734 = vlaneseq
          %v735 = vshrl.u32 %v734, 7
          %v736 = vsub.s32 %v733, %v735
          %v737 = vrot.slane %v730, %v736
          %v738 = vcombine.low %v590, %v591
          %v740 = vunpack.c.l.s4 1983009808
          %v741 = vunpack.c.0.s8 %v740
          %v742 = vlaneseq
          %v743 = vshrl.u32 %v742, 7
          %v744 = vsub.s32 %v741, %v743
          %v745 = vrot.slane %v738, %v744
          %v746 = vcombine.low %v582, %v589
          %v748 = vunpack.c.l.s4 1983009808
          %v749 = vunpack.c.0.s8 %v748
          %v750 = vlaneseq
          %v751 = vshrl.u32 %v750, 7
          %v752 = vsub.s32 %v749, %v751
          %v753 = vrot.slane %v746, %v752
          %v754 = vcombine.low %v592, %v593
          %v756 = vunpack.c.l.s4 1983009808
          %v757 = vunpack.c.0.s8 %v756
          %v758 = vlaneseq
          %v759 = vshrl.u32 %v758, 7
          %v760 = vsub.s32 %v757, %v759
          %v761 = vrot.slane %v754, %v760
          %v762 = vcombine.low %v737, %v745
          %v763 = vcombine.high %v737, %v745
          %v765 = vunpack.c.l.s4 1934713408
          %v766 = vunpack.c.0.s8 %v765
          %v767 = vlaneseq
          %v768 = vshrl.u32 %v767, 7
          %v769 = vsub.s32 %v766, %v768
          %v770 = vrot.slane %v762, %v769
          %v772 = vunpack.c.l.s4 1934713408
          %v773 = vunpack.c.0.s8 %v772
          %v774 = vlaneseq
          %v775 = vshrl.u32 %v774, 7
          %v776 = vsub.s32 %v773, %v775
          %v777 = vrot.slane %v763, %v776
          %v778 = vcombine.low %v753, %v761
          %v779 = vcombine.high %v753, %v761
          %v781 = vunpack.c.l.s4 1934713408
          %v782 = vunpack.c.0.s8 %v781
          %v783 = vlaneseq
          %v784 = vshrl.u32 %v783, 7
          %v785 = vsub.s32 %v782, %v784
          %v786 = vrot.slane %v778, %v785
          %v788 = vunpack.c.l.s4 1934713408
          %v789 = vunpack.c.0.s8 %v788
          %v790 = vlaneseq
          %v791 = vshrl.u32 %v790, 7
          %v792 = vsub.s32 %v789, %v791
          %v793 = vrot.slane %v779, %v792
          %v794 = vcombine.low %v770, %v786
          %v795 = vcombine.high %v770, %v786
          %v796 = vcombine.low %v777, %v793
          %v797 = vcombine.high %v777, %v793
          %v798 = vmul.f32 %v722, 0.17677669
          %v799 = vmul.f32 %v723, 0.17677669
          %v800 = vmul.f32 %v724, 0.17677669
          %v801 = vmul.f32 %v725, 0.17677669
          %v802 = vpack.c.bf16 %v798, %v798
          %v803 = vpack.c.bf16 %v799, %v799
          %v804 = vpack.c.bf16 %v800, %v800
          %v805 = vpack.c.bf16 %v801, %v801
          %vm806 = vcmask 60416
          %807 = vst.msk [vmem:[#allocation2] sm:$0xf] %vm806, %v802
          %808 = vst.msk [vmem:[#allocation2 + $0x4] sm:$0xf] %vm806, %v803
          %809 = vst.msk [vmem:[#allocation2 + $0x8] sm:$0xf] %vm806, %v804
          %810 = vst.msk [vmem:[#allocation2 + $0xc] sm:$0xf] %vm806, %v805
          %811 = vxpose.xlu0.b32.start [1/16] %v726, 128
          %812 = vxpose.xlu0.b32.cont [2/16] 0.0, 128
          %813 = vxpose.xlu0.b32.cont [3/16] 0.0, 128
          %814 = vxpose.xlu0.b32.cont [4/16] 0.0, 128
          %815 = vxpose.xlu0.b32.cont [5/16] 0.0, 128
          %816 = vxpose.xlu0.b32.cont [6/16] 0.0, 128
          %817 = vxpose.xlu0.b32.cont [7/16] 0.0, 128
          %818 = vxpose.xlu0.b32.cont [8/16] 0.0, 128
          %819 = vxpose.xlu0.b32.cont [9/16] 0.0, 128
          %820 = vxpose.xlu0.b32.cont [10/16] 0.0, 128
          %821 = vxpose.xlu0.b32.cont [11/16] 0.0, 128
          %822 = vxpose.xlu0.b32.cont [12/16] 0.0, 128
          %823 = vxpose.xlu0.b32.cont [13/16] 0.0, 128
          %824 = vxpose.xlu0.b32.cont [14/16] 0.0, 128
          %825 = vxpose.xlu0.b32.cont [15/16] 0.0, 128
          %826 = vxpose.xlu0.b32.end [16/16] 0.0, 128
          %v827 = vpop.trf.xlu0
          %v828 = vpop.trf.xlu0
          %v829 = vpop.trf.xlu0
          %v830 = vpop.trf.xlu0
          %v831 = vpop.trf.xlu0
          %v832 = vpop.trf.xlu0
          %v833 = vpop.trf.xlu0
          %v834 = vpop.trf.xlu0
          %v835 = vpop.trf.xlu0
          %v836 = vpop.trf.xlu0
          %v837 = vpop.trf.xlu0
          %v838 = vpop.trf.xlu0
          %v839 = vpop.trf.xlu0
          %v840 = vpop.trf.xlu0
          %v841 = vpop.trf.xlu0
          %v842 = vpop.trf.xlu0
          %843 = vxpose.xlu0.b32.start [1/16] %v727, 128
          %844 = vxpose.xlu0.b32.cont [2/16] 0.0, 128
          %845 = vxpose.xlu0.b32.cont [3/16] 0.0, 128
          %846 = vxpose.xlu0.b32.cont [4/16] 0.0, 128
          %847 = vxpose.xlu0.b32.cont [5/16] 0.0, 128
          %848 = vxpose.xlu0.b32.cont [6/16] 0.0, 128
          %849 = vxpose.xlu0.b32.cont [7/16] 0.0, 128
          %850 = vxpose.xlu0.b32.cont [8/16] 0.0, 128
          %851 = vxpose.xlu0.b32.cont [9/16] 0.0, 128
          %852 = vxpose.xlu0.b32.cont [10/16] 0.0, 128
          %853 = vxpose.xlu0.b32.cont [11/16] 0.0, 128
          %854 = vxpose.xlu0.b32.cont [12/16] 0.0, 128
          %855 = vxpose.xlu0.b32.cont [13/16] 0.0, 128
          %856 = vxpose.xlu0.b32.cont [14/16] 0.0, 128
          %857 = vxpose.xlu0.b32.cont [15/16] 0.0, 128
          %858 = vxpose.xlu0.b32.end [16/16] 0.0, 128
          %v859 = vpop.trf.xlu0
          %v860 = vpop.trf.xlu0
          %v861 = vpop.trf.xlu0
          %v862 = vpop.trf.xlu0
          %v863 = vpop.trf.xlu0
          %v864 = vpop.trf.xlu0
          %v865 = vpop.trf.xlu0
          %v866 = vpop.trf.xlu0
          %v867 = vpop.trf.xlu0
          %v868 = vpop.trf.xlu0
          %v869 = vpop.trf.xlu0
          %v870 = vpop.trf.xlu0
          %v871 = vpop.trf.xlu0
          %v872 = vpop.trf.xlu0
          %v873 = vpop.trf.xlu0
          %v874 = vpop.trf.xlu0
          %875 = vxpose.xlu0.b32.start [1/16] %v728, 128
          %876 = vxpose.xlu0.b32.cont [2/16] 0.0, 128
          %877 = vxpose.xlu0.b32.cont [3/16] 0.0, 128
          %878 = vxpose.xlu0.b32.cont [4/16] 0.0, 128
          %879 = vxpose.xlu0.b32.cont [5/16] 0.0, 128
          %880 = vxpose.xlu0.b32.cont [6/16] 0.0, 128
          %881 = vxpose.xlu0.b32.cont [7/16] 0.0, 128
          %882 = vxpose.xlu0.b32.cont [8/16] 0.0, 128
          %883 = vxpose.xlu0.b32.cont [9/16] 0.0, 128
          %884 = vxpose.xlu0.b32.cont [10/16] 0.0, 128
          %885 = vxpose.xlu0.b32.cont [11/16] 0.0, 128
          %886 = vxpose.xlu0.b32.cont [12/16] 0.0, 128
          %887 = vxpose.xlu0.b32.cont [13/16] 0.0, 128
          %888 = vxpose.xlu0.b32.cont [14/16] 0.0, 128
          %889 = vxpose.xlu0.b32.cont [15/16] 0.0, 128
          %890 = vxpose.xlu0.b32.end [16/16] 0.0, 128
          %v891 = vpop.trf.xlu0
          %v892 = vpop.trf.xlu0
          %v893 = vpop.trf.xlu0
          %v894 = vpop.trf.xlu0
          %v895 = vpop.trf.xlu0
          %v896 = vpop.trf.xlu0
          %v897 = vpop.trf.xlu0
          %v898 = vpop.trf.xlu0
          %v899 = vpop.trf.xlu0
          %v900 = vpop.trf.xlu0
          %v901 = vpop.trf.xlu0
          %v902 = vpop.trf.xlu0
          %v903 = vpop.trf.xlu0
          %v904 = vpop.trf.xlu0
          %v905 = vpop.trf.xlu0
          %v906 = vpop.trf.xlu0
          %907 = vxpose.xlu0.b32.start [1/16] %v729, 128
          %908 = vxpose.xlu0.b32.cont [2/16] 0.0, 128
          %909 = vxpose.xlu0.b32.cont [3/16] 0.0, 128
          %910 = vxpose.xlu0.b32.cont [4/16] 0.0, 128
          %911 = vxpose.xlu0.b32.cont [5/16] 0.0, 128
          %912 = vxpose.xlu0.b32.cont [6/16] 0.0, 128
          %913 = vxpose.xlu0.b32.cont [7/16] 0.0, 128
          %914 = vxpose.xlu0.b32.cont [8/16] 0.0, 128
          %915 = vxpose.xlu0.b32.cont [9/16] 0.0, 128
          %916 = vxpose.xlu0.b32.cont [10/16] 0.0, 128
          %917 = vxpose.xlu0.b32.cont [11/16] 0.0, 128
          %918 = vxpose.xlu0.b32.cont [12/16] 0.0, 128
          %919 = vxpose.xlu0.b32.cont [13/16] 0.0, 128
          %920 = vxpose.xlu0.b32.cont [14/16] 0.0, 128
          %921 = vxpose.xlu0.b32.cont [15/16] 0.0, 128
          %922 = vxpose.xlu0.b32.end [16/16] 0.0, 128
          %v923 = vpop.trf.xlu0
          %v924 = vpop.trf.xlu0
          %v925 = vpop.trf.xlu0
          %v926 = vpop.trf.xlu0
          %v927 = vpop.trf.xlu0
          %v928 = vpop.trf.xlu0
          %v929 = vpop.trf.xlu0
          %v930 = vpop.trf.xlu0
          %v931 = vpop.trf.xlu0
          %v932 = vpop.trf.xlu0
          %v933 = vpop.trf.xlu0
          %v934 = vpop.trf.xlu0
          %v935 = vpop.trf.xlu0
          %v936 = vpop.trf.xlu0
          %v937 = vpop.trf.xlu0
          %v938 = vpop.trf.xlu0
          %v939 = vpack.c.bf16 %v827, %v827
          %v940 = vpack.c.bf16 %v859, %v859
          %v941 = vpack.c.bf16 %v891, %v891
          %v942 = vpack.c.bf16 %v923, %v923
          %943 = vst.msk [vmem:[#allocation3] sm:$0xf] %vm806, %v939
          %944 = vst.msk [vmem:[#allocation3 + $0x4] sm:$0xf] %vm806, %v940
          %945 = vst.msk [vmem:[#allocation3 + $0x8] sm:$0xf] %vm806, %v941
          %946 = vst.msk [vmem:[#allocation3 + $0xc] sm:$0xf] %vm806, %v942
          %v947 = vpack.c.bf16 %v794, %v794
          %v948 = vpack.c.bf16 %v795, %v795
          %v949 = vpack.c.bf16 %v796, %v796
          %v950 = vpack.c.bf16 %v797, %v797
          %951 = vst.msk [vmem:[#allocation4] sm:$0xf] %vm806, %v947
          %952 = vst.msk [vmem:[#allocation4 + $0x4] sm:$0xf] %vm806, %v948
          %953 = vst.msk [vmem:[#allocation4 + $0x8] sm:$0xf] %vm806, %v949
          %954 = vst.msk [vmem:[#allocation4 + $0xc] sm:$0xf] %vm806, %v950
        $region56: #{tpu_custom_call.1} parent=39 // pred_fallthru
          _
        %s955 = smul.u32 %s28, 8
        %s956 = sshra.s32 %s955, 3
        %s957 = sand.u32 %s955, 7
        %s958 = smul.addr %s956, 4
        %s959 = scalar_lea.vmem [#allocation2], %s958
        %v960 = vld [vmem:[%s959] sm:$0xf]
        %v961 = vld [vmem:[%s959 + $0x4] sm:$0xf]
        %v962 = vld [vmem:[%s959 + $0x8] sm:$0xf]
        %v963 = vld [vmem:[%s959 + $0xc] sm:$0xf]
        %v964 = vld [vmem:[#allocation3] sm:$0xf]
        %v965 = vld [vmem:[#allocation3 + $0x4] sm:$0xf]
        %v966 = vld [vmem:[#allocation3 + $0x8] sm:$0xf]
        %v967 = vld [vmem:[#allocation3 + $0xc] sm:$0xf]
        %v968 = vld [vmem:[#allocation4] sm:$0xf]
        %v969 = vld [vmem:[#allocation4 + $0x4] sm:$0xf]
        %v970 = vld [vmem:[#allocation4 + $0x8] sm:$0xf]
        %v971 = vld [vmem:[#allocation4 + $0xc] sm:$0xf]
        %vm972 = vcmask 64512
        %v974 = vsel %vm972, %v960, 0
        %vm976 = vcmask 1043456
        %v978 = vsel %vm976, %v964, 0
        %980 = vmatprep.subr.bf16.mxu0 0
        %981 = vmatpush1.bf16.msra.mxu0 %v978
        %982 = vmatprep.subr.bf16.mxu0 0
        %983 = vmatpush1.bf16.msra.mxu0 0
        %984 = vmatprep.subr.bf16.mxu0 0
        %985 = vmatpush1.bf16.msra.mxu0 0
        %986 = vmatprep.subr.bf16.mxu0 0
        %987 = vmatpush1.bf16.msra.mxu0 0
        %988 = vmatprep.subr.bf16.mxu0 0
        %989 = vmatpush1.bf16.msra.mxu0 0
        %990 = vmatprep.subr.bf16.mxu0 0
        %991 = vmatpush1.bf16.msra.mxu0 0
        %992 = vmatprep.subr.bf16.mxu0 0
        %993 = vmatpush1.bf16.msra.mxu0 0
        %994 = vmatprep.subr.bf16.mxu0 0
        %995 = vmatpush1.bf16.msra.mxu0 0
        %996 = vmatprep.subr.bf16.mxu0 0
        %997 = vmatpush1.bf16.msra.mxu0 0
        %998 = vmatprep.subr.bf16.mxu0 0
        %999 = vmatpush1.bf16.msra.mxu0 0
        %1000 = vmatprep.subr.bf16.mxu0 0
        %1001 = vmatpush1.bf16.msra.mxu0 0
        %1002 = vmatprep.subr.bf16.mxu0 0
        %1003 = vmatpush1.bf16.msra.mxu0 0
        %1004 = vmatprep.subr.bf16.mxu0 0
        %1005 = vmatpush1.bf16.msra.mxu0 0
        %1006 = vmatprep.subr.bf16.mxu0 0
        %1007 = vmatpush1.bf16.msra.mxu0 0
        %1008 = vmatprep.subr.bf16.mxu0 0
        %1009 = vmatpush1.bf16.msra.mxu0 0
        %1010 = vmatprep.subr.bf16.mxu0 0
        %1011 = vmatpush1.bf16.msra.mxu0 0
        %1012 = vmatprep.mubr.bf16.mxu0 0
        %1013 = vmatmul.mubr.bf16.gmra.mrb[0].mxu0 %v974
        %v1014 = vpop.f32.mrb[0].mxu0
        %v1015 = vadd.f32 0.0, %v1014
        %v1016 = vpop.f32.mrb[0].mxu0
        %v1017 = vpop.f32.mrb[0].mxu0
        %v1018 = vpop.f32.mrb[0].mxu0
        %1019 = vdwg.mxu0
        %v1021 = vsel %vm972, %v961, 0
        %v1024 = vsel %vm976, %v965, 0
        %1026 = vmatprep.subr.bf16.mxu0 0
        %1027 = vmatpush1.bf16.msra.mxu0 %v1024
        %1028 = vmatprep.subr.bf16.mxu0 0
        %1029 = vmatpush1.bf16.msra.mxu0 0
        %1030 = vmatprep.subr.bf16.mxu0 0
        %1031 = vmatpush1.bf16.msra.mxu0 0
        %1032 = vmatprep.subr.bf16.mxu0 0
        %1033 = vmatpush1.bf16.msra.mxu0 0
        %1034 = vmatprep.subr.bf16.mxu0 0
        %1035 = vmatpush1.bf16.msra.mxu0 0
        %1036 = vmatprep.subr.bf16.mxu0 0
        %1037 = vmatpush1.bf16.msra.mxu0 0
        %1038 = vmatprep.subr.bf16.mxu0 0
        %1039 = vmatpush1.bf16.msra.mxu0 0
        %1040 = vmatprep.subr.bf16.mxu0 0
        %1041 = vmatpush1.bf16.msra.mxu0 0
        %1042 = vmatprep.subr.bf16.mxu0 0
        %1043 = vmatpush1.bf16.msra.mxu0 0
        %1044 = vmatprep.subr.bf16.mxu0 0
        %1045 = vmatpush1.bf16.msra.mxu0 0
        %1046 = vmatprep.subr.bf16.mxu0 0
        %1047 = vmatpush1.bf16.msra.mxu0 0
        %1048 = vmatprep.subr.bf16.mxu0 0
        %1049 = vmatpush1.bf16.msra.mxu0 0
        %1050 = vmatprep.subr.bf16.mxu0 0
        %1051 = vmatpush1.bf16.msra.mxu0 0
        %1052 = vmatprep.subr.bf16.mxu0 0
        %1053 = vmatpush1.bf16.msra.mxu0 0
        %1054 = vmatprep.subr.bf16.mxu0 0
        %1055 = vmatpush1.bf16.msra.mxu0 0
        %1056 = vmatprep.subr.bf16.mxu0 0
        %1057 = vmatpush1.bf16.msra.mxu0 0
        %1058 = vmatprep.mubr.bf16.mxu0 0
        %1059 = vmatmul.mubr.bf16.gmra.mrb[0].mxu0 %v1021
        %v1060 = vpop.f32.mrb[0].mxu0
        %v1061 = vadd.f32 0.0, %v1060
        %v1062 = vpop.f32.mrb[0].mxu0
        %v1063 = vpop.f32.mrb[0].mxu0
        %v1064 = vpop.f32.mrb[0].mxu0
        %1065 = vdwg.mxu0
        %v1067 = vsel %vm972, %v962, 0
        %v1070 = vsel %vm976, %v966, 0
        %1072 = vmatprep.subr.bf16.mxu0 0
        %1073 = vmatpush1.bf16.msra.mxu0 %v1070
        %1074 = vmatprep.subr.bf16.mxu0 0
        %1075 = vmatpush1.bf16.msra.mxu0 0
        %1076 = vmatprep.subr.bf16.mxu0 0
        %1077 = vmatpush1.bf16.msra.mxu0 0
        %1078 = vmatprep.subr.bf16.mxu0 0
        %1079 = vmatpush1.bf16.msra.mxu0 0
        %1080 = vmatprep.subr.bf16.mxu0 0
        %1081 = vmatpush1.bf16.msra.mxu0 0
        %1082 = vmatprep.subr.bf16.mxu0 0
        %1083 = vmatpush1.bf16.msra.mxu0 0
        %1084 = vmatprep.subr.bf16.mxu0 0
        %1085 = vmatpush1.bf16.msra.mxu0 0
        %1086 = vmatprep.subr.bf16.mxu0 0
        %1087 = vmatpush1.bf16.msra.mxu0 0
        %1088 = vmatprep.subr.bf16.mxu0 0
        %1089 = vmatpush1.bf16.msra.mxu0 0
        %1090 = vmatprep.subr.bf16.mxu0 0
        %1091 = vmatpush1.bf16.msra.mxu0 0
        %1092 = vmatprep.subr.bf16.mxu0 0
        %1093 = vmatpush1.bf16.msra.mxu0 0
        %1094 = vmatprep.subr.bf16.mxu0 0
        %1095 = vmatpush1.bf16.msra.mxu0 0
        %1096 = vmatprep.subr.bf16.mxu0 0
        %1097 = vmatpush1.bf16.msra.mxu0 0
        %1098 = vmatprep.subr.bf16.mxu0 0
        %1099 = vmatpush1.bf16.msra.mxu0 0
        %1100 = vmatprep.subr.bf16.mxu0 0
        %1101 = vmatpush1.bf16.msra.mxu0 0
        %1102 = vmatprep.subr.bf16.mxu0 0
        %1103 = vmatpush1.bf16.msra.mxu0 0
        %1104 = vmatprep.mubr.bf16.mxu0 0
        %1105 = vmatmul.mubr.bf16.gmra.mrb[0].mxu0 %v1067
        %v1106 = vpop.f32.mrb[0].mxu0
        %v1107 = vadd.f32 0.0, %v1106
        %v1108 = vpop.f32.mrb[0].mxu0
        %v1109 = vpop.f32.mrb[0].mxu0
        %v1110 = vpop.f32.mrb[0].mxu0
        %1111 = vdwg.mxu0
        %v1113 = vsel %vm972, %v963, 0
        %v1116 = vsel %vm976, %v967, 0
        %1118 = vmatprep.subr.bf16.mxu0 0
        %1119 = vmatpush1.bf16.msra.mxu0 %v1116
        %1120 = vmatprep.subr.bf16.mxu0 0
        %1121 = vmatpush1.bf16.msra.mxu0 0
        %1122 = vmatprep.subr.bf16.mxu0 0
        %1123 = vmatpush1.bf16.msra.mxu0 0
        %1124 = vmatprep.subr.bf16.mxu0 0
        %1125 = vmatpush1.bf16.msra.mxu0 0
        %1126 = vmatprep.subr.bf16.mxu0 0
        %1127 = vmatpush1.bf16.msra.mxu0 0
        %1128 = vmatprep.subr.bf16.mxu0 0
        %1129 = vmatpush1.bf16.msra.mxu0 0
        %1130 = vmatprep.subr.bf16.mxu0 0
        %1131 = vmatpush1.bf16.msra.mxu0 0
        %1132 = vmatprep.subr.bf16.mxu0 0
        %1133 = vmatpush1.bf16.msra.mxu0 0
        %1134 = vmatprep.subr.bf16.mxu0 0
        %1135 = vmatpush1.bf16.msra.mxu0 0
        %1136 = vmatprep.subr.bf16.mxu0 0
        %1137 = vmatpush1.bf16.msra.mxu0 0
        %1138 = vmatprep.subr.bf16.mxu0 0
        %1139 = vmatpush1.bf16.msra.mxu0 0
        %1140 = vmatprep.subr.bf16.mxu0 0
        %1141 = vmatpush1.bf16.msra.mxu0 0
        %1142 = vmatprep.subr.bf16.mxu0 0
        %1143 = vmatpush1.bf16.msra.mxu0 0
        %1144 = vmatprep.subr.bf16.mxu0 0
        %1145 = vmatpush1.bf16.msra.mxu0 0
        %1146 = vmatprep.subr.bf16.mxu0 0
        %1147 = vmatpush1.bf16.msra.mxu0 0
        %1148 = vmatprep.subr.bf16.mxu0 0
        %1149 = vmatpush1.bf16.msra.mxu0 0
        %1150 = vmatprep.mubr.bf16.mxu0 0
        %1151 = vmatmul.mubr.bf16.gmra.mrb[0].mxu0 %v1113
        %v1152 = vpop.f32.mrb[0].mxu0
        %v1153 = vadd.f32 0.0, %v1152
        %v1154 = vpop.f32.mrb[0].mxu0
        %v1155 = vpop.f32.mrb[0].mxu0
        %v1156 = vpop.f32.mrb[0].mxu0
        %1157 = vdwg.mxu0
        %v1158 = vsel %vm972, %v1015, -inf
        %1159 = vmax.xlane.f32.xlu0 %v1158
        %v1160 = vpop.xlane.xlu0 %1159
        %v1161 = vsel %vm972, %v1061, -inf
        %1162 = vmax.xlane.f32.xlu0 %v1161
        %v1163 = vpop.xlane.xlu0 %1162
        %v1164 = vsel %vm972, %v1107, -inf
        %1165 = vmax.xlane.f32.xlu0 %v1164
        %v1166 = vpop.xlane.xlu0 %1165
        %v1167 = vsel %vm972, %v1153, -inf
        %1168 = vmax.xlane.f32.xlu0 %v1167
        %v1169 = vpop.xlane.xlu0 %1168
        %v1170 = vsub.f32 -inf, %v1160
        %v1171 = vsub.f32 -inf, %v1163
        %v1172 = vsub.f32 -inf, %v1166
        %v1173 = vsub.f32 -inf, %v1169
        %v1174 = vmul.f32 %v1170, 1.442695
        %v1175 = vpow.pop %v1174
        %v1176 = vmul.f32 %v1171, 1.442695
        %v1177 = vpow.pop %v1176
        %v1178 = vmul.f32 %v1172, 1.442695
        %v1179 = vpow.pop %v1178
        %v1180 = vmul.f32 %v1173, 1.442695
        %v1181 = vpow.pop %v1180
        %v1182 = vsub.f32 %v1015, %v1160
        %v1183 = vsub.f32 %v1061, %v1163
        %v1184 = vsub.f32 %v1107, %v1166
        %v1185 = vsub.f32 %v1153, %v1169
        %v1186 = vmul.f32 %v1182, 1.442695
        %v1187 = vpow.pop %v1186
        %v1188 = vmul.f32 %v1183, 1.442695
        %v1189 = vpow.pop %v1188
        %v1190 = vmul.f32 %v1184, 1.442695
        %v1191 = vpow.pop %v1190
        %v1192 = vmul.f32 %v1185, 1.442695
        %v1193 = vpow.pop %v1192
        %v1194 = vmul.f32 %v1175, 0.0
        %v1195 = vmul.f32 %v1177, 0.0
        %v1196 = vmul.f32 %v1179, 0.0
        %v1197 = vmul.f32 %v1181, 0.0
        %v1198 = vsel %vm972, %v1187, 0.0
        %1199 = vadd.xlane.f32.xlu0 %v1198
        %v1200 = vpop.xlane.xlu0 %1199
        %v1201 = vsel %vm972, %v1189, 0.0
        %1202 = vadd.xlane.f32.xlu0 %v1201
        %v1203 = vpop.xlane.xlu0 %1202
        %v1204 = vsel %vm972, %v1191, 0.0
        %1205 = vadd.xlane.f32.xlu0 %v1204
        %v1206 = vpop.xlane.xlu0 %1205
        %v1207 = vsel %vm972, %v1193, 0.0
        %1208 = vadd.xlane.f32.xlu0 %v1207
        %v1209 = vpop.xlane.xlu0 %1208
        %v1210 = vadd.f32 %v1194, %v1200
        %v1211 = vadd.f32 %v1195, %v1203
        %v1212 = vadd.f32 %v1196, %v1206
        %v1213 = vadd.f32 %v1197, %v1209
        %v1214 = vpack.c.bf16 %v1187, %v1187
        %v1215 = vpack.c.bf16 %v1189, %v1189
        %v1216 = vpack.c.bf16 %v1191, %v1191
        %v1217 = vpack.c.bf16 %v1193, %v1193
        %v1219 = vsel %vm972, %v1214, 0
        %v1222 = vsel %vm976, %v968, 0
        %1224 = vmatprep.subr.bf16.mxu0 0
        %1225 = vmatpush1.bf16.msra.mxu0 %v1222
        %1226 = vmatprep.subr.bf16.mxu0 0
        %1227 = vmatpush1.bf16.msra.mxu0 0
        %1228 = vmatprep.subr.bf16.mxu0 0
        %1229 = vmatpush1.bf16.msra.mxu0 0
        %1230 = vmatprep.subr.bf16.mxu0 0
        %1231 = vmatpush1.bf16.msra.mxu0 0
        %1232 = vmatprep.subr.bf16.mxu0 0
        %1233 = vmatpush1.bf16.msra.mxu0 0
        %1234 = vmatprep.subr.bf16.mxu0 0
        %1235 = vmatpush1.bf16.msra.mxu0 0
        %1236 = vmatprep.subr.bf16.mxu0 0
        %1237 = vmatpush1.bf16.msra.mxu0 0
        %1238 = vmatprep.subr.bf16.mxu0 0
        %1239 = vmatpush1.bf16.msra.mxu0 0
        %1240 = vmatprep.subr.bf16.mxu0 0
        %1241 = vmatpush1.bf16.msra.mxu0 0
        %1242 = vmatprep.subr.bf16.mxu0 0
        %1243 = vmatpush1.bf16.msra.mxu0 0
        %1244 = vmatprep.subr.bf16.mxu0 0
        %1245 = vmatpush1.bf16.msra.mxu0 0
        %1246 = vmatprep.subr.bf16.mxu0 0
        %1247 = vmatpush1.bf16.msra.mxu0 0
        %1248 = vmatprep.subr.bf16.mxu0 0
        %1249 = vmatpush1.bf16.msra.mxu0 0
        %1250 = vmatprep.subr.bf16.mxu0 0
        %1251 = vmatpush1.bf16.msra.mxu0 0
        %1252 = vmatprep.subr.bf16.mxu0 0
        %1253 = vmatpush1.bf16.msra.mxu0 0
        %1254 = vmatprep.subr.bf16.mxu0 0
        %1255 = vmatpush1.bf16.msra.mxu0 0
        %1256 = vmatprep.mubr.bf16.mxu0 0
        %1257 = vmatmul.mubr.bf16.gmra.mrb[0].mxu0 %v1219
        %v1258 = vpop.f32.mrb[0].mxu0
        %v1259 = vadd.f32 0.0, %v1258
        %v1260 = vpop.f32.mrb[0].mxu0
        %v1261 = vpop.f32.mrb[0].mxu0
        %v1262 = vpop.f32.mrb[0].mxu0
        %1263 = vdwg.mxu0
        %v1265 = vsel %vm972, %v1215, 0
        %v1268 = vsel %vm976, %v969, 0
        %1270 = vmatprep.subr.bf16.mxu0 0
        %1271 = vmatpush1.bf16.msra.mxu0 %v1268
        %1272 = vmatprep.subr.bf16.mxu0 0
        %1273 = vmatpush1.bf16.msra.mxu0 0
        %1274 = vmatprep.subr.bf16.mxu0 0
        %1275 = vmatpush1.bf16.msra.mxu0 0
        %1276 = vmatprep.subr.bf16.mxu0 0
        %1277 = vmatpush1.bf16.msra.mxu0 0
        %1278 = vmatprep.subr.bf16.mxu0 0
        %1279 = vmatpush1.bf16.msra.mxu0 0
        %1280 = vmatprep.subr.bf16.mxu0 0
        %1281 = vmatpush1.bf16.msra.mxu0 0
        %1282 = vmatprep.subr.bf16.mxu0 0
        %1283 = vmatpush1.bf16.msra.mxu0 0
        %1284 = vmatprep.subr.bf16.mxu0 0
        %1285 = vmatpush1.bf16.msra.mxu0 0
        %1286 = vmatprep.subr.bf16.mxu0 0
        %1287 = vmatpush1.bf16.msra.mxu0 0
        %1288 = vmatprep.subr.bf16.mxu0 0
        %1289 = vmatpush1.bf16.msra.mxu0 0
        %1290 = vmatprep.subr.bf16.mxu0 0
        %1291 = vmatpush1.bf16.msra.mxu0 0
        %1292 = vmatprep.subr.bf16.mxu0 0
        %1293 = vmatpush1.bf16.msra.mxu0 0
        %1294 = vmatprep.subr.bf16.mxu0 0
        %1295 = vmatpush1.bf16.msra.mxu0 0
        %1296 = vmatprep.subr.bf16.mxu0 0
        %1297 = vmatpush1.bf16.msra.mxu0 0
        %1298 = vmatprep.subr.bf16.mxu0 0
        %1299 = vmatpush1.bf16.msra.mxu0 0
        %1300 = vmatprep.subr.bf16.mxu0 0
        %1301 = vmatpush1.bf16.msra.mxu0 0
        %1302 = vmatprep.mubr.bf16.mxu0 0
        %1303 = vmatmul.mubr.bf16.gmra.mrb[0].mxu0 %v1265
        %v1304 = vpop.f32.mrb[0].mxu0
        %v1305 = vadd.f32 0.0, %v1304
        %v1306 = vpop.f32.mrb[0].mxu0
        %v1307 = vpop.f32.mrb[0].mxu0
        %v1308 = vpop.f32.mrb[0].mxu0
        %1309 = vdwg.mxu0
        %v1311 = vsel %vm972, %v1216, 0
        %v1314 = vsel %vm976, %v970, 0
        %1316 = vmatprep.subr.bf16.mxu0 0
        %1317 = vmatpush1.bf16.msra.mxu0 %v1314
        %1318 = vmatprep.subr.bf16.mxu0 0
        %1319 = vmatpush1.bf16.msra.mxu0 0
        %1320 = vmatprep.subr.bf16.mxu0 0
        %1321 = vmatpush1.bf16.msra.mxu0 0
        %1322 = vmatprep.subr.bf16.mxu0 0
        %1323 = vmatpush1.bf16.msra.mxu0 0
        %1324 = vmatprep.subr.bf16.mxu0 0
        %1325 = vmatpush1.bf16.msra.mxu0 0
        %1326 = vmatprep.subr.bf16.mxu0 0
        %1327 = vmatpush1.bf16.msra.mxu0 0
        %1328 = vmatprep.subr.bf16.mxu0 0
        %1329 = vmatpush1.bf16.msra.mxu0 0
        %1330 = vmatprep.subr.bf16.mxu0 0
        %1331 = vmatpush1.bf16.msra.mxu0 0
        %1332 = vmatprep.subr.bf16.mxu0 0
        %1333 = vmatpush1.bf16.msra.mxu0 0
        %1334 = vmatprep.subr.bf16.mxu0 0
        %1335 = vmatpush1.bf16.msra.mxu0 0
        %1336 = vmatprep.subr.bf16.mxu0 0
        %1337 = vmatpush1.bf16.msra.mxu0 0
        %1338 = vmatprep.subr.bf16.mxu0 0
        %1339 = vmatpush1.bf16.msra.mxu0 0
        %1340 = vmatprep.subr.bf16.mxu0 0
        %1341 = vmatpush1.bf16.msra.mxu0 0
        %1342 = vmatprep.subr.bf16.mxu0 0
        %1343 = vmatpush1.bf16.msra.mxu0 0
        %1344 = vmatprep.subr.bf16.mxu0 0
        %1345 = vmatpush1.bf16.msra.mxu0 0
        %1346 = vmatprep.subr.bf16.mxu0 0
        %1347 = vmatpush1.bf16.msra.mxu0 0
        %1348 = vmatprep.mubr.bf16.mxu0 0
        %1349 = vmatmul.mubr.bf16.gmra.mrb[0].mxu0 %v1311
        %v1350 = vpop.f32.mrb[0].mxu0
        %v1351 = vadd.f32 0.0, %v1350
        %v1352 = vpop.f32.mrb[0].mxu0
        %v1353 = vpop.f32.mrb[0].mxu0
        %v1354 = vpop.f32.mrb[0].mxu0
        %1355 = vdwg.mxu0
        %v1357 = vsel %vm972, %v1217, 0
        %v1360 = vsel %vm976, %v971, 0
        %1362 = vmatprep.subr.bf16.mxu0 0
        %1363 = vmatpush1.bf16.msra.mxu0 %v1360
        %1364 = vmatprep.subr.bf16.mxu0 0
        %1365 = vmatpush1.bf16.msra.mxu0 0
        %1366 = vmatprep.subr.bf16.mxu0 0
        %1367 = vmatpush1.bf16.msra.mxu0 0
        %1368 = vmatprep.subr.bf16.mxu0 0
        %1369 = vmatpush1.bf16.msra.mxu0 0
        %1370 = vmatprep.subr.bf16.mxu0 0
        %1371 = vmatpush1.bf16.msra.mxu0 0
        %1372 = vmatprep.subr.bf16.mxu0 0
        %1373 = vmatpush1.bf16.msra.mxu0 0
        %1374 = vmatprep.subr.bf16.mxu0 0
        %1375 = vmatpush1.bf16.msra.mxu0 0
        %1376 = vmatprep.subr.bf16.mxu0 0
        %1377 = vmatpush1.bf16.msra.mxu0 0
        %1378 = vmatprep.subr.bf16.mxu0 0
        %1379 = vmatpush1.bf16.msra.mxu0 0
        %1380 = vmatprep.subr.bf16.mxu0 0
        %1381 = vmatpush1.bf16.msra.mxu0 0
        %1382 = vmatprep.subr.bf16.mxu0 0
        %1383 = vmatpush1.bf16.msra.mxu0 0
        %1384 = vmatprep.subr.bf16.mxu0 0
        %1385 = vmatpush1.bf16.msra.mxu0 0
        %1386 = vmatprep.subr.bf16.mxu0 0
        %1387 = vmatpush1.bf16.msra.mxu0 0
        %1388 = vmatprep.subr.bf16.mxu0 0
        %1389 = vmatpush1.bf16.msra.mxu0 0
        %1390 = vmatprep.subr.bf16.mxu0 0
        %1391 = vmatpush1.bf16.msra.mxu0 0
        %1392 = vmatprep.subr.bf16.mxu0 0
        %1393 = vmatpush1.bf16.msra.mxu0 0
        %1394 = vmatprep.mubr.bf16.mxu0 0
        %1395 = vmatmul.mubr.bf16.gmra.mrb[0].mxu0 %v1357
        %v1396 = vpop.f32.mrb[0].mxu0
        %v1397 = vadd.f32 0.0, %v1396
        %v1398 = vpop.f32.mrb[0].mxu0
        %v1399 = vpop.f32.mrb[0].mxu0
        %v1400 = vpop.f32.mrb[0].mxu0
        %1401 = vdwg.mxu0
        %v1402 = vadd.f32 %v1194, %v1259
        %v1403 = vadd.f32 %v1195, %v1305
        %v1404 = vadd.f32 %v1196, %v1351
        %v1405 = vadd.f32 %v1197, %v1397
        %v1406 = vrcp.pop %v1210
        %v1407 = vrcp.pop %v1211
        %v1408 = vrcp.pop %v1212
        %v1409 = vrcp.pop %v1213
        %v1410 = vmul.f32 %v1402, %v1406
        %v1411 = vmul.f32 %v1403, %v1407
        %v1412 = vmul.f32 %v1404, %v1408
        %v1413 = vmul.f32 %v1405, %v1409
        %v1414 = vcombine.low %v1410, %v1412
        %v1415 = vcombine.high %v1410, %v1412
        %v1417 = vunpack.c.l.s4 1983009808
        %v1418 = vunpack.c.0.s8 %v1417
        %v1419 = vlaneseq
        %v1420 = vshrl.u32 %v1419, 7
        %v1421 = vsub.s32 %v1418, %v1420
        %v1422 = vrot.slane %v1414, %v1421
        %v1424 = vunpack.c.l.s4 1983009808
        %v1425 = vunpack.c.0.s8 %v1424
        %v1426 = vlaneseq
        %v1427 = vshrl.u32 %v1426, 7
        %v1428 = vsub.s32 %v1425, %v1427
        %v1429 = vrot.slane %v1415, %v1428
        %v1430 = vcombine.low %v1411, %v1413
        %v1431 = vcombine.high %v1411, %v1413
        %v1433 = vunpack.c.l.s4 1983009808
        %v1434 = vunpack.c.0.s8 %v1433
        %v1435 = vlaneseq
        %v1436 = vshrl.u32 %v1435, 7
        %v1437 = vsub.s32 %v1434, %v1436
        %v1438 = vrot.slane %v1430, %v1437
        %v1440 = vunpack.c.l.s4 1983009808
        %v1441 = vunpack.c.0.s8 %v1440
        %v1442 = vlaneseq
        %v1443 = vshrl.u32 %v1442, 7
        %v1444 = vsub.s32 %v1441, %v1443
        %v1445 = vrot.slane %v1431, %v1444
        %v1446 = vcombine.low %v1422, %v1438
        %v1447 = vcombine.high %v1422, %v1438
        %v1449 = vunpack.c.l.s4 1934713408
        %v1450 = vunpack.c.0.s8 %v1449
        %v1451 = vlaneseq
        %v1452 = vshrl.u32 %v1451, 7
        %v1453 = vsub.s32 %v1450, %v1452
        %v1454 = vrot.slane %v1446, %v1453
        %v1456 = vunpack.c.l.s4 1934713408
        %v1457 = vunpack.c.0.s8 %v1456
        %v1458 = vlaneseq
        %v1459 = vshrl.u32 %v1458, 7
        %v1460 = vsub.s32 %v1457, %v1459
        %v1461 = vrot.slane %v1447, %v1460
        %v1462 = vcombine.low %v1429, %v1445
        %v1463 = vcombine.high %v1429, %v1445
        %v1465 = vunpack.c.l.s4 1934713408
        %v1466 = vunpack.c.0.s8 %v1465
        %v1467 = vlaneseq
        %v1468 = vshrl.u32 %v1467, 7
        %v1469 = vsub.s32 %v1466, %v1468
        %v1470 = vrot.slane %v1462, %v1469
        %v1472 = vunpack.c.l.s4 1934713408
        %v1473 = vunpack.c.0.s8 %v1472
        %v1474 = vlaneseq
        %v1475 = vshrl.u32 %v1474, 7
        %v1476 = vsub.s32 %v1473, %v1475
        %v1477 = vrot.slane %v1463, %v1476
        %v1478 = vcombine.high %v1454, 0.0
        %v1479 = vcombine.high %v1461, 0.0
        %v1480 = vcombine.high %v1470, 0.0
        %v1481 = vcombine.high %v1477, 0.0
        %v1482 = vcombine.low %v1454, %v1461
        %v1484 = vunpack.c.l.s4 1983009808
        %v1485 = vunpack.c.0.s8 %v1484
        %v1486 = vlaneseq
        %v1487 = vshrl.u32 %v1486, 7
        %v1488 = vsub.s32 %v1485, %v1487
        %v1489 = vrot.slane %v1482, %v1488
        %v1490 = vcombine.low %v1478, %v1479
        %v1492 = vunpack.c.l.s4 1983009808
        %v1493 = vunpack.c.0.s8 %v1492
        %v1494 = vlaneseq
        %v1495 = vshrl.u32 %v1494, 7
        %v1496 = vsub.s32 %v1493, %v1495
        %v1497 = vrot.slane %v1490, %v1496
        %v1498 = vcombine.low %v1470, %v1477
        %v1500 = vunpack.c.l.s4 1983009808
        %v1501 = vunpack.c.0.s8 %v1500
        %v1502 = vlaneseq
        %v1503 = vshrl.u32 %v1502, 7
        %v1504 = vsub.s32 %v1501, %v1503
        %v1505 = vrot.slane %v1498, %v1504
        %v1506 = vcombine.low %v1480, %v1481
        %v1508 = vunpack.c.l.s4 1983009808
        %v1509 = vunpack.c.0.s8 %v1508
        %v1510 = vlaneseq
        %v1511 = vshrl.u32 %v1510, 7
        %v1512 = vsub.s32 %v1509, %v1511
        %v1513 = vrot.slane %v1506, %v1512
        %v1514 = vcombine.low %v1489, %v1497
        %v1515 = vcombine.high %v1489, %v1497
        %v1517 = vunpack.c.l.s4 1934713408
        %v1518 = vunpack.c.0.s8 %v1517
        %v1519 = vlaneseq
        %v1520 = vshrl.u32 %v1519, 7
        %v1521 = vsub.s32 %v1518, %v1520
        %v1522 = vrot.slane %v1514, %v1521
        %v1524 = vunpack.c.l.s4 1934713408
        %v1525 = vunpack.c.0.s8 %v1524
        %v1526 = vlaneseq
        %v1527 = vshrl.u32 %v1526, 7
        %v1528 = vsub.s32 %v1525, %v1527
        %v1529 = vrot.slane %v1515, %v1528
        %v1530 = vcombine.low %v1505, %v1513
        %v1531 = vcombine.high %v1505, %v1513
        %v1533 = vunpack.c.l.s4 1934713408
        %v1534 = vunpack.c.0.s8 %v1533
        %v1535 = vlaneseq
        %v1536 = vshrl.u32 %v1535, 7
        %v1537 = vsub.s32 %v1534, %v1536
        %v1538 = vrot.slane %v1530, %v1537
        %v1540 = vunpack.c.l.s4 1934713408
        %v1541 = vunpack.c.0.s8 %v1540
        %v1542 = vlaneseq
        %v1543 = vshrl.u32 %v1542, 7
        %v1544 = vsub.s32 %v1541, %v1543
        %v1545 = vrot.slane %v1531, %v1544
        %v1546 = vcombine.low %v1522, %v1538
        %v1547 = vcombine.high %v1522, %v1538
        %v1548 = vcombine.low %v1529, %v1545
        %v1549 = vcombine.high %v1529, %v1545
        %1551 = vrot.lane.b32.xlu0 %v1547, 8
        %v1552 = vpop.permute.xlu0 %1551
        %1555 = vrot.lane.b32.xlu0 %v1548, 16
        %v1556 = vpop.permute.xlu0 %1555
        %1559 = vrot.lane.b32.xlu0 %v1549, 24
        %v1560 = vpop.permute.xlu0 %1559
        %v1562 = vsel %vm972, %v1546, %v1552
        %vm1563 = vcmask 130048
        %v1564 = vsel %vm1563, %v1562, %v1556
        %vm1565 = vcmask 195584
        %v1566 = vsel %vm1565, %v1564, %v1560
        %v1567 = vpack.c.bf16 %v1566, %v1566
        %v1568 = vld [vmem:[#allocation10] sm:$0xf]
        %v1569 = vld [vmem:[#allocation10 + $0x4] sm:$0xf]
        %v1570 = vld [vmem:[#allocation10 + $0x8] sm:$0xf]
        %v1571 = vld [vmem:[#allocation10 + $0xc] sm:$0xf]
        %v1572 = vld [vmem:[%s4] sm:$0x1]
        %v1574 = vlaneseq
        %v1575 = vshrl.u32 %v1574, 7
        %v1576 = vsub.s32 0, %v1575
        %v1577 = vrot.slane %v1572, %v1576
        %v1583 = vunpack.c.l.b16 %v1568
        %v1584 = vunpack.c.l.b16 %v1569
        %v1585 = vunpack.c.l.b16 %v1570
        %v1586 = vunpack.c.l.b16 %v1571
        %v1587 = vpack.c.b16 %v1584, %v1583
        %v1588 = vpack.c.b16 %v1586, %v1585
        %vm1591 = vcmask 261120
        %v1593 = vsel %vm1591, %v1567, 0
        %1595 = vmatprep.subr.bf16.mxu0 0
        %1596 = vmatpush1.bf16.msra.mxu0 %v1587
        %1597 = vmatprep.subr.bf16.mxu0 0
        %1598 = vmatpush1.bf16.msra.mxu0 %v1588
        %1599 = vmatprep.subr.bf16.mxu0 0
        %1600 = vmatpush1.bf16.msra.mxu0 0
        %1601 = vmatprep.subr.bf16.mxu0 0
        %1602 = vmatpush1.bf16.msra.mxu0 0
        %1603 = vmatprep.subr.bf16.mxu0 0
        %1604 = vmatpush1.bf16.msra.mxu0 0
        %1605 = vmatprep.subr.bf16.mxu0 0
        %1606 = vmatpush1.bf16.msra.mxu0 0
        %1607 = vmatprep.subr.bf16.mxu0 0
        %1608 = vmatpush1.bf16.msra.mxu0 0
        %1609 = vmatprep.subr.bf16.mxu0 0
        %1610 = vmatpush1.bf16.msra.mxu0 0
        %1611 = vmatprep.subr.bf16.mxu0 0
        %1612 = vmatpush1.bf16.msra.mxu0 0
        %1613 = vmatprep.subr.bf16.mxu0 0
        %1614 = vmatpush1.bf16.msra.mxu0 0
        %1615 = vmatprep.subr.bf16.mxu0 0
        %1616 = vmatpush1.bf16.msra.mxu0 0
        %1617 = vmatprep.subr.bf16.mxu0 0
        %1618 = vmatpush1.bf16.msra.mxu0 0
        %1619 = vmatprep.subr.bf16.mxu0 0
        %1620 = vmatpush1.bf16.msra.mxu0 0
        %1621 = vmatprep.subr.bf16.mxu0 0
        %1622 = vmatpush1.bf16.msra.mxu0 0
        %1623 = vmatprep.subr.bf16.mxu0 0
        %1624 = vmatpush1.bf16.msra.mxu0 0
        %1625 = vmatprep.subr.bf16.mxu0 0
        %1626 = vmatpush1.bf16.msra.mxu0 0
        %1627 = vmatprep.mubr.bf16.mxu0 0
        %1628 = vmatmul.mubr.bf16.gmra.mrb[0].mxu0 %v1593
        %v1629 = vpop.f32.mrb[0].mxu0
        %v1630 = vadd.f32 %v1577, %v1629
        %v1631 = vpop.f32.mrb[0].mxu0
        %v1632 = vpop.f32.mrb[0].mxu0
        %v1633 = vpop.f32.mrb[0].mxu0
        %1634 = vdwg.mxu0
        %1635 = vst.msk [vmem:[%s282] sm:$0xff] %vm1591, %v1630
        %s1636 = sand.u32 %s155, 1
        %s1637 = scalar_lea.sflag [#allocation7], %s1636
        %s1638 = sand.u32 %s155, 1
        %s1639 = smul.addr %s1638, 8
        %s1640 = scalar_lea.vmem [#allocation11], %s1639
        // Predicated region
        $region57: #{tpu_custom_call.1} parent=39 // pred_check
          %p1641 = pneg %p165
        $region58: #{tpu_custom_call.1} parent=39 // pred_check_branch
          %1643 = sbr.rel (%p1641) target = $region60
        $region59: #{tpu_custom_call.1} parent=39 // pred_region
          %s1645 = ssub.s32 128, 128
          %1646 = vsyncadd %s1637, %s1645
          %s1647 = sadd.s32 %s28, %s27
          %s1648 = smul.addr %s1647, 128
          %s1649 = scalar_lea.hbm %s5, %s1648
          %s1651 = sshll.u32 %s1640, 4
          %s1652 = int_to_ptr.vmem [resolvable:$true] %s1651
          %1654 = dma.vmem_to_hbm [thread:$0]  %s1652, 128, %s1649, %s1637
        $region60: #{tpu_custom_call.1} parent=39 // pred_fallthru
          _
      $region40: #{tpu_custom_call.1} parent=5 // pred_fallthru
        _
      %p1655 = scmp.le.s32.totalorder 2, %s18
      // Predicated region
      $region61: #{tpu_custom_call.1} parent=5 // pred_check
        %p1656 = pneg %p1655
      $region62: #{tpu_custom_call.1} parent=5 // pred_check_branch
        %1658 = sbr.rel (%p1656) target = $region64
      $region63: #{tpu_custom_call.1} parent=5 // pred_region
        %s1659 = ssub.s32 %s18, 2
        // Predicated region
        $region65: #{tpu_custom_call.1} parent=63 // pred_check
          %p1660 = pneg %p171
        $region66: #{tpu_custom_call.1} parent=63 // pred_check_branch
          %1662 = sbr.rel (%p1660) target = $region68
        $region67: #{tpu_custom_call.1} parent=63 // pred_region
          %s1663 = sand.u32 %s156, 1
          %s1664 = scalar_lea.sflag [#allocation7], %s1663
          %s1665 = sand.u32 %s156, 1
          %s1666 = smul.addr %s1665, 8
          %s1667 = scalar_lea.vmem [#allocation11], %s1666
          %1668 = dma.done %s1664, 128
        $region68: #{tpu_custom_call.1} parent=63 // pred_fallthru
          _
      $region64: #{tpu_custom_call.1} parent=5 // pred_fallthru
        _
    $region6: #{tpu_custom_call.1} parent=1 // loop_footer
      %s22 = sadd.s32 1, %s18
    $region7: #{tpu_custom_call.1} parent=1 // loop_footer_branch
      %17 = sbr.rel target = $region3
    $region8: #{tpu_custom_call.1} parent=1 // loop_exit
      _
    %1669 = vsyncpa [#allocation6], 1
    %s1670 = scalar_lea.sflag [#allocation6], 1
    %1671 = vsyncpa %s1670, 1
    %1672 = vsyncpa [#allocation9], 1
    %1673 = vsyncpa [#allocation7], 1
    %s1674 = scalar_lea.sflag [#allocation7], 1
    %1675 = vsyncpa %s1674, 1

// kernel: tpu_custom_call.1
$region0: #{tpu_custom_call.1}
  #allocation0 [shape = 'u32[]', space=smem, size = 0x4, offset = 0x4, fixed_abs, tag = 'smem constant byte address 0x4 - core index']
  #allocation1 [shape = 'u32[144,128]{1,0:T(1,128)}', space=vmem, size = 0x12000, scoped, tag = 'internal scratch']
  #allocation2 [shape = 'bf16[4,8,8]{2,1,0:T(8,128)(2,1)}', space=vmem, size = 0x2000, scoped, tag = 'scratch operand']
  #allocation3 [shape = 'bf16[1,4,8,8]{3,2,1,0:T(8,128)(2,1)}', space=vmem, size = 0x2000, scoped, tag = 'scratch operand']
  #allocation4 [shape = 'bf16[1,4,8,8]{3,2,1,0:T(8,128)(2,1)}', space=vmem, size = 0x2000, scoped, tag = 'scratch operand']
  %s0 = inlined_call_operand.hbm [shape: bf16[2,8,32], index: 0, kind: input, shape index: {}]
  %s1 = inlined_call_operand.hbm [shape: bf16[32,96], index: 1, kind: input, shape index: {}]
  %s2 = inlined_call_operand.vmem [shape: f32[1,96], index: 2, kind: input, shape index: {}]
  %s3 = inlined_call_operand.hbm [shape: bf16[32,32], index: 3, kind: input, shape index: {}]
  %s4 = inlined_call_operand.vmem [shape: f32[1,32], index: 4, kind: input, shape index: {}]
  %s5 = inlined_call_operand.hbm [shape: f32[2,8,32], index: 5, kind: output, shape index: {}]
  %s6 = sld [smem:[#allocation0]]
  $region69: #{tpu_custom_call.1} parent=0
    _
  %s8 = ssub.s32 1, %s6
  %s9 = scalar_select 0, %s8, %s6
  $region1: #{tpu_custom_call.1} parent=0
    #allocation5 [shape = 'u8[4096]{0}', space=vmem, size = 0x1000, scoped, tag = 'input window, operand 0']
    #allocation6 [shape = 's32[2]{0}', space=sflag, size = 0x8, scoped, tag = 'scoped memory for tpu_custom_call.1']
    #allocation7 [shape = 's32[2]{0}', space=sflag, size = 0x8, scoped, tag = 'scoped memory for tpu_custom_call.1']
    #allocation8 [shape = 'u8[8192]{0}', space=vmem, size = 0x2000, scoped, tag = 'input window, operand 1, single buffered']
    #allocation9 [shape = 's32[1]{0}', space=sflag, size = 0x4, scoped, tag = 'scoped memory for tpu_custom_call.1']
    #allocation10 [shape = 'u8[8192]{0}', space=vmem, size = 0x2000, scoped, tag = 'input window, operand 3, single buffered']
    #allocation11 [shape = 'u8[8192]{0}', space=vmem, size = 0x2000, scoped, tag = 'output window, operand 0']
    %10 = vsyncpa [#allocation6], 0
    %s11 = scalar_lea.sflag [#allocation6], 1
    %12 = vsyncpa %s11, 0
    %13 = vsyncpa [#allocation9], 0
    %14 = vsyncpa [#allocation7], 0
    %s15 = scalar_lea.sflag [#allocation7], 1
    %16 = vsyncpa %s15, 0
    loop: start=0, step=1, limit=4
    $region2: #{tpu_custom_call.1} parent=1 // loop_pre_header
      _
    $region3: #{tpu_custom_call.1} parent=1 // loop_header
      %s18 = sphi 0, %s22
      %p19 = scmp.ge.s32.totalorder %s18, 4
      %s25 = sphi 0, %s37
      %s26 = sphi 0, %s33
      %s27 = sphi 0, %s25
      %s28 = sphi 0, %s26
      %s29 = sphi 0, %s27
      %s30 = sphi 0, %s28
      %s40 = sphi 0, %s42
      %s43 = sphi 0, %s40
      %s44 = sphi 0, %s43
      %s60 = sphi 0, %s44
      %s64 = sphi 0, %s64
      %s66 = sphi 0, %s64
      %s67 = sphi 0, %s66
      %s81 = sphi 0, %s67
      %s85 = sphi 0, %s85
      %s87 = sphi 0, %s85
      %s88 = sphi 0, %s87
      %s102 = sphi 0, %s88
      %s106 = sphi 0, %s106
      %s108 = sphi 0, %s106
      %s109 = sphi 0, %s108
      %s123 = sphi 0, %s109
      %s127 = sphi 0, %s127
      %s129 = sphi 0, %s127
      %s130 = sphi 0, %s129
      %s144 = sphi 0, %s130
      %s152 = sphi 0, %s154
      %s155 = sphi 0, %s152
      %s156 = sphi 0, %s155
      %s172 = sphi 0, %s156
    $region4: #{tpu_custom_call.1} parent=1 // loop_header_branch
      %21 = sbr.rel (%p19) target = $region8
    $region5: #{tpu_custom_call.1} parent=1 // loop_body
      %s23 = ssub.s32 %s18, 1
      %s24 = ssub.s32 %s18, 2
      %s31 = sadd.s32 1, %s26
      %p32 = scmp.ge.s32.totalorder %s31, 1
      %s33 = scalar_select %p32, 0, %s31
      %s34 = sadd.s32 1, %s25
      %s35 = scalar_select %p32, %s34, %s25
      %p36 = scmp.ge.s32.totalorder %s35, 2
      %s37 = scalar_select %p36, 0, %s35
      %s38 = ssub.s32 %s25, %s37
      %p39 = scmp.eq.s32.totalorder %s38, 0
      %s41 = sadd.s32 %s40, 1
      %s42 = scalar_select %p39, %s40, %s41
      %p45 = pneg %p39
      %p46 = scmp.eq.s32.totalorder %s18, 1
      %p47 = por %p45, %p46
      %p48 = scmp.ne.s32.totalorder %s40, %s43
      %p49 = scmp.eq.s32.totalorder %s18, 0
      %p50 = por %p48, %p49
      %p51 = scmp.ne.s32.totalorder %s40, %s43
      %p52 = scmp.eq.s32.totalorder %s23, 1
      %p53 = por %p51, %p52
      %p54 = scmp.ne.s32.totalorder %s43, %s44
      %p55 = scmp.eq.s32.totalorder %s23, 0
      %p56 = por %p54, %p55
      %p57 = scmp.ne.s32.totalorder %s43, %s44
      %p58 = scmp.eq.s32.totalorder %s24, 1
      %p59 = por %p57, %p58
      %p61 = scmp.ne.s32.totalorder %s44, %s60
      %p62 = scmp.eq.s32.totalorder %s24, 0
      %p63 = por %p61, %p62
      %s65 = sadd.s32 %s64, 1
      %p68 = scmp.eq.s32.totalorder %s18, 1
      %p69 = scmp.ne.s32.totalorder %s64, %s66
      %p70 = scmp.eq.s32.totalorder %s18, 0
      %p71 = por %p69, %p70
      %p72 = scmp.ne.s32.totalorder %s64, %s66
      %p73 = scmp.eq.s32.totalorder %s23, 1
      %p74 = por %p72, %p73
      %p75 = scmp.ne.s32.totalorder %s66, %s67
      %p76 = scmp.eq.s32.totalorder %s23, 0
      %p77 = por %p75, %p76
      %p78 = scmp.ne.s32.totalorder %s66, %s67
      %p79 = scmp.eq.s32.totalorder %s24, 1
      %p80 = por %p78, %p79
      %p82 = scmp.ne.s32.totalorder %s67, %s81
      %p83 = scmp.eq.s32.totalorder %s24, 0
      %p84 = por %p82, %p83
      %s86 = sadd.s32 %s85, 1
      %p89 = scmp.eq.s32.totalorder %s18, 1
      %p90 = scmp.ne.s32.totalorder %s85, %s87
      %p91 = scmp.eq.s32.totalorder %s18, 0
      %p92 = por %p90, %p91
      %p93 = scmp.ne.s32.totalorder %s85, %s87
      %p94 = scmp.eq.s32.totalorder %s23, 1
      %p95 = por %p93, %p94
      %p96 = scmp.ne.s32.totalorder %s87, %s88
      %p97 = scmp.eq.s32.totalorder %s23, 0
      %p98 = por %p96, %p97
      %p99 = scmp.ne.s32.totalorder %s87, %s88
      %p100 = scmp.eq.s32.totalorder %s24, 1
      %p101 = por %p99, %p100
      %p103 = scmp.ne.s32.totalorder %s88, %s102
      %p104 = scmp.eq.s32.totalorder %s24, 0
      %p105 = por %p103, %p104
      %s107 = sadd.s32 %s106, 1
      %p110 = scmp.eq.s32.totalorder %s18, 1
      %p111 = scmp.ne.s32.totalorder %s106, %s108
      %p112 = scmp.eq.s32.totalorder %s18, 0
      %p113 = por %p111, %p112
      %p114 = scmp.ne.s32.totalorder %s106, %s108
      %p115 = scmp.eq.s32.totalorder %s23, 1
      %p116 = por %p114, %p115
      %p117 = scmp.ne.s32.totalorder %s108, %s109
      %p118 = scmp.eq.s32.totalorder %s23, 0
      %p119 = por %p117, %p118
      %p120 = scmp.ne.s32.totalorder %s108, %s109
      %p121 = scmp.eq.s32.totalorder %s24, 1
      %p122 = por %p120, %p121
      %p124 = scmp.ne.s32.totalorder %s109, %s123
      %p125 = scmp.eq.s32.totalorder %s24, 0
      %p126 = por %p124, %p125
      %s128 = sadd.s32 %s127, 1
      %p131 = scmp.eq.s32.totalorder %s18, 1
      %p132 = scmp.ne.s32.totalorder %s127, %s129
      %p133 = scmp.eq.s32.totalorder %s18, 0
      %p134 = por %p132, %p133
      %p135 = scmp.ne.s32.totalorder %s127, %s129
      %p136 = scmp.eq.s32.totalorder %s23, 1
      %p137 = por %p135, %p136
      %p138 = scmp.ne.s32.totalorder %s129, %s130
      %p139 = scmp.eq.s32.totalorder %s23, 0
      %p140 = por %p138, %p139
      %p141 = scmp.ne.s32.totalorder %s129, %s130
      %p142 = scmp.eq.s32.totalorder %s24, 1
      %p143 = por %p141, %p142
      %p145 = scmp.ne.s32.totalorder %s130, %s144
      %p146 = scmp.eq.s32.totalorder %s24, 0
      %p147 = por %p145, %p146
      %s148 = ssub.s32 %s25, %s37
      %s149 = ssub.s32 %s26, %s33
      %s150 = sor.u32 %s148, %s149
      %p151 = scmp.eq.s32.totalorder %s150, 0
      %s153 = sadd.s32 %s152, 1
      %s154 = scalar_select %p151, %s152, %s153
      %p157 = pneg %p151
      %p158 = scmp.eq.s32.totalorder %s18, 1
      %p159 = por %p157, %p158
      %p160 = scmp.ne.s32.totalorder %s152, %s155
      %p161 = scmp.eq.s32.totalorder %s18, 0
      %p162 = por %p160, %p161
      %p163 = scmp.ne.s32.totalorder %s152, %s155
      %p164 = scmp.eq.s32.totalorder %s23, 1
      %p165 = por %p163, %p164
      %p166 = scmp.ne.s32.totalorder %s155, %s156
      %p167 = scmp.eq.s32.totalorder %s23, 0
      %p168 = por %p166, %p167
      %p169 = scmp.ne.s32.totalorder %s155, %s156
      %p170 = scmp.eq.s32.totalorder %s24, 1
      %p171 = por %p169, %p170
      %p173 = scmp.ne.s32.totalorder %s156, %s172
      %p174 = scmp.eq.s32.totalorder %s24, 0
      %p175 = por %p173, %p174
      %p176 = scmp.le.s32.totalorder 1, %s18
      %p177 = scmp.lt.s32.totalorder %s18, 3
      %p178 = pnand %p176, %p177
      %p179 = pneg %p178
      // Predicated region
      $region9: #{tpu_custom_call.1} parent=5 // pred_check
        _
      $region10: #{tpu_custom_call.1} parent=5 // pred_check_branch
        %181 = sbr.rel (%p178) target = $region12
      $region11: #{tpu_custom_call.1} parent=5 // pred_region
        %s182 = ssub.s32 %s18, 1
        // Predicated region
        $region13: #{tpu_custom_call.1} parent=11 // pred_check
          %p183 = pneg %p77
        $region14: #{tpu_custom_call.1} parent=11 // pred_check_branch
          %185 = sbr.rel (%p183) target = $region16
        $region15: #{tpu_custom_call.1} parent=11 // pred_region
          %s187 = ssub.s32 256, 256
          %188 = vsyncadd [#allocation9], %s187
          %s189 = sshll.u32 [#allocation8], 4
          %s190 = int_to_ptr.vmem [resolvable:$true] %s189
          %195 = dma.hbm_to_vmem [thread:$0]  %s1, 256, %s190, [#allocation9], 64, 64, 4
        $region16: #{tpu_custom_call.1} parent=11 // pred_fallthru
          _
        // Predicated region
        $region17: #{tpu_custom_call.1} parent=11 // pred_check
          %p196 = pneg %p98
        $region18: #{tpu_custom_call.1} parent=11 // pred_check_branch
          %198 = sbr.rel (%p196) target = $region20
        $region19: #{tpu_custom_call.1} parent=11 // pred_region
          _
        $region20: #{tpu_custom_call.1} parent=11 // pred_fallthru
          _
        // Predicated region
        $region21: #{tpu_custom_call.1} parent=11 // pred_check
          %p199 = pneg %p119
        $region22: #{tpu_custom_call.1} parent=11 // pred_check_branch
          %201 = sbr.rel (%p199) target = $region24
        $region23: #{tpu_custom_call.1} parent=11 // pred_region
          %s203 = ssub.s32 256, 256
          %204 = vsyncadd [#allocation9], %s203
          %s205 = sshll.u32 [#allocation10], 4
          %s206 = int_to_ptr.vmem [resolvable:$true] %s205
          %211 = dma.hbm_to_vmem [thread:$0]  %s3, 256, %s206, [#allocation9], 64, 64, 4
        $region24: #{tpu_custom_call.1} parent=11 // pred_fallthru
          _
        // Predicated region
        $region25: #{tpu_custom_call.1} parent=11 // pred_check
          %p212 = pneg %p140
        $region26: #{tpu_custom_call.1} parent=11 // pred_check_branch
          %214 = sbr.rel (%p212) target = $region28
        $region27: #{tpu_custom_call.1} parent=11 // pred_region
          _
        $region28: #{tpu_custom_call.1} parent=11 // pred_fallthru
          _
      $region12: #{tpu_custom_call.1} parent=5 // pred_fallthru
        _
      %p215 = scmp.lt.s32.totalorder %s18, 2
      // Predicated region
      $region29: #{tpu_custom_call.1} parent=5 // pred_check
        %p216 = pneg %p215
      $region30: #{tpu_custom_call.1} parent=5 // pred_check_branch
        %218 = sbr.rel (%p216) target = $region32
      $region31: #{tpu_custom_call.1} parent=5 // pred_region
        // Predicated region
        $region33: #{tpu_custom_call.1} parent=31 // pred_check
          %p219 = pneg %p50
        $region34: #{tpu_custom_call.1} parent=31 // pred_check_branch
          %221 = sbr.rel (%p219) target = $region36
        $region35: #{tpu_custom_call.1} parent=31 // pred_region
          %s222 = sand.u32 %s40, 1
          %s223 = scalar_lea.sflag [#allocation6], %s222
          %s224 = sand.u32 %s40, 1
          %s225 = smul.addr %s224, 4
          %s226 = scalar_lea.vmem [#allocation5], %s225
          %s228 = ssub.s32 64, 64
          %229 = vsyncadd %s223, %s228
          %s230 = smul.addr %s25, 64
          %s231 = scalar_lea.hbm %s0, %s230
          %s233 = sshll.u32 %s226, 4
          %s234 = int_to_ptr.vmem [resolvable:$true] %s233
          %236 = dma.hbm_to_vmem [thread:$0]  %s231, 64, %s234, %s223
        $region36: #{tpu_custom_call.1} parent=31 // pred_fallthru
          _
      $region32: #{tpu_custom_call.1} parent=5 // pred_fallthru
        _
      %p237 = scmp.le.s32.totalorder 1, %s18
      %p238 = scmp.lt.s32.totalorder %s18, 3
      %p239 = pnand %p237, %p238
      %p240 = pneg %p239
      // Predicated region
      $region37: #{tpu_custom_call.1} parent=5 // pred_check
        _
      $region38: #{tpu_custom_call.1} parent=5 // pred_check_branch
        %242 = sbr.rel (%p239) target = $region40
      $region39: #{tpu_custom_call.1} parent=5 // pred_region
        %s243 = ssub.s32 %s18, 1
        %s244 = sand.u32 %s43, 1
        %s245 = scalar_lea.sflag [#allocation6], %s244
        %s246 = sand.u32 %s43, 1
        %s247 = smul.addr %s246, 4
        %s248 = scalar_lea.vmem [#allocation5], %s247
        // Predicated region
        $region41: #{tpu_custom_call.1} parent=39 // pred_check
          %p249 = pneg %p56
        $region42: #{tpu_custom_call.1} parent=39 // pred_check_branch
          %251 = sbr.rel (%p249) target = $region44
        $region43: #{tpu_custom_call.1} parent=39 // pred_region
          %252 = dma.done %s245, 64
        $region44: #{tpu_custom_call.1} parent=39 // pred_fallthru
          _
        // Predicated region
        $region45: #{tpu_custom_call.1} parent=39 // pred_check
          %p253 = pneg %p77
        $region46: #{tpu_custom_call.1} parent=39 // pred_check_branch
          %255 = sbr.rel (%p253) target = $region48
        $region47: #{tpu_custom_call.1} parent=39 // pred_region
          %256 = dma.done [#allocation9], 256
        $region48: #{tpu_custom_call.1} parent=39 // pred_fallthru
          _
        // Predicated region
        $region49: #{tpu_custom_call.1} parent=39 // pred_check
          %p257 = pneg %p119
        $region50: #{tpu_custom_call.1} parent=39 // pred_check_branch
          %259 = sbr.rel (%p257) target = $region52
        $region51: #{tpu_custom_call.1} parent=39 // pred_region
          %260 = dma.done [#allocation9], 256
        $region52: #{tpu_custom_call.1} parent=39 // pred_fallthru
          _
        %s261 = sand.u32 %s43, 1
        %s262 = scalar_lea.sflag [#allocation6], %s261
        %s263 = sand.u32 %s43, 1
        %s264 = smul.addr %s263, 4
        %s265 = scalar_lea.vmem [#allocation5], %s264
        %p266 = pneg %p56
        %p267 = pneg %p53
        %p268 = pneg %p77
        %p269 = pneg %p74
        %p270 = pneg %p98
        %p271 = pneg %p95
        %p272 = pneg %p119
        %p273 = pneg %p116
        %p274 = pneg %p140
        %p275 = pneg %p137
        %p276 = pneg %p168
        %p277 = pneg %p165
        %s278 = sand.u32 %s155, 1
        %s279 = scalar_lea.sflag [#allocation7], %s278
        %s280 = sand.u32 %s155, 1
        %s281 = smul.addr %s280, 8
        %s282 = scalar_lea.vmem [#allocation11], %s281
        %p284 = scmp.eq.s32.totalorder %s28, 0
        // Predicated region
        $region53: #{tpu_custom_call.1} parent=39 // pred_check
          %p285 = pneg %p284
        $region54: #{tpu_custom_call.1} parent=39 // pred_check_branch
          %287 = sbr.rel (%p285) target = $region56
        $region55: #{tpu_custom_call.1} parent=39 // pred_region
          %v288 = vld [vmem:[%s248] sm:$0xf]
          %v289 = vld [vmem:[#allocation8] sm:$0xf]
          %v290 = vld [vmem:[#allocation8 + $0x4] sm:$0xf]
          %v291 = vld [vmem:[#allocation8 + $0x8] sm:$0xf]
          %v292 = vld [vmem:[#allocation8 + $0xc] sm:$0xf]
          %v293 = vld [vmem:[%s2] sm:$0x1]
          %v295 = vlaneseq
          %v296 = vshrl.u32 %v295, 7
          %v297 = vsub.s32 0, %v296
          %v298 = vrot.slane %v293, %v297
          %v304 = vunpack.c.l.b16 %v289
          %v305 = vunpack.c.l.b16 %v290
          %v306 = vunpack.c.l.b16 %v291
          %v307 = vunpack.c.l.b16 %v292
          %v308 = vpack.c.b16 %v305, %v304
          %v309 = vpack.c.b16 %v307, %v306
          %vm312 = vcmask 261120
          %v314 = vsel %vm312, %v288, 0
          %316 = vmatprep.subr.bf16.mxu0 0
          %317 = vmatpush1.bf16.msra.mxu0 %v308
          %318 = vmatprep.subr.bf16.mxu0 0
          %319 = vmatpush1.bf16.msra.mxu0 %v309
          %320 = vmatprep.subr.bf16.mxu0 0
          %321 = vmatpush1.bf16.msra.mxu0 0
          %322 = vmatprep.subr.bf16.mxu0 0
          %323 = vmatpush1.bf16.msra.mxu0 0
          %324 = vmatprep.subr.bf16.mxu0 0
          %325 = vmatpush1.bf16.msra.mxu0 0
          %326 = vmatprep.subr.bf16.mxu0 0
          %327 = vmatpush1.bf16.msra.mxu0 0
          %328 = vmatprep.subr.bf16.mxu0 0
          %329 = vmatpush1.bf16.msra.mxu0 0
          %330 = vmatprep.subr.bf16.mxu0 0
          %331 = vmatpush1.bf16.msra.mxu0 0
          %332 = vmatprep.subr.bf16.mxu0 0
          %333 = vmatpush1.bf16.msra.mxu0 0
          %334 = vmatprep.subr.bf16.mxu0 0
          %335 = vmatpush1.bf16.msra.mxu0 0
          %336 = vmatprep.subr.bf16.mxu0 0
          %337 = vmatpush1.bf16.msra.mxu0 0
          %338 = vmatprep.subr.bf16.mxu0 0
          %339 = vmatpush1.bf16.msra.mxu0 0
          %340 = vmatprep.subr.bf16.mxu0 0
          %341 = vmatpush1.bf16.msra.mxu0 0
          %342 = vmatprep.subr.bf16.mxu0 0
          %343 = vmatpush1.bf16.msra.mxu0 0
          %344 = vmatprep.subr.bf16.mxu0 0
          %345 = vmatpush1.bf16.msra.mxu0 0
          %346 = vmatprep.subr.bf16.mxu0 0
          %347 = vmatpush1.bf16.msra.mxu0 0
          %348 = vmatprep.mubr.bf16.mxu0 0
          %349 = vmatmul.mubr.bf16.gmra.mrb[0].mxu0 %v314
          %v350 = vpop.f32.mrb[0].mxu0
          %v351 = vadd.f32 %v298, %v350
          %v352 = vpop.f32.mrb[0].mxu0
          %v353 = vpop.f32.mrb[0].mxu0
          %v354 = vpop.f32.mrb[0].mxu0
          %355 = vdwg.mxu0
          %357 = vrot.lane.b32.xlu0 %v351, 120
          %v358 = vpop.permute.xlu0 %357
          %360 = vrot.lane.b32.xlu0 %v351, 112
          %v361 = vpop.permute.xlu0 %360
          %363 = vrot.lane.b32.xlu0 %v351, 104
          %v364 = vpop.permute.xlu0 %363
          %366 = vrot.lane.b32.xlu0 %v351, 96
          %v367 = vpop.permute.xlu0 %366
          %369 = vrot.lane.b32.xlu0 %v351, 88
          %v370 = vpop.permute.xlu0 %369
          %372 = vrot.lane.b32.xlu0 %v351, 80
          %v373 = vpop.permute.xlu0 %372
          %375 = vrot.lane.b32.xlu0 %v351, 72
          %v376 = vpop.permute.xlu0 %375
          %378 = vrot.lane.b32.xlu0 %v351, 64
          %v379 = vpop.permute.xlu0 %378
          %381 = vrot.lane.b32.xlu0 %v351, 56
          %v382 = vpop.permute.xlu0 %381
          %384 = vrot.lane.b32.xlu0 %v351, 48
          %v385 = vpop.permute.xlu0 %384
          %387 = vrot.lane.b32.xlu0 %v351, 40
          %v388 = vpop.permute.xlu0 %387
          %v390 = vcombine.low %v351, %v361
          %v391 = vcombine.high %v351, %v361
          %v393 = vunpack.c.l.s4 1983009808
          %v394 = vunpack.c.0.s8 %v393
          %v395 = vlaneseq
          %v396 = vshrl.u32 %v395, 7
          %v397 = vsub.s32 %v394, %v396
          %v398 = vrot.slane %v390, %v397
          %v400 = vunpack.c.l.s4 1983009808
          %v401 = vunpack.c.0.s8 %v400
          %v402 = vlaneseq
          %v403 = vshrl.u32 %v402, 7
          %v404 = vsub.s32 %v401, %v403
          %v405 = vrot.slane %v391, %v404
          %v406 = vcombine.low %v358, %v364
          %v407 = vcombine.high %v358, %v364
          %v409 = vunpack.c.l.s4 1983009808
          %v410 = vunpack.c.0.s8 %v409
          %v411 = vlaneseq
          %v412 = vshrl.u32 %v411, 7
          %v413 = vsub.s32 %v410, %v412
          %v414 = vrot.slane %v406, %v413
          %v416 = vunpack.c.l.s4 1983009808
          %v417 = vunpack.c.0.s8 %v416
          %v418 = vlaneseq
          %v419 = vshrl.u32 %v418, 7
          %v420 = vsub.s32 %v417, %v419
          %v421 = vrot.slane %v407, %v420
          %v422 = vcombine.low %v367, %v373
          %v423 = vcombine.high %v367, %v373
          %v425 = vunpack.c.l.s4 1983009808
          %v426 = vunpack.c.0.s8 %v425
          %v427 = vlaneseq
          %v428 = vshrl.u32 %v427, 7
          %v429 = vsub.s32 %v426, %v428
          %v430 = vrot.slane %v422, %v429
          %v432 = vunpack.c.l.s4 1983009808
          %v433 = vunpack.c.0.s8 %v432
          %v434 = vlaneseq
          %v435 = vshrl.u32 %v434, 7
          %v436 = vsub.s32 %v433, %v435
          %v437 = vrot.slane %v423, %v436
          %v438 = vcombine.low %v370, %v376
          %v439 = vcombine.high %v370, %v376
          %v441 = vunpack.c.l.s4 1983009808
          %v442 = vunpack.c.0.s8 %v441
          %v443 = vlaneseq
          %v444 = vshrl.u32 %v443, 7
          %v445 = vsub.s32 %v442, %v444
          %v446 = vrot.slane %v438, %v445
          %v448 = vunpack.c.l.s4 1983009808
          %v449 = vunpack.c.0.s8 %v448
          %v450 = vlaneseq
          %v451 = vshrl.u32 %v450, 7
          %v452 = vsub.s32 %v449, %v451
          %v453 = vrot.slane %v439, %v452
          %v454 = vcombine.low %v398, %v414
          %v455 = vcombine.high %v398, %v414
          %v457 = vunpack.c.l.s4 1934713408
          %v458 = vunpack.c.0.s8 %v457
          %v459 = vlaneseq
          %v460 = vshrl.u32 %v459, 7
          %v461 = vsub.s32 %v458, %v460
          %v462 = vrot.slane %v454, %v461
          %v464 = vunpack.c.l.s4 1934713408
          %v465 = vunpack.c.0.s8 %v464
          %v466 = vlaneseq
          %v467 = vshrl.u32 %v466, 7
          %v468 = vsub.s32 %v465, %v467
          %v469 = vrot.slane %v455, %v468
          %v470 = vcombine.low %v405, %v421
          %v471 = vcombine.high %v405, %v421
          %v473 = vunpack.c.l.s4 1934713408
          %v474 = vunpack.c.0.s8 %v473
          %v475 = vlaneseq
          %v476 = vshrl.u32 %v475, 7
          %v477 = vsub.s32 %v474, %v476
          %v478 = vrot.slane %v470, %v477
          %v480 = vunpack.c.l.s4 1934713408
          %v481 = vunpack.c.0.s8 %v480
          %v482 = vlaneseq
          %v483 = vshrl.u32 %v482, 7
          %v484 = vsub.s32 %v481, %v483
          %v485 = vrot.slane %v471, %v484
          %v486 = vcombine.low %v430, %v446
          %v487 = vcombine.high %v430, %v446
          %v489 = vunpack.c.l.s4 1934713408
          %v490 = vunpack.c.0.s8 %v489
          %v491 = vlaneseq
          %v492 = vshrl.u32 %v491, 7
          %v493 = vsub.s32 %v490, %v492
          %v494 = vrot.slane %v486, %v493
          %v496 = vunpack.c.l.s4 1934713408
          %v497 = vunpack.c.0.s8 %v496
          %v498 = vlaneseq
          %v499 = vshrl.u32 %v498, 7
          %v500 = vsub.s32 %v497, %v499
          %v501 = vrot.slane %v487, %v500
          %v502 = vcombine.low %v437, %v453
          %v503 = vcombine.high %v437, %v453
          %v505 = vunpack.c.l.s4 1934713408
          %v506 = vunpack.c.0.s8 %v505
          %v507 = vlaneseq
          %v508 = vshrl.u32 %v507, 7
          %v509 = vsub.s32 %v506, %v508
          %v510 = vrot.slane %v502, %v509
          %v512 = vunpack.c.l.s4 1934713408
          %v513 = vunpack.c.0.s8 %v512
          %v514 = vlaneseq
          %v515 = vshrl.u32 %v514, 7
          %v516 = vsub.s32 %v513, %v515
          %v517 = vrot.slane %v503, %v516
          %v518 = vcombine.low %v462, %v494
          %v519 = vcombine.high %v462, %v494
          %v520 = vcombine.low %v469, %v501
          %v521 = vcombine.high %v469, %v501
          %v522 = vcombine.low %v478, %v510
          %v523 = vcombine.high %v478, %v510
          %v524 = vcombine.low %v485, %v517
          %v525 = vcombine.high %v485, %v517
          %v526 = vcombine.low %v379, %v385
          %v527 = vcombine.high %v379, %v385
          %v529 = vunpack.c.l.s4 1983009808
          %v530 = vunpack.c.0.s8 %v529
          %v531 = vlaneseq
          %v532 = vshrl.u32 %v531, 7
          %v533 = vsub.s32 %v530, %v532
          %v534 = vrot.slane %v526, %v533
          %v536 = vunpack.c.l.s4 1983009808
          %v537 = vunpack.c.0.s8 %v536
          %v538 = vlaneseq
          %v539 = vshrl.u32 %v538, 7
          %v540 = vsub.s32 %v537, %v539
          %v541 = vrot.slane %v527, %v540
          %v542 = vcombine.low %v382, %v388
          %v543 = vcombine.high %v382, %v388
          %v545 = vunpack.c.l.s4 1983009808
          %v546 = vunpack.c.0.s8 %v545
          %v547 = vlaneseq
          %v548 = vshrl.u32 %v547, 7
          %v549 = vsub.s32 %v546, %v548
          %v550 = vrot.slane %v542, %v549
          %v552 = vunpack.c.l.s4 1983009808
          %v553 = vunpack.c.0.s8 %v552
          %v554 = vlaneseq
          %v555 = vshrl.u32 %v554, 7
          %v556 = vsub.s32 %v553, %v555
          %v557 = vrot.slane %v543, %v556
          %v558 = vcombine.low %v534, %v550
          %v559 = vcombine.high %v534, %v550
          %v561 = vunpack.c.l.s4 1934713408
          %v562 = vunpack.c.0.s8 %v561
          %v563 = vlaneseq
          %v564 = vshrl.u32 %v563, 7
          %v565 = vsub.s32 %v562, %v564
          %v566 = vrot.slane %v558, %v565
          %v568 = vunpack.c.l.s4 1934713408
          %v569 = vunpack.c.0.s8 %v568
          %v570 = vlaneseq
          %v571 = vshrl.u32 %v570, 7
          %v572 = vsub.s32 %v569, %v571
          %v573 = vrot.slane %v559, %v572
          %v574 = vcombine.low %v541, %v557
          %v575 = vcombine.high %v541, %v557
          %v577 = vunpack.c.l.s4 1934713408
          %v578 = vunpack.c.0.s8 %v577
          %v579 = vlaneseq
          %v580 = vshrl.u32 %v579, 7
          %v581 = vsub.s32 %v578, %v580
          %v582 = vrot.slane %v574, %v581
          %v584 = vunpack.c.l.s4 1934713408
          %v585 = vunpack.c.0.s8 %v584
          %v586 = vlaneseq
          %v587 = vshrl.u32 %v586, 7
          %v588 = vsub.s32 %v585, %v587
          %v589 = vrot.slane %v575, %v588
          %v590 = vcombine.high %v566, 0.0
          %v591 = vcombine.high %v573, 0.0
          %v592 = vcombine.high %v582, 0.0
          %v593 = vcombine.high %v589, 0.0
          %v594 = vcombine.low %v518, %v520
          %v595 = vcombine.high %v518, %v520
          %v597 = vunpack.c.l.s4 1983009808
          %v598 = vunpack.c.0.s8 %v597
          %v599 = vlaneseq
          %v600 = vshrl.u32 %v599, 7
          %v601 = vsub.s32 %v598, %v600
          %v602 = vrot.slane %v594, %v601
          %v604 = vunpack.c.l.s4 1983009808
          %v605 = vunpack.c.0.s8 %v604
          %v606 = vlaneseq
          %v607 = vshrl.u32 %v606, 7
          %v608 = vsub.s32 %v605, %v607
          %v609 = vrot.slane %v595, %v608
          %v610 = vcombine.low %v519, %v521
          %v611 = vcombine.high %v519, %v521
          %v613 = vunpack.c.l.s4 1983009808
          %v614 = vunpack.c.0.s8 %v613
          %v615 = vlaneseq
          %v616 = vshrl.u32 %v615, 7
          %v617 = vsub.s32 %v614, %v616
          %v618 = vrot.slane %v610, %v617
          %v620 = vunpack.c.l.s4 1983009808
          %v621 = vunpack.c.0.s8 %v620
          %v622 = vlaneseq
          %v623 = vshrl.u32 %v622, 7
          %v624 = vsub.s32 %v621, %v623
          %v625 = vrot.slane %v611, %v624
          %v626 = vcombine.low %v522, %v524
          %v627 = vcombine.high %v522, %v524
          %v629 = vunpack.c.l.s4 1983009808
          %v630 = vunpack.c.0.s8 %v629
          %v631 = vlaneseq
          %v632 = vshrl.u32 %v631, 7
          %v633 = vsub.s32 %v630, %v632
          %v634 = vrot.slane %v626, %v633
          %v636 = vunpack.c.l.s4 1983009808
          %v637 = vunpack.c.0.s8 %v636
          %v638 = vlaneseq
          %v639 = vshrl.u32 %v638, 7
          %v640 = vsub.s32 %v637, %v639
          %v641 = vrot.slane %v627, %v640
          %v642 = vcombine.low %v523, %v525
          %v643 = vcombine.high %v523, %v525
          %v645 = vunpack.c.l.s4 1983009808
          %v646 = vunpack.c.0.s8 %v645
          %v647 = vlaneseq
          %v648 = vshrl.u32 %v647, 7
          %v649 = vsub.s32 %v646, %v648
          %v650 = vrot.slane %v642, %v649
          %v652 = vunpack.c.l.s4 1983009808
          %v653 = vunpack.c.0.s8 %v652
          %v654 = vlaneseq
          %v655 = vshrl.u32 %v654, 7
          %v656 = vsub.s32 %v653, %v655
          %v657 = vrot.slane %v643, %v656
          %v658 = vcombine.low %v602, %v618
          %v659 = vcombine.high %v602, %v618
          %v661 = vunpack.c.l.s4 1934713408
          %v662 = vunpack.c.0.s8 %v661
          %v663 = vlaneseq
          %v664 = vshrl.u32 %v663, 7
          %v665 = vsub.s32 %v662, %v664
          %v666 = vrot.slane %v658, %v665
          %v668 = vunpack.c.l.s4 1934713408
          %v669 = vunpack.c.0.s8 %v668
          %v670 = vlaneseq
          %v671 = vshrl.u32 %v670, 7
          %v672 = vsub.s32 %v669, %v671
          %v673 = vrot.slane %v659, %v672
          %v674 = vcombine.low %v609, %v625
          %v675 = vcombine.high %v609, %v625
          %v677 = vunpack.c.l.s4 1934713408
          %v678 = vunpack.c.0.s8 %v677
          %v679 = vlaneseq
          %v680 = vshrl.u32 %v679, 7
          %v681 = vsub.s32 %v678, %v680
          %v682 = vrot.slane %v674, %v681
          %v684 = vunpack.c.l.s4 1934713408
          %v685 = vunpack.c.0.s8 %v684
          %v686 = vlaneseq
          %v687 = vshrl.u32 %v686, 7
          %v688 = vsub.s32 %v685, %v687
          %v689 = vrot.slane %v675, %v688
          %v690 = vcombine.low %v634, %v650
          %v691 = vcombine.high %v634, %v650
          %v693 = vunpack.c.l.s4 1934713408
          %v694 = vunpack.c.0.s8 %v693
          %v695 = vlaneseq
          %v696 = vshrl.u32 %v695, 7
          %v697 = vsub.s32 %v694, %v696
          %v698 = vrot.slane %v690, %v697
          %v700 = vunpack.c.l.s4 1934713408
          %v701 = vunpack.c.0.s8 %v700
          %v702 = vlaneseq
          %v703 = vshrl.u32 %v702, 7
          %v704 = vsub.s32 %v701, %v703
          %v705 = vrot.slane %v691, %v704
          %v706 = vcombine.low %v641, %v657
          %v707 = vcombine.high %v641, %v657
          %v709 = vunpack.c.l.s4 1934713408
          %v710 = vunpack.c.0.s8 %v709
          %v711 = vlaneseq
          %v712 = vshrl.u32 %v711, 7
          %v713 = vsub.s32 %v710, %v712
          %v714 = vrot.slane %v706, %v713
          %v716 = vunpack.c.l.s4 1934713408
          %v717 = vunpack.c.0.s8 %v716
          %v718 = vlaneseq
          %v719 = vshrl.u32 %v718, 7
          %v720 = vsub.s32 %v717, %v719
          %v721 = vrot.slane %v707, %v720
          %v722 = vcombine.low %v666, %v698
          %v723 = vcombine.high %v666, %v698
          %v724 = vcombine.low %v673, %v705
          %v725 = vcombine.high %v673, %v705
          %v726 = vcombine.low %v682, %v714
          %v727 = vcombine.high %v682, %v714
          %v728 = vcombine.low %v689, %v721
          %v729 = vcombine.high %v689, %v721
          %v730 = vcombine.low %v566, %v573
          %v732 = vunpack.c.l.s4 1983009808
          %v733 = vunpack.c.0.s8 %v732
          %v734 = vlaneseq
          %v735 = vshrl.u32 %v734, 7
          %v736 = vsub.s32 %v733, %v735
          %v737 = vrot.slane %v730, %v736
          %v738 = vcombine.low %v590, %v591
          %v740 = vunpack.c.l.s4 1983009808
          %v741 = vunpack.c.0.s8 %v740
          %v742 = vlaneseq
          %v743 = vshrl.u32 %v742, 7
          %v744 = vsub.s32 %v741, %v743
          %v745 = vrot.slane %v738, %v744
          %v746 = vcombine.low %v582, %v589
          %v748 = vunpack.c.l.s4 1983009808
          %v749 = vunpack.c.0.s8 %v748
          %v750 = vlaneseq
          %v751 = vshrl.u32 %v750, 7
          %v752 = vsub.s32 %v749, %v751
          %v753 = vrot.slane %v746, %v752
          %v754 = vcombine.low %v592, %v593
          %v756 = vunpack.c.l.s4 1983009808
          %v757 = vunpack.c.0.s8 %v756
          %v758 = vlaneseq
          %v759 = vshrl.u32 %v758, 7
          %v760 = vsub.s32 %v757, %v759
          %v761 = vrot.slane %v754, %v760
          %v762 = vcombine.low %v737, %v745
          %v763 = vcombine.high %v737, %v745
          %v765 = vunpack.c.l.s4 1934713408
          %v766 = vunpack.c.0.s8 %v765
          %v767 = vlaneseq
          %v768 = vshrl.u32 %v767, 7
          %v769 = vsub.s32 %v766, %v768
          %v770 = vrot.slane %v762, %v769
          %v772 = vunpack.c.l.s4 1934713408
          %v773 = vunpack.c.0.s8 %v772
          %v774 = vlaneseq
          %v775 = vshrl.u32 %v774, 7
          %v776 = vsub.s32 %v773, %v775
          %v777 = vrot.slane %v763, %v776
          %v778 = vcombine.low %v753, %v761
          %v779 = vcombine.high %v753, %v761
          %v781 = vunpack.c.l.s4 1934713408
          %v782 = vunpack.c.0.s8 %v781
          %v783 = vlaneseq
          %v784 = vshrl.u32 %v783, 7
          %v785 = vsub.s32 %v782, %v784
          %v786 = vrot.slane %v778, %v785
          %v788 = vunpack.c.l.s4 1934713408
          %v789 = vunpack.c.0.s8 %v788
          %v790 = vlaneseq
          %v791 = vshrl.u32 %v790, 7
          %v792 = vsub.s32 %v789, %v791
          %v793 = vrot.slane %v779, %v792
          %v794 = vcombine.low %v770, %v786
          %v795 = vcombine.high %v770, %v786
          %v796 = vcombine.low %v777, %v793
          %v797 = vcombine.high %v777, %v793
          %v798 = vmul.f32 %v722, 0.17677669
          %v799 = vmul.f32 %v723, 0.17677669
          %v800 = vmul.f32 %v724, 0.17677669
          %v801 = vmul.f32 %v725, 0.17677669
          %v802 = vpack.c.bf16 %v798, %v798
          %v803 = vpack.c.bf16 %v799, %v799
          %v804 = vpack.c.bf16 %v800, %v800
          %v805 = vpack.c.bf16 %v801, %v801
          %vm806 = vcmask 60416
          %807 = vst.msk [vmem:[#allocation2] sm:$0xf] %vm806, %v802
          %808 = vst.msk [vmem:[#allocation2 + $0x4] sm:$0xf] %vm806, %v803
          %809 = vst.msk [vmem:[#allocation2 + $0x8] sm:$0xf] %vm806, %v804
          %810 = vst.msk [vmem:[#allocation2 + $0xc] sm:$0xf] %vm806, %v805
          %811 = vxpose.xlu0.b32.start [1/16] %v726, 128
          %812 = vxpose.xlu0.b32.cont [2/16] 0.0, 128
          %813 = vxpose.xlu0.b32.cont [3/16] 0.0, 128
          %814 = vxpose.xlu0.b32.cont [4/16] 0.0, 128
          %815 = vxpose.xlu0.b32.cont [5/16] 0.0, 128
          %816 = vxpose.xlu0.b32.cont [6/16] 0.0, 128
          %817 = vxpose.xlu0.b32.cont [7/16] 0.0, 128
          %818 = vxpose.xlu0.b32.cont [8/16] 0.0, 128
          %819 = vxpose.xlu0.b32.cont [9/16] 0.0, 128
          %820 = vxpose.xlu0.b32.cont [10/16] 0.0, 128
          %821 = vxpose.xlu0.b32.cont [11/16] 0.0, 128
          %822 = vxpose.xlu0.b32.cont [12/16] 0.0, 128
          %823 = vxpose.xlu0.b32.cont [13/16] 0.0, 128
          %824 = vxpose.xlu0.b32.cont [14/16] 0.0, 128
          %825 = vxpose.xlu0.b32.cont [15/16] 0.0, 128
          %826 = vxpose.xlu0.b32.end [16/16] 0.0, 128
          %v827 = vpop.trf.xlu0
          %v828 = vpop.trf.xlu0
          %v829 = vpop.trf.xlu0
          %v830 = vpop.trf.xlu0
          %v831 = vpop.trf.xlu0
          %v832 = vpop.trf.xlu0
          %v833 = vpop.trf.xlu0
          %v834 = vpop.trf.xlu0
          %v835 = vpop.trf.xlu0
          %v836 = vpop.trf.xlu0
          %v837 = vpop.trf.xlu0
          %v838 = vpop.trf.xlu0
          %v839 = vpop.trf.xlu0
          %v840 = vpop.trf.xlu0
          %v841 = vpop.trf.xlu0
          %v842 = vpop.trf.xlu0
          %843 = vxpose.xlu0.b32.start [1/16] %v727, 128
          %844 = vxpose.xlu0.b32.cont [2/16] 0.0, 128
          %845 = vxpose.xlu0.b32.cont [3/16] 0.0, 128
          %846 = vxpose.xlu0.b32.cont [4/16] 0.0, 128
          %847 = vxpose.xlu0.b32.cont [5/16] 0.0, 128
          %848 = vxpose.xlu0.b32.cont [6/16] 0.0, 128
          %849 = vxpose.xlu0.b32.cont [7/16] 0.0, 128
          %850 = vxpose.xlu0.b32.cont [8/16] 0.0, 128
          %851 = vxpose.xlu0.b32.cont [9/16] 0.0, 128
          %852 = vxpose.xlu0.b32.cont [10/16] 0.0, 128
          %853 = vxpose.xlu0.b32.cont [11/16] 0.0, 128
          %854 = vxpose.xlu0.b32.cont [12/16] 0.0, 128
          %855 = vxpose.xlu0.b32.cont [13/16] 0.0, 128
          %856 = vxpose.xlu0.b32.cont [14/16] 0.0, 128
          %857 = vxpose.xlu0.b32.cont [15/16] 0.0, 128
          %858 = vxpose.xlu0.b32.end [16/16] 0.0, 128
          %v859 = vpop.trf.xlu0
          %v860 = vpop.trf.xlu0
          %v861 = vpop.trf.xlu0
          %v862 = vpop.trf.xlu0
          %v863 = vpop.trf.xlu0
          %v864 = vpop.trf.xlu0
          %v865 = vpop.trf.xlu0
          %v866 = vpop.trf.xlu0
          %v867 = vpop.trf.xlu0
          %v868 = vpop.trf.xlu0
          %v869 = vpop.trf.xlu0
          %v870 = vpop.trf.xlu0
          %v871 = vpop.trf.xlu0
          %v872 = vpop.trf.xlu0
          %v873 = vpop.trf.xlu0
          %v874 = vpop.trf.xlu0
          %875 = vxpose.xlu0.b32.start [1/16] %v728, 128
          %876 = vxpose.xlu0.b32.cont [2/16] 0.0, 128
          %877 = vxpose.xlu0.b32.cont [3/16] 0.0, 128
          %878 = vxpose.xlu0.b32.cont [4/16] 0.0, 128
          %879 = vxpose.xlu0.b32.cont [5/16] 0.0, 128
          %880 = vxpose.xlu0.b32.cont [6/16] 0.0, 128
          %881 = vxpose.xlu0.b32.cont [7/16] 0.0, 128
          %882 = vxpose.xlu0.b32.cont [8/16] 0.0, 128
          %883 = vxpose.xlu0.b32.cont [9/16] 0.0, 128
          %884 = vxpose.xlu0.b32.cont [10/16] 0.0, 128
          %885 = vxpose.xlu0.b32.cont [11/16] 0.0, 128
          %886 = vxpose.xlu0.b32.cont [12/16] 0.0, 128
          %887 = vxpose.xlu0.b32.cont [13/16] 0.0, 128
          %888 = vxpose.xlu0.b32.cont [14/16] 0.0, 128
          %889 = vxpose.xlu0.b32.cont [15/16] 0.0, 128
          %890 = vxpose.xlu0.b32.end [16/16] 0.0, 128
          %v891 = vpop.trf.xlu0
          %v892 = vpop.trf.xlu0
          %v893 = vpop.trf.xlu0
          %v894 = vpop.trf.xlu0
          %v895 = vpop.trf.xlu0
          %v896 = vpop.trf.xlu0
          %v897 = vpop.trf.xlu0
          %v898 = vpop.trf.xlu0
          %v899 = vpop.trf.xlu0
          %v900 = vpop.trf.xlu0
          %v901 = vpop.trf.xlu0
          %v902 = vpop.trf.xlu0
          %v903 = vpop.trf.xlu0
          %v904 = vpop.trf.xlu0
          %v905 = vpop.trf.xlu0
          %v906 = vpop.trf.xlu0
          %907 = vxpose.xlu0.b32.start [1/16] %v729, 128
          %908 = vxpose.xlu0.b32.cont [2/16] 0.0, 128
          %909 = vxpose.xlu0.b32.cont [3/16] 0.0, 128
          %910 = vxpose.xlu0.b32.cont [4/16] 0.0, 128
          %911 = vxpose.xlu0.b32.cont [5/16] 0.0, 128
          %912 = vxpose.xlu0.b32.cont [6/16] 0.0, 128
          %913 = vxpose.xlu0.b32.cont [7/16] 0.0, 128
          %914 = vxpose.xlu0.b32.cont [8/16] 0.0, 128
          %915 = vxpose.xlu0.b32.cont [9/16] 0.0, 128
          %916 = vxpose.xlu0.b32.cont [10/16] 0.0, 128
          %917 = vxpose.xlu0.b32.cont [11/16] 0.0, 128
          %918 = vxpose.xlu0.b32.cont [12/16] 0.0, 128
          %919 = vxpose.xlu0.b32.cont [13/16] 0.0, 128
          %920 = vxpose.xlu0.b32.cont [14/16] 0.0, 128
          %921 = vxpose.xlu0.b32.cont [15/16] 0.0, 128
          %922 = vxpose.xlu0.b32.end [16/16] 0.0, 128
          %v923 = vpop.trf.xlu0
          %v924 = vpop.trf.xlu0
          %v925 = vpop.trf.xlu0
          %v926 = vpop.trf.xlu0
          %v927 = vpop.trf.xlu0
          %v928 = vpop.trf.xlu0
          %v929 = vpop.trf.xlu0
          %v930 = vpop.trf.xlu0
          %v931 = vpop.trf.xlu0
          %v932 = vpop.trf.xlu0
          %v933 = vpop.trf.xlu0
          %v934 = vpop.trf.xlu0
          %v935 = vpop.trf.xlu0
          %v936 = vpop.trf.xlu0
          %v937 = vpop.trf.xlu0
          %v938 = vpop.trf.xlu0
          %v939 = vpack.c.bf16 %v827, %v827
          %v940 = vpack.c.bf16 %v859, %v859
          %v941 = vpack.c.bf16 %v891, %v891
          %v942 = vpack.c.bf16 %v923, %v923
          %943 = vst.msk [vmem:[#allocation3] sm:$0xf] %vm806, %v939
          %944 = vst.msk [vmem:[#allocation3 + $0x4] sm:$0xf] %vm806, %v940
          %945 = vst.msk [vmem:[#allocation3 + $0x8] sm:$0xf] %vm806, %v941
          %946 = vst.msk [vmem:[#allocation3 + $0xc] sm:$0xf] %vm806, %v942
          %v947 = vpack.c.bf16 %v794, %v794
          %v948 = vpack.c.bf16 %v795, %v795
          %v949 = vpack.c.bf16 %v796, %v796
          %v950 = vpack.c.bf16 %v797, %v797
          %951 = vst.msk [vmem:[#allocation4] sm:$0xf] %vm806, %v947
          %952 = vst.msk [vmem:[#allocation4 + $0x4] sm:$0xf] %vm806, %v948
          %953 = vst.msk [vmem:[#allocation4 + $0x8] sm:$0xf] %vm806, %v949
          %954 = vst.msk [vmem:[#allocation4 + $0xc] sm:$0xf] %vm806, %v950
        $region56: #{tpu_custom_call.1} parent=39 // pred_fallthru
          _
        %s955 = smul.u32 %s28, 8
        %s956 = sshra.s32 %s955, 3
        %s957 = sand.u32 %s955, 7
        %s958 = smul.addr %s956, 4
        %s959 = scalar_lea.vmem [#allocation2], %s958
        %v960 = vld [vmem:[%s959] sm:$0xf]
        %v961 = vld [vmem:[%s959 + $0x4] sm:$0xf]
        %v962 = vld [vmem:[%s959 + $0x8] sm:$0xf]
        %v963 = vld [vmem:[%s959 + $0xc] sm:$0xf]
        %v964 = vld [vmem:[#allocation3] sm:$0xf]
        %v965 = vld [vmem:[#allocation3 + $0x4] sm:$0xf]
        %v966 = vld [vmem:[#allocation3 + $0x8] sm:$0xf]
        %v967 = vld [vmem:[#allocation3 + $0xc] sm:$0xf]
        %v968 = vld [vmem:[#allocation4] sm:$0xf]
        %v969 = vld [vmem:[#allocation4 + $0x4] sm:$0xf]
        %v970 = vld [vmem:[#allocation4 + $0x8] sm:$0xf]
        %v971 = vld [vmem:[#allocation4 + $0xc] sm:$0xf]
        %vm972 = vcmask 64512
        %v974 = vsel %vm972, %v960, 0
        %vm976 = vcmask 1043456
        %v978 = vsel %vm976, %v964, 0
        %980 = vmatprep.subr.bf16.mxu0 0
        %981 = vmatpush1.bf16.msra.mxu0 %v978
        %982 = vmatprep.subr.bf16.mxu0 0
        %983 = vmatpush1.bf16.msra.mxu0 0
        %984 = vmatprep.subr.bf16.mxu0 0
        %985 = vmatpush1.bf16.msra.mxu0 0
        %986 = vmatprep.subr.bf16.mxu0 0
        %987 = vmatpush1.bf16.msra.mxu0 0
        %988 = vmatprep.subr.bf16.mxu0 0
        %989 = vmatpush1.bf16.msra.mxu0 0
        %990 = vmatprep.subr.bf16.mxu0 0
        %991 = vmatpush1.bf16.msra.mxu0 0
        %992 = vmatprep.subr.bf16.mxu0 0
        %993 = vmatpush1.bf16.msra.mxu0 0
        %994 = vmatprep.subr.bf16.mxu0 0
        %995 = vmatpush1.bf16.msra.mxu0 0
        %996 = vmatprep.subr.bf16.mxu0 0
        %997 = vmatpush1.bf16.msra.mxu0 0
        %998 = vmatprep.subr.bf16.mxu0 0
        %999 = vmatpush1.bf16.msra.mxu0 0
        %1000 = vmatprep.subr.bf16.mxu0 0
        %1001 = vmatpush1.bf16.msra.mxu0 0
        %1002 = vmatprep.subr.bf16.mxu0 0
        %1003 = vmatpush1.bf16.msra.mxu0 0
        %1004 = vmatprep.subr.bf16.mxu0 0
        %1005 = vmatpush1.bf16.msra.mxu0 0
        %1006 = vmatprep.subr.bf16.mxu0 0
        %1007 = vmatpush1.bf16.msra.mxu0 0
        %1008 = vmatprep.subr.bf16.mxu0 0
        %1009 = vmatpush1.bf16.msra.mxu0 0
        %1010 = vmatprep.subr.bf16.mxu0 0
        %1011 = vmatpush1.bf16.msra.mxu0 0
        %1012 = vmatprep.mubr.bf16.mxu0 0
        %1013 = vmatmul.mubr.bf16.gmra.mrb[0].mxu0 %v974
        %v1014 = vpop.f32.mrb[0].mxu0
        %v1015 = vadd.f32 0.0, %v1014
        %v1016 = vpop.f32.mrb[0].mxu0
        %v1017 = vpop.f32.mrb[0].mxu0
        %v1018 = vpop.f32.mrb[0].mxu0
        %1019 = vdwg.mxu0
        %v1021 = vsel %vm972, %v961, 0
        %v1024 = vsel %vm976, %v965, 0
        %1026 = vmatprep.subr.bf16.mxu0 0
        %1027 = vmatpush1.bf16.msra.mxu0 %v1024
        %1028 = vmatprep.subr.bf16.mxu0 0
        %1029 = vmatpush1.bf16.msra.mxu0 0
        %1030 = vmatprep.subr.bf16.mxu0 0
        %1031 = vmatpush1.bf16.msra.mxu0 0
        %1032 = vmatprep.subr.bf16.mxu0 0
        %1033 = vmatpush1.bf16.msra.mxu0 0
        %1034 = vmatprep.subr.bf16.mxu0 0
        %1035 = vmatpush1.bf16.msra.mxu0 0
        %1036 = vmatprep.subr.bf16.mxu0 0
        %1037 = vmatpush1.bf16.msra.mxu0 0
        %1038 = vmatprep.subr.bf16.mxu0 0
        %1039 = vmatpush1.bf16.msra.mxu0 0
        %1040 = vmatprep.subr.bf16.mxu0 0
        %1041 = vmatpush1.bf16.msra.mxu0 0
        %1042 = vmatprep.subr.bf16.mxu0 0
        %1043 = vmatpush1.bf16.msra.mxu0 0
        %1044 = vmatprep.subr.bf16.mxu0 0
        %1045 = vmatpush1.bf16.msra.mxu0 0
        %1046 = vmatprep.subr.bf16.mxu0 0
        %1047 = vmatpush1.bf16.msra.mxu0 0
        %1048 = vmatprep.subr.bf16.mxu0 0
        %1049 = vmatpush1.bf16.msra.mxu0 0
        %1050 = vmatprep.subr.bf16.mxu0 0
        %1051 = vmatpush1.bf16.msra.mxu0 0
        %1052 = vmatprep.subr.bf16.mxu0 0
        %1053 = vmatpush1.bf16.msra.mxu0 0
        %1054 = vmatprep.subr.bf16.mxu0 0
        %1055 = vmatpush1.bf16.msra.mxu0 0
        %1056 = vmatprep.subr.bf16.mxu0 0
        %1057 = vmatpush1.bf16.msra.mxu0 0
        %1058 = vmatprep.mubr.bf16.mxu0 0
        %1059 = vmatmul.mubr.bf16.gmra.mrb[0].mxu0 %v1021
        %v1060 = vpop.f32.mrb[0].mxu0
        %v1061 = vadd.f32 0.0, %v1060
        %v1062 = vpop.f32.mrb[0].mxu0
        %v1063 = vpop.f32.mrb[0].mxu0
        %v1064 = vpop.f32.mrb[0].mxu0
        %1065 = vdwg.mxu0
        %v1067 = vsel %vm972, %v962, 0
        %v1070 = vsel %vm976, %v966, 0
        %1072 = vmatprep.subr.bf16.mxu0 0
        %1073 = vmatpush1.bf16.msra.mxu0 %v1070
        %1074 = vmatprep.subr.bf16.mxu0 0
        %1075 = vmatpush1.bf16.msra.mxu0 0
        %1076 = vmatprep.subr.bf16.mxu0 0
        %1077 = vmatpush1.bf16.msra.mxu0 0
        %1078 = vmatprep.subr.bf16.mxu0 0
        %1079 = vmatpush1.bf16.msra.mxu0 0
        %1080 = vmatprep.subr.bf16.mxu0 0
        %1081 = vmatpush1.bf16.msra.mxu0 0
        %1082 = vmatprep.subr.bf16.mxu0 0
        %1083 = vmatpush1.bf16.msra.mxu0 0
        %1084 = vmatprep.subr.bf16.mxu0 0
        %1085 = vmatpush1.bf16.msra.mxu0 0
        %1086 = vmatprep.subr.bf16.mxu0 0
        %1087 = vmatpush1.bf16.msra.mxu0 0
        %1088 = vmatprep.subr.bf16.mxu0 0
        %1089 = vmatpush1.bf16.msra.mxu0 0
        %1090 = vmatprep.subr.bf16.mxu0 0
        %1091 = vmatpush1.bf16.msra.mxu0 0
        %1092 = vmatprep.subr.bf16.mxu0 0
        %1093 = vmatpush1.bf16.msra.mxu0 0
        %1094 = vmatprep.subr.bf16.mxu0 0
        %1095 = vmatpush1.bf16.msra.mxu0 0
        %1096 = vmatprep.subr.bf16.mxu0 0
        %1097 = vmatpush1.bf16.msra.mxu0 0
        %1098 = vmatprep.subr.bf16.mxu0 0
        %1099 = vmatpush1.bf16.msra.mxu0 0
        %1100 = vmatprep.subr.bf16.mxu0 0
        %1101 = vmatpush1.bf16.msra.mxu0 0
        %1102 = vmatprep.subr.bf16.mxu0 0
        %1103 = vmatpush1.bf16.msra.mxu0 0
        %1104 = vmatprep.mubr.bf16.mxu0 0
        %1105 = vmatmul.mubr.bf16.gmra.mrb[0].mxu0 %v1067
        %v1106 = vpop.f32.mrb[0].mxu0
        %v1107 = vadd.f32 0.0, %v1106
        %v1108 = vpop.f32.mrb[0].mxu0
        %v1109 = vpop.f32.mrb[0].mxu0
        %v1110 = vpop.f32.mrb[0].mxu0
        %1111 = vdwg.mxu0
        %v1113 = vsel %vm972, %v963, 0
        %v1116 = vsel %vm976, %v967, 0
        %1118 = vmatprep.subr.bf16.mxu0 0
        %1119 = vmatpush1.bf16.msra.mxu0 %v1116
        %1120 = vmatprep.subr.bf16.mxu0 0
        %1121 = vmatpush1.bf16.msra.mxu0 0
        %1122 = vmatprep.subr.bf16.mxu0 0
        %1123 = vmatpush1.bf16.msra.mxu0 0
        %1124 = vmatprep.subr.bf16.mxu0 0
        %1125 = vmatpush1.bf16.msra.mxu0 0
        %1126 = vmatprep.subr.bf16.mxu0 0
        %1127 = vmatpush1.bf16.msra.mxu0 0
        %1128 = vmatprep.subr.bf16.mxu0 0
        %1129 = vmatpush1.bf16.msra.mxu0 0
        %1130 = vmatprep.subr.bf16.mxu0 0
        %1131 = vmatpush1.bf16.msra.mxu0 0
        %1132 = vmatprep.subr.bf16.mxu0 0
        %1133 = vmatpush1.bf16.msra.mxu0 0
        %1134 = vmatprep.subr.bf16.mxu0 0
        %1135 = vmatpush1.bf16.msra.mxu0 0
        %1136 = vmatprep.subr.bf16.mxu0 0
        %1137 = vmatpush1.bf16.msra.mxu0 0
        %1138 = vmatprep.subr.bf16.mxu0 0
        %1139 = vmatpush1.bf16.msra.mxu0 0
        %1140 = vmatprep.subr.bf16.mxu0 0
        %1141 = vmatpush1.bf16.msra.mxu0 0
        %1142 = vmatprep.subr.bf16.mxu0 0
        %1143 = vmatpush1.bf16.msra.mxu0 0
        %1144 = vmatprep.subr.bf16.mxu0 0
        %1145 = vmatpush1.bf16.msra.mxu0 0
        %1146 = vmatprep.subr.bf16.mxu0 0
        %1147 = vmatpush1.bf16.msra.mxu0 0
        %1148 = vmatprep.subr.bf16.mxu0 0
        %1149 = vmatpush1.bf16.msra.mxu0 0
        %1150 = vmatprep.mubr.bf16.mxu0 0
        %1151 = vmatmul.mubr.bf16.gmra.mrb[0].mxu0 %v1113
        %v1152 = vpop.f32.mrb[0].mxu0
        %v1153 = vadd.f32 0.0, %v1152
        %v1154 = vpop.f32.mrb[0].mxu0
        %v1155 = vpop.f32.mrb[0].mxu0
        %v1156 = vpop.f32.mrb[0].mxu0
        %1157 = vdwg.mxu0
        %v1158 = vsel %vm972, %v1015, -inf
        %1159 = vmax.xlane.f32.xlu0 %v1158
        %v1160 = vpop.xlane.xlu0 %1159
        %v1161 = vsel %vm972, %v1061, -inf
        %1162 = vmax.xlane.f32.xlu0 %v1161
        %v1163 = vpop.xlane.xlu0 %1162
        %v1164 = vsel %vm972, %v1107, -inf
        %1165 = vmax.xlane.f32.xlu0 %v1164
        %v1166 = vpop.xlane.xlu0 %1165
        %v1167 = vsel %vm972, %v1153, -inf
        %1168 = vmax.xlane.f32.xlu0 %v1167
        %v1169 = vpop.xlane.xlu0 %1168
        %v1170 = vsub.f32 -inf, %v1160
        %v1171 = vsub.f32 -inf, %v1163
        %v1172 = vsub.f32 -inf, %v1166
        %v1173 = vsub.f32 -inf, %v1169
        %v1174 = vmul.f32 %v1170, 1.442695
        %v1175 = vpow.pop %v1174
        %v1176 = vmul.f32 %v1171, 1.442695
        %v1177 = vpow.pop %v1176
        %v1178 = vmul.f32 %v1172, 1.442695
        %v1179 = vpow.pop %v1178
        %v1180 = vmul.f32 %v1173, 1.442695
        %v1181 = vpow.pop %v1180
        %v1182 = vsub.f32 %v1015, %v1160
        %v1183 = vsub.f32 %v1061, %v1163
        %v1184 = vsub.f32 %v1107, %v1166
        %v1185 = vsub.f32 %v1153, %v1169
        %v1186 = vmul.f32 %v1182, 1.442695
        %v1187 = vpow.pop %v1186
        %v1188 = vmul.f32 %v1183, 1.442695
        %v1189 = vpow.pop %v1188
        %v1190 = vmul.f32 %v1184, 1.442695
        %v1191 = vpow.pop %v1190
        %v1192 = vmul.f32 %v1185, 1.442695
        %v1193 = vpow.pop %v1192
        %v1194 = vmul.f32 %v1175, 0.0
        %v1195 = vmul.f32 %v1177, 0.0
        %v1196 = vmul.f32 %v1179, 0.0
        %v1197 = vmul.f32 %v1181, 0.0
        %v1198 = vsel %vm972, %v1187, 0.0
        %1199 = vadd.xlane.f32.xlu0 %v1198
        %v1200 = vpop.xlane.xlu0 %1199
        %v1201 = vsel %vm972, %v1189, 0.0
        %1202 = vadd.xlane.f32.xlu0 %v1201
        %v1203 = vpop.xlane.xlu0 %1202
        %v1204 = vsel %vm972, %v1191, 0.0
        %1205 = vadd.xlane.f32.xlu0 %v1204
        %v1206 = vpop.xlane.xlu0 %1205
        %v1207 = vsel %vm972, %v1193, 0.0
        %1208 = vadd.xlane.f32.xlu0 %v1207
        %v1209 = vpop.xlane.xlu0 %1208
        %v1210 = vadd.f32 %v1194, %v1200
        %v1211 = vadd.f32 %v1195, %v1203
        %v1212 = vadd.f32 %v1196, %v1206
        %v1213 = vadd.f32 %v1197, %v1209
        %v1214 = vpack.c.bf16 %v1187, %v1187
        %v1215 = vpack.c.bf16 %v1189, %v1189
        %v1216 = vpack.c.bf16 %v1191, %v1191
        %v1217 = vpack.c.bf16 %v1193, %v1193
        %v1219 = vsel %vm972, %v1214, 0
        %v1222 = vsel %vm976, %v968, 0
        %1224 = vmatprep.subr.bf16.mxu0 0
        %1225 = vmatpush1.bf16.msra.mxu0 %v1222
        %1226 = vmatprep.subr.bf16.mxu0 0
        %1227 = vmatpush1.bf16.msra.mxu0 0
        %1228 = vmatprep.subr.bf16.mxu0 0
        %1229 = vmatpush1.bf16.msra.mxu0 0
        %1230 = vmatprep.subr.bf16.mxu0 0
        %1231 = vmatpush1.bf16.msra.mxu0 0
        %1232 = vmatprep.subr.bf16.mxu0 0
        %1233 = vmatpush1.bf16.msra.mxu0 0
        %1234 = vmatprep.subr.bf16.mxu0 0
        %1235 = vmatpush1.bf16.msra.mxu0 0
        %1236 = vmatprep.subr.bf16.mxu0 0
        %1237 = vmatpush1.bf16.msra.mxu0 0
        %1238 = vmatprep.subr.bf16.mxu0 0
        %1239 = vmatpush1.bf16.msra.mxu0 0
        %1240 = vmatprep.subr.bf16.mxu0 0
        %1241 = vmatpush1.bf16.msra.mxu0 0
        %1242 = vmatprep.subr.bf16.mxu0 0
        %1243 = vmatpush1.bf16.msra.mxu0 0
        %1244 = vmatprep.subr.bf16.mxu0 0
        %1245 = vmatpush1.bf16.msra.mxu0 0
        %1246 = vmatprep.subr.bf16.mxu0 0
        %1247 = vmatpush1.bf16.msra.mxu0 0
        %1248 = vmatprep.subr.bf16.mxu0 0
        %1249 = vmatpush1.bf16.msra.mxu0 0
        %1250 = vmatprep.subr.bf16.mxu0 0
        %1251 = vmatpush1.bf16.msra.mxu0 0
        %1252 = vmatprep.subr.bf16.mxu0 0
        %1253 = vmatpush1.bf16.msra.mxu0 0
        %1254 = vmatprep.subr.bf16.mxu0 0
        %1255 = vmatpush1.bf16.msra.mxu0 0
        %1256 = vmatprep.mubr.bf16.mxu0 0
        %1257 = vmatmul.mubr.bf16.gmra.mrb[0].mxu0 %v1219
        %v1258 = vpop.f32.mrb[0].mxu0
        %v1259 = vadd.f32 0.0, %v1258
        %v1260 = vpop.f32.mrb[0].mxu0
        %v1261 = vpop.f32.mrb[0].mxu0
        %v1262 = vpop.f32.mrb[0].mxu0
        %1263 = vdwg.mxu0
        %v1265 = vsel %vm972, %v1215, 0
        %v1268 = vsel %vm976, %v969, 0
        %1270 = vmatprep.subr.bf16.mxu0 0
        %1271 = vmatpush1.bf16.msra.mxu0 %v1268
        %1272 = vmatprep.subr.bf16.mxu0 0
        %1273 = vmatpush1.bf16.msra.mxu0 0
        %1274 = vmatprep.subr.bf16.mxu0 0
        %1275 = vmatpush1.bf16.msra.mxu0 0
        %1276 = vmatprep.subr.bf16.mxu0 0
        %1277 = vmatpush1.bf16.msra.mxu0 0
        %1278 = vmatprep.subr.bf16.mxu0 0
        %1279 = vmatpush1.bf16.msra.mxu0 0
        %1280 = vmatprep.subr.bf16.mxu0 0
        %1281 = vmatpush1.bf16.msra.mxu0 0
        %1282 = vmatprep.subr.bf16.mxu0 0
        %1283 = vmatpush1.bf16.msra.mxu0 0
        %1284 = vmatprep.subr.bf16.mxu0 0
        %1285 = vmatpush1.bf16.msra.mxu0 0
        %1286 = vmatprep.subr.bf16.mxu0 0
        %1287 = vmatpush1.bf16.msra.mxu0 0
        %1288 = vmatprep.subr.bf16.mxu0 0
        %1289 = vmatpush1.bf16.msra.mxu0 0
        %1290 = vmatprep.subr.bf16.mxu0 0
        %1291 = vmatpush1.bf16.msra.mxu0 0
        %1292 = vmatprep.subr.bf16.mxu0 0
        %1293 = vmatpush1.bf16.msra.mxu0 0
        %1294 = vmatprep.subr.bf16.mxu0 0
        %1295 = vmatpush1.bf16.msra.mxu0 0
        %1296 = vmatprep.subr.bf16.mxu0 0
        %1297 = vmatpush1.bf16.msra.mxu0 0
        %1298 = vmatprep.subr.bf16.mxu0 0
        %1299 = vmatpush1.bf16.msra.mxu0 0
        %1300 = vmatprep.subr.bf16.mxu0 0
        %1301 = vmatpush1.bf16.msra.mxu0 0
        %1302 = vmatprep.mubr.bf16.mxu0 0
        %1303 = vmatmul.mubr.bf16.gmra.mrb[0].mxu0 %v1265
        %v1304 = vpop.f32.mrb[0].mxu0
        %v1305 = vadd.f32 0.0, %v1304
        %v1306 = vpop.f32.mrb[0].mxu0
        %v1307 = vpop.f32.mrb[0].mxu0
        %v1308 = vpop.f32.mrb[0].mxu0
        %1309 = vdwg.mxu0
        %v1311 = vsel %vm972, %v1216, 0
        %v1314 = vsel %vm976, %v970, 0
        %1316 = vmatprep.subr.bf16.mxu0 0
        %1317 = vmatpush1.bf16.msra.mxu0 %v1314
        %1318 = vmatprep.subr.bf16.mxu0 0
        %1319 = vmatpush1.bf16.msra.mxu0 0
        %1320 = vmatprep.subr.bf16.mxu0 0
        %1321 = vmatpush1.bf16.msra.mxu0 0
        %1322 = vmatprep.subr.bf16.mxu0 0
        %1323 = vmatpush1.bf16.msra.mxu0 0
        %1324 = vmatprep.subr.bf16.mxu0 0
        %1325 = vmatpush1.bf16.msra.mxu0 0
        %1326 = vmatprep.subr.bf16.mxu0 0
        %1327 = vmatpush1.bf16.msra.mxu0 0
        %1328 = vmatprep.subr.bf16.mxu0 0
        %1329 = vmatpush1.bf16.msra.mxu0 0
        %1330 = vmatprep.subr.bf16.mxu0 0
        %1331 = vmatpush1.bf16.msra.mxu0 0
        %1332 = vmatprep.subr.bf16.mxu0 0
        %1333 = vmatpush1.bf16.msra.mxu0 0
        %1334 = vmatprep.subr.bf16.mxu0 0
        %1335 = vmatpush1.bf16.msra.mxu0 0
        %1336 = vmatprep.subr.bf16.mxu0 0
        %1337 = vmatpush1.bf16.msra.mxu0 0
        %1338 = vmatprep.subr.bf16.mxu0 0
        %1339 = vmatpush1.bf16.msra.mxu0 0
        %1340 = vmatprep.subr.bf16.mxu0 0
        %1341 = vmatpush1.bf16.msra.mxu0 0
        %1342 = vmatprep.subr.bf16.mxu0 0
        %1343 = vmatpush1.bf16.msra.mxu0 0
        %1344 = vmatprep.subr.bf16.mxu0 0
        %1345 = vmatpush1.bf16.msra.mxu0 0
        %1346 = vmatprep.subr.bf16.mxu0 0
        %1347 = vmatpush1.bf16.msra.mxu0 0
        %1348 = vmatprep.mubr.bf16.mxu0 0
        %1349 = vmatmul.mubr.bf16.gmra.mrb[0].mxu0 %v1311
        %v1350 = vpop.f32.mrb[0].mxu0
        %v1351 = vadd.f32 0.0, %v1350
        %v1352 = vpop.f32.mrb[0].mxu0
        %v1353 = vpop.f32.mrb[0].mxu0
        %v1354 = vpop.f32.mrb[0].mxu0
        %1355 = vdwg.mxu0
        %v1357 = vsel %vm972, %v1217, 0
        %v1360 = vsel %vm976, %v971, 0
        %1362 = vmatprep.subr.bf16.mxu0 0
        %1363 = vmatpush1.bf16.msra.mxu0 %v1360
        %1364 = vmatprep.subr.bf16.mxu0 0
        %1365 = vmatpush1.bf16.msra.mxu0 0
        %1366 = vmatprep.subr.bf16.mxu0 0
        %1367 = vmatpush1.bf16.msra.mxu0 0
        %1368 = vmatprep.subr.bf16.mxu0 0
        %1369 = vmatpush1.bf16.msra.mxu0 0
        %1370 = vmatprep.subr.bf16.mxu0 0
        %1371 = vmatpush1.bf16.msra.mxu0 0
        %1372 = vmatprep.subr.bf16.mxu0 0
        %1373 = vmatpush1.bf16.msra.mxu0 0
        %1374 = vmatprep.subr.bf16.mxu0 0
        %1375 = vmatpush1.bf16.msra.mxu0 0
        %1376 = vmatprep.subr.bf16.mxu0 0
        %1377 = vmatpush1.bf16.msra.mxu0 0
        %1378 = vmatprep.subr.bf16.mxu0 0
        %1379 = vmatpush1.bf16.msra.mxu0 0
        %1380 = vmatprep.subr.bf16.mxu0 0
        %1381 = vmatpush1.bf16.msra.mxu0 0
        %1382 = vmatprep.subr.bf16.mxu0 0
        %1383 = vmatpush1.bf16.msra.mxu0 0
        %1384 = vmatprep.subr.bf16.mxu0 0
        %1385 = vmatpush1.bf16.msra.mxu0 0
        %1386 = vmatprep.subr.bf16.mxu0 0
        %1387 = vmatpush1.bf16.msra.mxu0 0
        %1388 = vmatprep.subr.bf16.mxu0 0
        %1389 = vmatpush1.bf16.msra.mxu0 0
        %1390 = vmatprep.subr.bf16.mxu0 0
        %1391 = vmatpush1.bf16.msra.mxu0 0
        %1392 = vmatprep.subr.bf16.mxu0 0
        %1393 = vmatpush1.bf16.msra.mxu0 0
        %1394 = vmatprep.mubr.bf16.mxu0 0
        %1395 = vmatmul.mubr.bf16.gmra.mrb[0].mxu0 %v1357
        %v1396 = vpop.f32.mrb[0].mxu0
        %v1397 = vadd.f32 0.0, %v1396
        %v1398 = vpop.f32.mrb[0].mxu0
        %v1399 = vpop.f32.mrb[0].mxu0
        %v1400 = vpop.f32.mrb[0].mxu0
        %1401 = vdwg.mxu0
        %v1402 = vadd.f32 %v1194, %v1259
        %v1403 = vadd.f32 %v1195, %v1305
        %v1404 = vadd.f32 %v1196, %v1351
        %v1405 = vadd.f32 %v1197, %v1397
        %v1406 = vrcp.pop %v1210
        %v1407 = vrcp.pop %v1211
        %v1408 = vrcp.pop %v1212
        %v1409 = vrcp.pop %v1213
        %v1410 = vmul.f32 %v1402, %v1406
        %v1411 = vmul.f32 %v1403, %v1407
        %v1412 = vmul.f32 %v1404, %v1408
        %v1413 = vmul.f32 %v1405, %v1409
        %v1414 = vcombine.low %v1410, %v1412
        %v1415 = vcombine.high %v1410, %v1412
        %v1417 = vunpack.c.l.s4 1983009808
        %v1418 = vunpack.c.0.s8 %v1417
        %v1419 = vlaneseq
        %v1420 = vshrl.u32 %v1419, 7
        %v1421 = vsub.s32 %v1418, %v1420
        %v1422 = vrot.slane %v1414, %v1421
        %v1424 = vunpack.c.l.s4 1983009808
        %v1425 = vunpack.c.0.s8 %v1424
        %v1426 = vlaneseq
        %v1427 = vshrl.u32 %v1426, 7
        %v1428 = vsub.s32 %v1425, %v1427
        %v1429 = vrot.slane %v1415, %v1428
        %v1430 = vcombine.low %v1411, %v1413
        %v1431 = vcombine.high %v1411, %v1413
        %v1433 = vunpack.c.l.s4 1983009808
        %v1434 = vunpack.c.0.s8 %v1433
        %v1435 = vlaneseq
        %v1436 = vshrl.u32 %v1435, 7
        %v1437 = vsub.s32 %v1434, %v1436
        %v1438 = vrot.slane %v1430, %v1437
        %v1440 = vunpack.c.l.s4 1983009808
        %v1441 = vunpack.c.0.s8 %v1440
        %v1442 = vlaneseq
        %v1443 = vshrl.u32 %v1442, 7
        %v1444 = vsub.s32 %v1441, %v1443
        %v1445 = vrot.slane %v1431, %v1444
        %v1446 = vcombine.low %v1422, %v1438
        %v1447 = vcombine.high %v1422, %v1438
        %v1449 = vunpack.c.l.s4 1934713408
        %v1450 = vunpack.c.0.s8 %v1449
        %v1451 = vlaneseq
        %v1452 = vshrl.u32 %v1451, 7
        %v1453 = vsub.s32 %v1450, %v1452
        %v1454 = vrot.slane %v1446, %v1453
        %v1456 = vunpack.c.l.s4 1934713408
        %v1457 = vunpack.c.0.s8 %v1456
        %v1458 = vlaneseq
        %v1459 = vshrl.u32 %v1458, 7
        %v1460 = vsub.s32 %v1457, %v1459
        %v1461 = vrot.slane %v1447, %v1460
        %v1462 = vcombine.low %v1429, %v1445
        %v1463 = vcombine.high %v1429, %v1445
        %v1465 = vunpack.c.l.s4 1934713408
        %v1466 = vunpack.c.0.s8 %v1465
        %v1467 = vlaneseq
        %v1468 = vshrl.u32 %v1467, 7
        %v1469 = vsub.s32 %v1466, %v1468
        %v1470 = vrot.slane %v1462, %v1469
        %v1472 = vunpack.c.l.s4 1934713408
        %v1473 = vunpack.c.0.s8 %v1472
        %v1474 = vlaneseq
        %v1475 = vshrl.u32 %v1474, 7
        %v1476 = vsub.s32 %v1473, %v1475
        %v1477 = vrot.slane %v1463, %v1476
        %v1478 = vcombine.high %v1454, 0.0
        %v1479 = vcombine.high %v1461, 0.0
        %v1480 = vcombine.high %v1470, 0.0
        %v1481 = vcombine.high %v1477, 0.0
        %v1482 = vcombine.low %v1454, %v1461
        %v1484 = vunpack.c.l.s4 1983009808
        %v1485 = vunpack.c.0.s8 %v1484
        %v1486 = vlaneseq
        %v1487 = vshrl.u32 %v1486, 7
        %v1488 = vsub.s32 %v1485, %v1487
        %v1489 = vrot.slane %v1482, %v1488
        %v1490 = vcombine.low %v1478, %v1479
        %v1492 = vunpack.c.l.s4 1983009808
        %v1493 = vunpack.c.0.s8 %v1492
        %v1494 = vlaneseq
        %v1495 = vshrl.u32 %v1494, 7
        %v1496 = vsub.s32 %v1493, %v1495
        %v1497 = vrot.slane %v1490, %v1496
        %v1498 = vcombine.low %v1470, %v1477
        %v1500 = vunpack.c.l.s4 1983009808
        %v1501 = vunpack.c.0.s8 %v1500
        %v1502 = vlaneseq
        %v1503 = vshrl.u32 %v1502, 7
        %v1504 = vsub.s32 %v1501, %v1503
        %v1505 = vrot.slane %v1498, %v1504
        %v1506 = vcombine.low %v1480, %v1481
        %v1508 = vunpack.c.l.s4 1983009808
        %v1509 = vunpack.c.0.s8 %v1508
        %v1510 = vlaneseq
        %v1511 = vshrl.u32 %v1510, 7
        %v1512 = vsub.s32 %v1509, %v1511
        %v1513 = vrot.slane %v1506, %v1512
        %v1514 = vcombine.low %v1489, %v1497
        %v1515 = vcombine.high %v1489, %v1497
        %v1517 = vunpack.c.l.s4 1934713408
        %v1518 = vunpack.c.0.s8 %v1517
        %v1519 = vlaneseq
        %v1520 = vshrl.u32 %v1519, 7
        %v1521 = vsub.s32 %v1518, %v1520
        %v1522 = vrot.slane %v1514, %v1521
        %v1524 = vunpack.c.l.s4 1934713408
        %v1525 = vunpack.c.0.s8 %v1524
        %v1526 = vlaneseq
        %v1527 = vshrl.u32 %v1526, 7
        %v1528 = vsub.s32 %v1525, %v1527
        %v1529 = vrot.slane %v1515, %v1528
        %v1530 = vcombine.low %v1505, %v1513
        %v1531 = vcombine.high %v1505, %v1513
        %v1533 = vunpack.c.l.s4 1934713408
        %v1534 = vunpack.c.0.s8 %v1533
        %v1535 = vlaneseq
        %v1536 = vshrl.u32 %v1535, 7
        %v1537 = vsub.s32 %v1534, %v1536
        %v1538 = vrot.slane %v1530, %v1537
        %v1540 = vunpack.c.l.s4 1934713408
        %v1541 = vunpack.c.0.s8 %v1540
        %v1542 = vlaneseq
        %v1543 = vshrl.u32 %v1542, 7
        %v1544 = vsub.s32 %v1541, %v1543
        %v1545 = vrot.slane %v1531, %v1544
        %v1546 = vcombine.low %v1522, %v1538
        %v1547 = vcombine.high %v1522, %v1538
        %v1548 = vcombine.low %v1529, %v1545
        %v1549 = vcombine.high %v1529, %v1545
        %1551 = vrot.lane.b32.xlu0 %v1547, 8
        %v1552 = vpop.permute.xlu0 %1551
        %1555 = vrot.lane.b32.xlu0 %v1548, 16
        %v1556 = vpop.permute.xlu0 %1555
        %1559 = vrot.lane.b32.xlu0 %v1549, 24
        %v1560 = vpop.permute.xlu0 %1559
        %v1562 = vsel %vm972, %v1546, %v1552
        %vm1563 = vcmask 130048
        %v1564 = vsel %vm1563, %v1562, %v1556
        %vm1565 = vcmask 195584
        %v1566 = vsel %vm1565, %v1564, %v1560
        %v1567 = vpack.c.bf16 %v1566, %v1566
        %v1568 = vld [vmem:[#allocation10] sm:$0xf]
        %v1569 = vld [vmem:[#allocation10 + $0x4] sm:$0xf]
        %v1570 = vld [vmem:[#allocation10 + $0x8] sm:$0xf]
        %v1571 = vld [vmem:[#allocation10 + $0xc] sm:$0xf]
        %v1572 = vld [vmem:[%s4] sm:$0x1]
        %v1574 = vlaneseq
        %v1575 = vshrl.u32 %v1574, 7
        %v1576 = vsub.s32 0, %v1575
        %v1577 = vrot.slane %v1572, %v1576
        %v1583 = vunpack.c.l.b16 %v1568
        %v1584 = vunpack.c.l.b16 %v1569
        %v1585 = vunpack.c.l.b16 %v1570
        %v1586 = vunpack.c.l.b16 %v1571
        %v1587 = vpack.c.b16 %v1584, %v1583
        %v1588 = vpack.c.b16 %v1586, %v1585
        %vm1591 = vcmask 261120
        %v1593 = vsel %vm1591, %v1567, 0
        %1595 = vmatprep.subr.bf16.mxu0 0
        %1596 = vmatpush1.bf16.msra.mxu0 %v1587
        %1597 = vmatprep.subr.bf16.mxu0 0
        %1598 = vmatpush1.bf16.msra.mxu0 %v1588
        %1599 = vmatprep.subr.bf16.mxu0 0
        %1600 = vmatpush1.bf16.msra.mxu0 0
        %1601 = vmatprep.subr.bf16.mxu0 0
        %1602 = vmatpush1.bf16.msra.mxu0 0
        %1603 = vmatprep.subr.bf16.mxu0 0
        %1604 = vmatpush1.bf16.msra.mxu0 0
        %1605 = vmatprep.subr.bf16.mxu0 0
        %1606 = vmatpush1.bf16.msra.mxu0 0
        %1607 = vmatprep.subr.bf16.mxu0 0
        %1608 = vmatpush1.bf16.msra.mxu0 0
        %1609 = vmatprep.subr.bf16.mxu0 0
        %1610 = vmatpush1.bf16.msra.mxu0 0
        %1611 = vmatprep.subr.bf16.mxu0 0
        %1612 = vmatpush1.bf16.msra.mxu0 0
        %1613 = vmatprep.subr.bf16.mxu0 0
        %1614 = vmatpush1.bf16.msra.mxu0 0
        %1615 = vmatprep.subr.bf16.mxu0 0
        %1616 = vmatpush1.bf16.msra.mxu0 0
        %1617 = vmatprep.subr.bf16.mxu0 0
        %1618 = vmatpush1.bf16.msra.mxu0 0
        %1619 = vmatprep.subr.bf16.mxu0 0
        %1620 = vmatpush1.bf16.msra.mxu0 0
        %1621 = vmatprep.subr.bf16.mxu0 0
        %1622 = vmatpush1.bf16.msra.mxu0 0
        %1623 = vmatprep.subr.bf16.mxu0 0
        %1624 = vmatpush1.bf16.msra.mxu0 0
        %1625 = vmatprep.subr.bf16.mxu0 0
        %1626 = vmatpush1.bf16.msra.mxu0 0
        %1627 = vmatprep.mubr.bf16.mxu0 0
        %1628 = vmatmul.mubr.bf16.gmra.mrb[0].mxu0 %v1593
        %v1629 = vpop.f32.mrb[0].mxu0
        %v1630 = vadd.f32 %v1577, %v1629
        %v1631 = vpop.f32.mrb[0].mxu0
        %v1632 = vpop.f32.mrb[0].mxu0
        %v1633 = vpop.f32.mrb[0].mxu0
        %1634 = vdwg.mxu0
        %1635 = vst.msk [vmem:[%s282] sm:$0xff] %vm1591, %v1630
        %s1636 = sand.u32 %s155, 1
        %s1637 = scalar_lea.sflag [#allocation7], %s1636
        %s1638 = sand.u32 %s155, 1
        %s1639 = smul.addr %s1638, 8
        %s1640 = scalar_lea.vmem [#allocation11], %s1639
        // Predicated region
        $region57: #{tpu_custom_call.1} parent=39 // pred_check
          %p1641 = pneg %p165
        $region58: #{tpu_custom_call.1} parent=39 // pred_check_branch
          %1643 = sbr.rel (%p1641) target = $region60
        $region59: #{tpu_custom_call.1} parent=39 // pred_region
          %s1645 = ssub.s32 128, 128
          %1646 = vsyncadd %s1637, %s1645
          %s1647 = sadd.s32 %s28, %s27
          %s1648 = smul.addr %s1647, 128
          %s1649 = scalar_lea.hbm %s5, %s1648
          %s1651 = sshll.u32 %s1640, 4
          %s1652 = int_to_ptr.vmem [resolvable:$true] %s1651
          %1654 = dma.vmem_to_hbm [thread:$0]  %s1652, 128, %s1649, %s1637
        $region60: #{tpu_custom_call.1} parent=39 // pred_fallthru
          _
      $region40: #{tpu_custom_call.1} parent=5 // pred_fallthru
        _
      %p1655 = scmp.le.s32.totalorder 2, %s18
      // Predicated region
      $region61: #{tpu_custom_call.1} parent=5 // pred_check
        %p1656 = pneg %p1655
      $region62: #{tpu_custom_call.1} parent=5 // pred_check_branch
        %1658 = sbr.rel (%p1656) target = $region64
      $region63: #{tpu_custom_call.1} parent=5 // pred_region
        %s1659 = ssub.s32 %s18, 2
        // Predicated region
        $region65: #{tpu_custom_call.1} parent=63 // pred_check
          %p1660 = pneg %p171
        $region66: #{tpu_custom_call.1} parent=63 // pred_check_branch
          %1662 = sbr.rel (%p1660) target = $region68
        $region67: #{tpu_custom_call.1} parent=63 // pred_region
          %s1663 = sand.u32 %s156, 1
          %s1664 = scalar_lea.sflag [#allocation7], %s1663
          %s1665 = sand.u32 %s156, 1
          %s1666 = smul.addr %s1665, 8
          %s1667 = scalar_lea.vmem [#allocation11], %s1666
          %1668 = dma.done %s1664, 128
        $region68: #{tpu_custom_call.1} parent=63 // pred_fallthru
          _
      $region64: #{tpu_custom_call.1} parent=5 // pred_fallthru
        _
    $region6: #{tpu_custom_call.1} parent=1 // loop_footer
      %s22 = sadd.s32 1, %s18
    $region7: #{tpu_custom_call.1} parent=1 // loop_footer_branch
      %17 = sbr.rel target = $region3
    $region8: #{tpu_custom_call.1} parent=1 // loop_exit
      _
    %1669 = vsyncpa [#allocation6], 1
    %s1670 = scalar_lea.sflag [#allocation6], 1
    %1671 = vsyncpa %s1670, 1
    %1672 = vsyncpa [#allocation9], 1
    %1673 = vsyncpa [#allocation7], 1
    %s1674 = scalar_lea.sflag [#allocation7], 1
    %1675 = vsyncpa %s1674, 1

</llo_original>
